<compile_context>
chip_gen: v7x
topology: tpu7x:2x2x1
jax: 0.10.0
libtpu: 0.0.40
codegen_flags: <defaults>
</compile_context>

<pallas_src>
import functools

import numpy as np
import jax
import jax.numpy as jnp
from jax.experimental import pallas as pl
from jax.experimental.pallas import tpu as pltpu

# ----------------------------------------------------------------------------- config
CFG = {
    "STAGE_I": {
        "CLS_HEAD": {
            "conv_channels": 16,
            "hidden_dim": 32,
            "conv_num_blocks": 1,
            "dilation": 1,
            "num_blocks": 2,
            "hidden_inter_dim": 64,
            "token_inter_dim": 16,
            "dropout": 0.0,
        },
        "CODEBOOK": {
            "token_num": 8,
            "token_class_num": 48,
        },
    },
}
IN_CHANNELS = 32
IMAGE_SIZE = (128, 128)          # feature map is image_size // 32  ->  4 x 4

_VMEM = pltpu.MemorySpace.VMEM


def _vspecs(n):
    return [pl.BlockSpec(memory_space=_VMEM) for _ in range(n)]


# ----------------------------------------------------------------------------- in-kernel math
def _gelu(x):
    # tanh-approximation GELU: transcendental lands on the EUP slot instead of a
    # long VALU erf polynomial (max ~1e-3 deviation from exact-erf GELU).
    c = 0.7978845608028654
    return 0.5 * x * (1.0 + jnp.tanh(c * (x + 0.044715 * x * x * x)))


def _layernorm(x, g, b):
    mean = jnp.mean(x, axis=-1, keepdims=True)
    var = jnp.mean((x - mean) ** 2, axis=-1, keepdims=True)
    return (x - mean) * jax.lax.rsqrt(var + 1e-5) * g + b


# ----------------------------------------------------------------------------- kernel A: conv stage + mixer_trans
def _make_conv_stage_kernel(num_conv_blocks, n_feat, n_tok):
    nb = num_conv_blocks

    def kernel(*refs):
        x_ref = refs[0]                         # (B, P*Cin)         f32
        w1_ref = refs[1]                        # (P*Cin, P*Cc)      bf16 (folded 1x1)
        blk_refs = refs[2:2 + 2 * nb]           # (P*Cc, P*Cc)       bf16 (folded 3x3)
        mtw_ref = refs[2 + 2 * nb]              # (P*Cc, Tn*Hd)      bf16
        vec_ref = refs[3 + 2 * nb]              # packed scale/shift/bias table, f32
        o_ref = refs[4 + 2 * nb]                # (B, Tn*Hd)

        x = x_ref[...]
        # conv_trans : folded 1x1 conv + BN(fold) + ReLU -- one MXU matmul
        h = jnp.dot(x.astype(jnp.bfloat16), w1_ref[...],
                    preferred_element_type=jnp.float32)
        h = jnp.maximum(h * vec_ref[0:1, :n_feat] + vec_ref[1:2, :n_feat], 0.0)

        # conv_head[0] : BasicBlocks, each 3x3 conv folded into one dense matmul
        for k in range(nb):
            r = 2 + 4 * k
            res = h
            t = jnp.dot(h.astype(jnp.bfloat16), blk_refs[2 * k][...],
                        preferred_element_type=jnp.float32)
            t = jnp.maximum(t * vec_ref[r:r + 1, :n_feat]
                            + vec_ref[r + 1:r + 2, :n_feat], 0.0)
            t = jnp.dot(t.astype(jnp.bfloat16), blk_refs[2 * k + 1][...],
                        preferred_element_type=jnp.float32)
            h = jnp.maximum(t * vec_ref[r + 2:r + 3, :n_feat]
                            + vec_ref[r + 3:r + 4, :n_feat] + res, 0.0)

        # flatten(2).transpose(2,1).flatten(1) is exactly this (p, c) flat layout;
        # mixer_trans : Linear + GELU
        rb = 2 + 4 * nb
        y = jnp.dot(h.astype(jnp.bfloat16), mtw_ref[...],
                    preferred_element_type=jnp.float32) + vec_ref[rb:rb + 1, :n_tok]
        o_ref[...] = _gelu(y).astype(o_ref.dtype)

    return kernel


# ----------------------------------------------------------------------------- kernel B: mixer layers + head
def _make_mixer_stage_kernel(nl, B, Tn, Ti, Hd, Hi, Tc):
    def kernel(*refs):
        x_ref = refs[0]                              # (B*Tn, Hd)
        mix_refs = refs[1:1 + 4 * nl]                # per layer: L1, L2, cw1, cw2
        base = 1 + 4 * nl
        mn_w_ref, cls_w_ref, vec_ref, col_ref = refs[base:base + 4]
        logits_ref, probs_ref = refs[base + 4], refs[base + 5]

        X = x_ref[...]
        for l in range(nl):
            L1 = mix_refs[4 * l][...]                # (B*Ti, B*Tn)  kron(I_B, Wt1^T)
            L2 = mix_refs[4 * l + 1][...]            # (B*Tn, B*Ti)  kron(I_B, Wt2^T)
            cw1 = mix_refs[4 * l + 2][...]           # (Hd, Hi)
            cw2 = mix_refs[4 * l + 3][...]           # (Hi, Hd)
            r = 6 * l
            g1 = vec_ref[r:r + 1, :Hd]
            b1 = vec_ref[r + 1:r + 2, :Hd]
            g2 = vec_ref[r + 2:r + 3, :Hd]
            b2 = vec_ref[r + 3:r + 4, :Hd]
            cb1 = vec_ref[r + 4:r + 5, :Hi]
            cb2 = vec_ref[r + 5:r + 6, :Hd]
            tb1 = col_ref[0:B * Ti, 2 * l:2 * l + 1]         # (B*Ti, 1)
            tb2 = col_ref[0:B * Tn, 2 * l + 1:2 * l + 2]     # (B*Tn, 1)

            x0 = X
            ln1 = _layernorm(x0, g1, b1)
            # token mixing: block-diagonal left matmuls (Dropout is a no-op)
            mid = _gelu(jnp.dot(L1, ln1, preferred_element_type=jnp.float32) + tb1)
            y = jnp.dot(L2, mid, preferred_element_type=jnp.float32) + tb2
            xy = x0 + y
            ln2 = _layernorm(xy, g2, b2)
            # channel mixing
            z = _gelu(jnp.dot(ln2, cw1, preferred_element_type=jnp.float32) + cb1)
            z = jnp.dot(z, cw2, preferred_element_type=jnp.float32) + cb2
            X = xy + z

        rb = 6 * nl
        h = _gelu(jnp.dot(X, mn_w_ref[...], preferred_element_type=jnp.float32)
                  + vec_ref[rb:rb + 1, :Hd])
        logits = jnp.dot(h, cls_w_ref[...], preferred_element_type=jnp.float32) \
            + vec_ref[rb + 1:rb + 2, :Tc]
        logits_ref[...] = logits.astype(logits_ref.dtype)
        m = jnp.max(logits, axis=-1, keepdims=True)
        e = jnp.exp(logits - m)
        inv = pl.reciprocal(jnp.sum(e, axis=-1, keepdims=True), approx=True)
        probs_ref[...] = (e * inv).astype(probs_ref.dtype)

    return kernel


# ----------------------------------------------------------------------------- parameter init (PyTorch-layout-ish)
def init_params(key, cfg, in_channels, image_size):
    head = cfg["STAGE_I"]["CLS_HEAD"]
    cb = cfg["STAGE_I"]["CODEBOOK"]
    Cc, Hd = head["conv_channels"], head["hidden_dim"]
    Hi, Ti = head["hidden_inter_dim"], head["token_inter_dim"]
    Tn, Tc = cb["token_num"], cb["token_class_num"]
    P = (image_size[0] // 32) * (image_size[1] // 32)

    keys = iter(jax.random.split(key, 128))

    def w(shape, scale=0.05):
        return scale * jax.random.normal(next(keys), shape, jnp.float32)

    def bn(c):
        gamma = 1.0 + 0.1 * jax.random.normal(next(keys), (c,), jnp.float32)
        beta = 0.05 * jax.random.normal(next(keys), (c,), jnp.float32)
        mean = 0.05 * jax.random.normal(next(keys), (c,), jnp.float32)
        var = 1.0 + 0.1 * jax.random.uniform(next(keys), (c,), jnp.float32)
        s = gamma * jax.lax.rsqrt(var + 1e-5)        # inference-mode BN fold
        return s, beta - mean * s

    p = {}
    p["trans_w"] = w((in_channels, Cc))              # 1x1 conv (Cin, Cout), no bias
    p["trans_s"], p["trans_b"] = bn(Cc)
    blocks = []
    for _ in range(head["conv_num_blocks"]):
        blk = {"w1": w((3, 3, Cc, Cc)), "w2": w((3, 3, Cc, Cc))}   # (kH,kW,Cin,Cout)
        blk["s1"], blk["b1"] = bn(Cc)
        blk["s2"], blk["b2"] = bn(Cc)
        blocks.append(blk)
    p["blocks"] = blocks
    p["mt_w"] = w((Cc * P, Tn * Hd))
    p["mt_b"] = w((Tn * Hd,))
    mixers = []
    for _ in range(head["num_blocks"]):
        m = {
            "ln1_g": 1.0 + 0.1 * jax.random.normal(next(keys), (Hd,), jnp.float32),
            "ln1_b": 0.05 * jax.random.normal(next(keys), (Hd,), jnp.float32),
            "tok_w1": w((Tn, Ti)), "tok_b1": w((Ti,)),
            "tok_w2": w((Ti, Tn)), "tok_b2": w((Tn,)),
            "ln2_g": 1.0 + 0.1 * jax.random.normal(next(keys), (Hd,), jnp.float32),
            "ln2_b": 0.05 * jax.random.normal(next(keys), (Hd,), jnp.float32),
            "ch_w1": w((Hd, Hi)), "ch_b1": w((Hi,)),
            "ch_w2": w((Hi, Hd)), "ch_b2": w((Hd,)),
        }
        mixers.append(m)
    p["mixers"] = mixers
    p["mn_w"] = w((Hd, Hd))
    p["mn_b"] = w((Hd,))
    p["cls_w"] = w((Hd, Tc))
    p["cls_b"] = w((Tc,))
    return p


# ----------------------------------------------------------------------------- prep-time folding / packing
def _shift_matrix(H, W, dy, dx):
    P = H * W
    S = np.zeros((P, P), np.float32)
    for py in range(H):
        for px in range(W):
            qy, qx = py + dy, px + dx
            if 0 <= qy < H and 0 <= qx < W:
                S[qy * W + qx, py * W + px] = 1.0
    return S


def _fold_conv3x3(w3, H, W, dilation):
    """Fold a 3x3 conv (weights (kH,kW,Cin,Cout)) over the HxW map with zero
    padding=dilation into a dense (P*Cin, P*Cout) matrix on the NHWC-flat layout."""
    P = H * W
    Ci, Co = w3.shape[2], w3.shape[3]
    M = jnp.zeros((P * Ci, P * Co), jnp.float32)
    for ky in range(3):
        for kx in range(3):
            S = _shift_matrix(H, W, dilation * (ky - 1), dilation * (kx - 1))
            M = M + jnp.kron(jnp.asarray(S), w3[ky, kx])
    return M


def _fold_conv1x1_nchw(w1, H, W):
    """1x1 conv folded so it consumes the NCHW flat layout (ci*P+q) and produces
    the NHWC flat layout (p*Cout+co): no input transpose needed in the forward."""
    Ci, Co = w1.shape
    P = H * W
    M = jnp.kron(jnp.eye(P, dtype=jnp.float32), w1)          # rows: q*Ci+ci
    M = M.reshape(P, Ci, P * Co).transpose(1, 0, 2).reshape(Ci * P, P * Co)
    return M


def prepare_kernel_params(p, cfg, in_channels, image_size, batch):
    head = cfg["STAGE_I"]["CLS_HEAD"]
    cb = cfg["STAGE_I"]["CODEBOOK"]
    Cc, Hd = head["conv_channels"], head["hidden_dim"]
    Hi, Ti = head["hidden_inter_dim"], head["token_inter_dim"]
    Tn, Tc = cb["token_num"], cb["token_class_num"]
    d = head["dilation"]
    H, W = image_size[0] // 32, image_size[1] // 32
    P = H * W
    B = batch

    kp = {}
    # ---------------- stage A: conv + mixer_trans ----------------
    wa = max(P * Cc, Tn * Hd)

    def rowa(v):
        return jnp.pad(v, (0, wa - v.shape[0]))

    kp["w1"] = _fold_conv1x1_nchw(p["trans_w"], H, W).astype(jnp.bfloat16)
    blk_ws, vec_rows = [], [rowa(jnp.tile(p["trans_s"], P)),
                            rowa(jnp.tile(p["trans_b"], P))]
    for blk in p["blocks"]:
        blk_ws.append(_fold_conv3x3(blk["w1"], H, W, d).astype(jnp.bfloat16))
        blk_ws.append(_fold_conv3x3(blk["w2"], H, W, d).astype(jnp.bfloat16))
        vec_rows += [rowa(jnp.tile(blk["s1"], P)), rowa(jnp.tile(blk["b1"], P)),
                     rowa(jnp.tile(blk["s2"], P)), rowa(jnp.tile(blk["b2"], P))]
    vec_rows.append(rowa(p["mt_b"]))
    kp["blk_ws"] = blk_ws
    kp["mt_w"] = p["mt_w"].astype(jnp.bfloat16)
    va = jnp.stack(vec_rows)
    kp["vec_a"] = jnp.pad(va, (((-va.shape[0]) % 8, 0), (0, 0))[::-1]) \
        if False else jnp.pad(va, ((0, (-va.shape[0]) % 8), (0, 0)))

    # ---------------- stage B: mixer layers + head ----------------
    wb = max(Hd, Hi, Tc)

    def rowb(v):
        return jnp.pad(v, (0, wb - v.shape[0]))

    eyeB = np.eye(B, dtype=np.float32)
    colrows = max(B * Ti, B * Tn)
    mix_ws, vec_b_rows, col_cols = [], [], []
    for m in p["mixers"]:
        mix_ws += [jnp.kron(jnp.asarray(eyeB), m["tok_w1"].T),   # (B*Ti, B*Tn)
                   jnp.kron(jnp.asarray(eyeB), m["tok_w2"].T),   # (B*Tn, B*Ti)
                   m["ch_w1"], m["ch_w2"]]
        vec_b_rows += [rowb(m["ln1_g"]), rowb(m["ln1_b"]),
                       rowb(m["ln2_g"]), rowb(m["ln2_b"]),
                       rowb(m["ch_b1"]), rowb(m["ch_b2"])]
        col_cols += [jnp.pad(jnp.tile(m["tok_b1"], B), (0, colrows - B * Ti)),
                     jnp.pad(jnp.tile(m["tok_b2"], B), (0, colrows - B * Tn))]
    vec_b_rows += [rowb(p["mn_b"]), rowb(p["cls_b"])]
    kp["mix_ws"] = mix_ws
    kp["mn_w"] = p["mn_w"]
    kp["cls_w"] = p["cls_w"]
    vb = jnp.stack(vec_b_rows)
    kp["vec_b"] = jnp.pad(vb, ((0, (-vb.shape[0]) % 8), (0, 0)))
    kp["col_b"] = jnp.stack(col_cols, axis=1)                    # (colrows, 2*nl)
    return kp


# ----------------------------------------------------------------------------- forward
def cls_head_forward(kp, x, cfg):
    head = cfg["STAGE_I"]["CLS_HEAD"]
    cb = cfg["STAGE_I"]["CODEBOOK"]
    Cc, Hd = head["conv_channels"], head["hidden_dim"]
    Hi, Ti = head["hidden_inter_dim"], head["token_inter_dim"]
    Tn, Tc = cb["token_num"], cb["token_class_num"]
    nb = head["conv_num_blocks"]
    nl = head["num_blocks"]

    B, Cin, H, W = x.shape                       # PyTorch NCHW input
    P = H * W
    x_flat = x.reshape(B, Cin * P)               # contiguous flatten (no transpose)

    # --- kernel A : conv_trans + BasicBlocks + mixer_trans (one launch) ---
    a_inputs = [x_flat, kp["w1"]] + kp["blk_ws"] + [kp["mt_w"], kp["vec_a"]]
    tokens_flat = pl.pallas_call(
        _make_conv_stage_kernel(nb, P * Cc, Tn * Hd),
        out_shape=jax.ShapeDtypeStruct((B, Tn * Hd), jnp.float32),
        in_specs=_vspecs(len(a_inputs)),
        out_specs=pl.BlockSpec(memory_space=_VMEM),
    )(*a_inputs)

    # (B, Tn*Hd) -> (B*Tn, Hd) is contiguity-preserving: free bitcast, no HBM copy.
    tokens = tokens_flat.reshape(B * Tn, Hd)

    # --- kernel B : MixerLayers + mixer_norm + cls_pred + softmax (one launch) ---
    b_inputs = [tokens] + kp["mix_ws"] + [kp["mn_w"], kp["cls_w"],
                                          kp["vec_b"], kp["col_b"]]
    logits, probs = pl.pallas_call(
        _make_mixer_stage_kernel(nl, B, Tn, Ti, Hd, Hi, Tc),
        out_shape=(jax.ShapeDtypeStruct((B * Tn, Tc), jnp.float32),
                   jax.ShapeDtypeStruct((B * Tn, Tc), jnp.float32)),
        in_specs=_vspecs(len(b_inputs)),
        out_specs=(pl.BlockSpec(memory_space=_VMEM),
                   pl.BlockSpec(memory_space=_VMEM)),
    )(*b_inputs)
    return logits, probs


if __name__ == "__main__":
    key = jax.random.PRNGKey(0)
    pkey, xkey = jax.random.split(key)

    params = init_params(pkey, CFG, IN_CHANNELS, IMAGE_SIZE)

    B = 2
    H = IMAGE_SIZE[0] // 32
    W = IMAGE_SIZE[1] // 32
    x = jax.random.normal(xkey, (B, IN_CHANNELS, H, W), jnp.float32)

    # one-time weight preprocessing (BN fold, conv fold, token-weight kron, packing)
    kparams = prepare_kernel_params(params, CFG, IN_CHANNELS, IMAGE_SIZE, B)

    fwd = jax.jit(functools.partial(cls_head_forward, cfg=CFG))
    logits, probs = jax.block_until_ready(fwd(kparams, x))

    Tn = CFG["STAGE_I"]["CODEBOOK"]["token_num"]
    Tc = CFG["STAGE_I"]["CODEBOOK"]["token_class_num"]
    assert logits.shape == (B * Tn, Tc) and probs.shape == (B * Tn, Tc)
    assert bool(jnp.all(jnp.isfinite(logits))) and bool(jnp.all(jnp.isfinite(probs)))
    # approx (EUP) reciprocal in the softmax -> row sums are 1 within ~1e-3
    assert bool(jnp.allclose(jnp.sum(probs, axis=-1), 1.0, atol=5e-3))
    print("KERNEL_OK")
</pallas_src>

<mosaic_0001>
module attributes {stable_mosaic.version = 11 : i64} {
  func.func @kernel(%arg0: memref<2x512xf32, #tpu.memory_space<vmem>>, %arg1: memref<512x256xbf16, #tpu.memory_space<vmem>>, %arg2: memref<256x256xbf16, #tpu.memory_space<vmem>>, %arg3: memref<256x256xbf16, #tpu.memory_space<vmem>>, %arg4: memref<256x256xbf16, #tpu.memory_space<vmem>>, %arg5: memref<8x256xf32, #tpu.memory_space<vmem>>, %arg6: memref<2x256xf32, #tpu.memory_space<vmem>>) attributes {dimension_semantics = [], scalar_prefetch = 0 : i64, scratch_operands = 0 : i64, tpu.core_type = #tpu.core_type<tc>} {
    %c0 = arith.constant 0 : index
    %c0_0 = arith.constant 0 : index
    %0 = vector.load %arg0[%c0, %c0_0] : memref<2x512xf32, #tpu.memory_space<vmem>>, vector<2x512xf32>
    %1 = arith.truncf %0 : vector<2x512xf32> to vector<2x512xbf16>
    %c0_1 = arith.constant 0 : index
    %c0_2 = arith.constant 0 : index
    %2 = vector.load %arg1[%c0_1, %c0_2] : memref<512x256xbf16, #tpu.memory_space<vmem>>, vector<512x256xbf16>
    %cst = arith.constant dense<0.000000e+00> : vector<2x256xf32>
    %3 = tpu.matmul %1, %2, %cst {dimension_numbers = #tpu.dot_dimension_numbers<[1], [0], [0], [1], [0, 0, 1, 1], [], []>} : vector<2x512xbf16>, vector<512x256xbf16>, vector<2x256xf32> -> vector<2x256xf32>
    %c0_3 = arith.constant 0 : index
    %c0_4 = arith.constant 0 : index
    %4 = vector.load %arg5[%c0_3, %c0_4] : memref<8x256xf32, #tpu.memory_space<vmem>>, vector<1x256xf32>
    %5 = vector.broadcast %4 : vector<1x256xf32> to vector<2x256xf32>
    %6 = arith.mulf %3, %5 : vector<2x256xf32>
    %c1 = arith.constant 1 : index
    %c0_5 = arith.constant 0 : index
    %7 = vector.load %arg5[%c1, %c0_5] : memref<8x256xf32, #tpu.memory_space<vmem>>, vector<1x256xf32>
    %8 = vector.broadcast %7 : vector<1x256xf32> to vector<2x256xf32>
    %9 = arith.addf %6, %8 : vector<2x256xf32>
    %cst_6 = arith.constant 0.000000e+00 : f32
    %10 = vector.broadcast %cst_6 : f32 to vector<2x256xf32>
    %11 = arith.maximumf %9, %10 : vector<2x256xf32>
    %12 = arith.truncf %11 : vector<2x256xf32> to vector<2x256xbf16>
    %c0_7 = arith.constant 0 : index
    %c0_8 = arith.constant 0 : index
    %13 = vector.load %arg2[%c0_7, %c0_8] : memref<256x256xbf16, #tpu.memory_space<vmem>>, vector<256x256xbf16>
    %cst_9 = arith.constant dense<0.000000e+00> : vector<2x256xf32>
    %14 = tpu.matmul %12, %13, %cst_9 {dimension_numbers = #tpu.dot_dimension_numbers<[1], [0], [0], [1], [0, 0, 1, 1], [], []>} : vector<2x256xbf16>, vector<256x256xbf16>, vector<2x256xf32> -> vector<2x256xf32>
    %c2 = arith.constant 2 : index
    %c0_10 = arith.constant 0 : index
    %15 = vector.load %arg5[%c2, %c0_10] : memref<8x256xf32, #tpu.memory_space<vmem>>, vector<1x256xf32>
    %16 = vector.broadcast %15 : vector<1x256xf32> to vector<2x256xf32>
    %17 = arith.mulf %14, %16 : vector<2x256xf32>
    %c3 = arith.constant 3 : index
    %c0_11 = arith.constant 0 : index
    %18 = vector.load %arg5[%c3, %c0_11] : memref<8x256xf32, #tpu.memory_space<vmem>>, vector<1x256xf32>
    %19 = vector.broadcast %18 : vector<1x256xf32> to vector<2x256xf32>
    %20 = arith.addf %17, %19 : vector<2x256xf32>
    %cst_12 = arith.constant 0.000000e+00 : f32
    %21 = vector.broadcast %cst_12 : f32 to vector<2x256xf32>
    %22 = arith.maximumf %20, %21 : vector<2x256xf32>
    %23 = arith.truncf %22 : vector<2x256xf32> to vector<2x256xbf16>
    %c0_13 = arith.constant 0 : index
    %c0_14 = arith.constant 0 : index
    %24 = vector.load %arg3[%c0_13, %c0_14] : memref<256x256xbf16, #tpu.memory_space<vmem>>, vector<256x256xbf16>
    %cst_15 = arith.constant dense<0.000000e+00> : vector<2x256xf32>
    %25 = tpu.matmul %23, %24, %cst_15 {dimension_numbers = #tpu.dot_dimension_numbers<[1], [0], [0], [1], [0, 0, 1, 1], [], []>} : vector<2x256xbf16>, vector<256x256xbf16>, vector<2x256xf32> -> vector<2x256xf32>
    %c4 = arith.constant 4 : index
    %c0_16 = arith.constant 0 : index
    %26 = vector.load %arg5[%c4, %c0_16] : memref<8x256xf32, #tpu.memory_space<vmem>>, vector<1x256xf32>
    %27 = vector.broadcast %26 : vector<1x256xf32> to vector<2x256xf32>
    %28 = arith.mulf %25, %27 : vector<2x256xf32>
    %c5 = arith.constant 5 : index
    %c0_17 = arith.constant 0 : index
    %29 = vector.load %arg5[%c5, %c0_17] : memref<8x256xf32, #tpu.memory_space<vmem>>, vector<1x256xf32>
    %30 = vector.broadcast %29 : vector<1x256xf32> to vector<2x256xf32>
    %31 = arith.addf %28, %30 : vector<2x256xf32>
    %32 = arith.addf %31, %11 : vector<2x256xf32>
    %cst_18 = arith.constant 0.000000e+00 : f32
    %33 = vector.broadcast %cst_18 : f32 to vector<2x256xf32>
    %34 = arith.maximumf %32, %33 : vector<2x256xf32>
    %35 = arith.truncf %34 : vector<2x256xf32> to vector<2x256xbf16>
    %c0_19 = arith.constant 0 : index
    %c0_20 = arith.constant 0 : index
    %36 = vector.load %arg4[%c0_19, %c0_20] : memref<256x256xbf16, #tpu.memory_space<vmem>>, vector<256x256xbf16>
    %cst_21 = arith.constant dense<0.000000e+00> : vector<2x256xf32>
    %37 = tpu.matmul %35, %36, %cst_21 {dimension_numbers = #tpu.dot_dimension_numbers<[1], [0], [0], [1], [0, 0, 1, 1], [], []>} : vector<2x256xbf16>, vector<256x256xbf16>, vector<2x256xf32> -> vector<2x256xf32>
    %c6 = arith.constant 6 : index
    %c0_22 = arith.constant 0 : index
    %38 = vector.load %arg5[%c6, %c0_22] : memref<8x256xf32, #tpu.memory_space<vmem>>, vector<1x256xf32>
    %39 = vector.broadcast %38 : vector<1x256xf32> to vector<2x256xf32>
    %40 = arith.addf %37, %39 : vector<2x256xf32>
    %cst_23 = arith.constant 5.000000e-01 : f32
    %41 = vector.broadcast %cst_23 : f32 to vector<2x256xf32>
    %42 = arith.mulf %41, %40 : vector<2x256xf32>
    %cst_24 = arith.constant 4.471500e-02 : f32
    %43 = vector.broadcast %cst_24 : f32 to vector<2x256xf32>
    %44 = arith.mulf %43, %40 : vector<2x256xf32>
    %45 = arith.mulf %44, %40 : vector<2x256xf32>
    %46 = arith.mulf %45, %40 : vector<2x256xf32>
    %47 = arith.addf %40, %46 : vector<2x256xf32>
    %cst_25 = arith.constant 0.797884583 : f32
    %48 = vector.broadcast %cst_25 : f32 to vector<2x256xf32>
    %49 = arith.mulf %48, %47 : vector<2x256xf32>
    %50 = math.tanh %49 : vector<2x256xf32>
    %cst_26 = arith.constant 1.000000e+00 : f32
    %51 = vector.broadcast %cst_26 : f32 to vector<2x256xf32>
    %52 = arith.addf %51, %50 : vector<2x256xf32>
    %53 = arith.mulf %42, %52 : vector<2x256xf32>
    %c0_27 = arith.constant 0 : index
    %c0_28 = arith.constant 0 : index
    %54 = vector.load %arg6[%c0_27, %c0_28] : memref<2x256xf32, #tpu.memory_space<vmem>>, vector<2x256xf32>
    tpu.vector_store %arg6[%c0_27, %c0_28], %53 {strides = array<i32>} : memref<2x256xf32, #tpu.memory_space<vmem>>, vector<2x256xf32>,
    return
  }
}

module attributes {stable_mosaic.version = 11 : i64} {
  func.func @kernel(%arg0: memref<16x32xf32, #tpu.memory_space<vmem>>, %arg1: memref<32x16xf32, #tpu.memory_space<vmem>>, %arg2: memref<16x32xf32, #tpu.memory_space<vmem>>, %arg3: memref<32x64xf32, #tpu.memory_space<vmem>>, %arg4: memref<64x32xf32, #tpu.memory_space<vmem>>, %arg5: memref<32x16xf32, #tpu.memory_space<vmem>>, %arg6: memref<16x32xf32, #tpu.memory_space<vmem>>, %arg7: memref<32x64xf32, #tpu.memory_space<vmem>>, %arg8: memref<64x32xf32, #tpu.memory_space<vmem>>, %arg9: memref<32x32xf32, #tpu.memory_space<vmem>>, %arg10: memref<32x48xf32, #tpu.memory_space<vmem>>, %arg11: memref<16x64xf32, #tpu.memory_space<vmem>>, %arg12: memref<32x4xf32, #tpu.memory_space<vmem>>, %arg13: memref<16x48xf32, #tpu.memory_space<vmem>>, %arg14: memref<16x48xf32, #tpu.memory_space<vmem>>) attributes {dimension_semantics = [], scalar_prefetch = 0 : i64, scratch_operands = 0 : i64, tpu.core_type = #tpu.core_type<tc>} {
    %c0 = arith.constant 0 : index
    %c0_0 = arith.constant 0 : index
    %0 = vector.load %arg0[%c0, %c0_0] : memref<16x32xf32, #tpu.memory_space<vmem>>, vector<16x32xf32>
    %c0_1 = arith.constant 0 : index
    %c0_2 = arith.constant 0 : index
    %1 = vector.load %arg1[%c0_1, %c0_2] : memref<32x16xf32, #tpu.memory_space<vmem>>, vector<32x16xf32>
    %c0_3 = arith.constant 0 : index
    %c0_4 = arith.constant 0 : index
    %2 = vector.load %arg2[%c0_3, %c0_4] : memref<16x32xf32, #tpu.memory_space<vmem>>, vector<16x32xf32>
    %c0_5 = arith.constant 0 : index
    %c0_6 = arith.constant 0 : index
    %3 = vector.load %arg3[%c0_5, %c0_6] : memref<32x64xf32, #tpu.memory_space<vmem>>, vector<32x64xf32>
    %c0_7 = arith.constant 0 : index
    %c0_8 = arith.constant 0 : index
    %4 = vector.load %arg4[%c0_7, %c0_8] : memref<64x32xf32, #tpu.memory_space<vmem>>, vector<64x32xf32>
    %c0_9 = arith.constant 0 : index
    %c0_10 = arith.constant 0 : index
    %5 = vector.load %arg11[%c0_9, %c0_10] : memref<16x64xf32, #tpu.memory_space<vmem>>, vector<1x32xf32>
    %c1 = arith.constant 1 : index
    %c0_11 = arith.constant 0 : index
    %6 = vector.load %arg11[%c1, %c0_11] : memref<16x64xf32, #tpu.memory_space<vmem>>, vector<1x32xf32>
    %c2 = arith.constant 2 : index
    %c0_12 = arith.constant 0 : index
    %7 = vector.load %arg11[%c2, %c0_12] : memref<16x64xf32, #tpu.memory_space<vmem>>, vector<1x32xf32>
    %c3 = arith.constant 3 : index
    %c0_13 = arith.constant 0 : index
    %8 = vector.load %arg11[%c3, %c0_13] : memref<16x64xf32, #tpu.memory_space<vmem>>, vector<1x32xf32>
    %c4 = arith.constant 4 : index
    %c0_14 = arith.constant 0 : index
    %9 = vector.load %arg11[%c4, %c0_14] : memref<16x64xf32, #tpu.memory_space<vmem>>, vector<1x64xf32>
    %c5 = arith.constant 5 : index
    %c0_15 = arith.constant 0 : index
    %10 = vector.load %arg11[%c5, %c0_15] : memref<16x64xf32, #tpu.memory_space<vmem>>, vector<1x32xf32>
    %c0_16 = arith.constant 0 : index
    %c0_17 = arith.constant 0 : index
    %11 = vector.load %arg12[%c0_16, %c0_17] : memref<32x4xf32, #tpu.memory_space<vmem>>, vector<32x1xf32>
    %c0_18 = arith.constant 0 : index
    %c1_19 = arith.constant 1 : index
    %12 = vector.load %arg12[%c0_18, %c1_19] : memref<32x4xf32, #tpu.memory_space<vmem>>, vector<16x1xf32>
    %cst = arith.constant dense<0.000000e+00> : vector<16xf32>
    %13 = vector.multi_reduction <add>, %0, %cst [1] : vector<16x32xf32> to vector<16xf32>
    %14 = vector.shape_cast %13 : vector<16xf32> to vector<16x1xf32>
    %cst_20 = arith.constant 3.200000e+01 : f32
    %15 = vector.broadcast %cst_20 : f32 to vector<16x1xf32>
    %16 = arith.divf %14, %15 : vector<16x1xf32>
    %17 = vector.broadcast %16 : vector<16x1xf32> to vector<16x32xf32>
    %18 = arith.subf %0, %17 : vector<16x32xf32>
    %19 = arith.mulf %18, %18 : vector<16x32xf32>
    %cst_21 = arith.constant dense<0.000000e+00> : vector<16xf32>
    %20 = vector.multi_reduction <add>, %19, %cst_21 [1] : vector<16x32xf32> to vector<16xf32>
    %21 = vector.shape_cast %20 : vector<16xf32> to vector<16x1xf32>
    %cst_22 = arith.constant 3.200000e+01 : f32
    %22 = vector.broadcast %cst_22 : f32 to vector<16x1xf32>
    %23 = arith.divf %21, %22 : vector<16x1xf32>
    %24 = vector.broadcast %16 : vector<16x1xf32> to vector<16x32xf32>
    %25 = arith.subf %0, %24 : vector<16x32xf32>
    %cst_23 = arith.constant 9.99999974E-6 : f32
    %26 = vector.broadcast %cst_23 : f32 to vector<16x1xf32>
    %27 = arith.addf %23, %26 : vector<16x1xf32>
    %28 = math.rsqrt %27 : vector<16x1xf32>
    %29 = vector.broadcast %28 : vector<16x1xf32> to vector<16x32xf32>
    %30 = arith.mulf %25, %29 : vector<16x32xf32>
    %31 = vector.broadcast %5 : vector<1x32xf32> to vector<16x32xf32>
    %32 = arith.mulf %30, %31 : vector<16x32xf32>
    %33 = vector.broadcast %6 : vector<1x32xf32> to vector<16x32xf32>
    %34 = arith.addf %32, %33 : vector<16x32xf32>
    %cst_24 = arith.constant dense<0.000000e+00> : vector<32x32xf32>
    %35 = tpu.matmul %1, %34, %cst_24 {dimension_numbers = #tpu.dot_dimension_numbers<[1], [0], [0], [1], [0, 0, 1, 1], [], []>} : vector<32x16xf32>, vector<16x32xf32>, vector<32x32xf32> -> vector<32x32xf32>
    %36 = vector.broadcast %11 : vector<32x1xf32> to vector<32x32xf32>
    %37 = arith.addf %35, %36 : vector<32x32xf32>
    %cst_25 = arith.constant 5.000000e-01 : f32
    %38 = vector.broadcast %cst_25 : f32 to vector<32x32xf32>
    %39 = arith.mulf %38, %37 : vector<32x32xf32>
    %cst_26 = arith.constant 4.471500e-02 : f32
    %40 = vector.broadcast %cst_26 : f32 to vector<32x32xf32>
    %41 = arith.mulf %40, %37 : vector<32x32xf32>
    %42 = arith.mulf %41, %37 : vector<32x32xf32>
    %43 = arith.mulf %42, %37 : vector<32x32xf32>
    %44 = arith.addf %37, %43 : vector<32x32xf32>
    %cst_27 = arith.constant 0.797884583 : f32
    %45 = vector.broadcast %cst_27 : f32 to vector<32x32xf32>
    %46 = arith.mulf %45, %44 : vector<32x32xf32>
    %47 = math.tanh %46 : vector<32x32xf32>
    %cst_28 = arith.constant 1.000000e+00 : f32
    %48 = vector.broadcast %cst_28 : f32 to vector<32x32xf32>
    %49 = arith.addf %48, %47 : vector<32x32xf32>
    %50 = arith.mulf %39, %49 : vector<32x32xf32>
    %cst_29 = arith.constant dense<0.000000e+00> : vector<16x32xf32>
    %51 = tpu.matmul %2, %50, %cst_29 {dimension_numbers = #tpu.dot_dimension_numbers<[1], [0], [0], [1], [0, 0, 1, 1], [], []>} : vector<16x32xf32>, vector<32x32xf32>, vector<16x32xf32> -> vector<16x32xf32>
    %52 = vector.broadcast %12 : vector<16x1xf32> to vector<16x32xf32>
    %53 = arith.addf %51, %52 : vector<16x32xf32>
    %54 = arith.addf %0, %53 : vector<16x32xf32>
    %cst_30 = arith.constant dense<0.000000e+00> : vector<16xf32>
    %55 = vector.multi_reduction <add>, %54, %cst_30 [1] : vector<16x32xf32> to vector<16xf32>
    %56 = vector.shape_cast %55 : vector<16xf32> to vector<16x1xf32>
    %cst_31 = arith.constant 3.200000e+01 : f32
    %57 = vector.broadcast %cst_31 : f32 to vector<16x1xf32>
    %58 = arith.divf %56, %57 : vector<16x1xf32>
    %59 = vector.broadcast %58 : vector<16x1xf32> to vector<16x32xf32>
    %60 = arith.subf %54, %59 : vector<16x32xf32>
    %61 = arith.mulf %60, %60 : vector<16x32xf32>
    %cst_32 = arith.constant dense<0.000000e+00> : vector<16xf32>
    %62 = vector.multi_reduction <add>, %61, %cst_32 [1] : vector<16x32xf32> to vector<16xf32>
    %63 = vector.shape_cast %62 : vector<16xf32> to vector<16x1xf32>
    %cst_33 = arith.constant 3.200000e+01 : f32
    %64 = vector.broadcast %cst_33 : f32 to vector<16x1xf32>
    %65 = arith.divf %63, %64 : vector<16x1xf32>
    %66 = vector.broadcast %58 : vector<16x1xf32> to vector<16x32xf32>
    %67 = arith.subf %54, %66 : vector<16x32xf32>
    %cst_34 = arith.constant 9.99999974E-6 : f32
    %68 = vector.broadcast %cst_34 : f32 to vector<16x1xf32>
    %69 = arith.addf %65, %68 : vector<16x1xf32>
    %70 = math.rsqrt %69 : vector<16x1xf32>
    %71 = vector.broadcast %70 : vector<16x1xf32> to vector<16x32xf32>
    %72 = arith.mulf %67, %71 : vector<16x32xf32>
    %73 = vector.broadcast %7 : vector<1x32xf32> to vector<16x32xf32>
    %74 = arith.mulf %72, %73 : vector<16x32xf32>
    %75 = vector.broadcast %8 : vector<1x32xf32> to vector<16x32xf32>
    %76 = arith.addf %74, %75 : vector<16x32xf32>
    %cst_35 = arith.constant dense<0.000000e+00> : vector<16x64xf32>
    %77 = tpu.matmul %76, %3, %cst_35 {dimension_numbers = #tpu.dot_dimension_numbers<[1], [0], [0], [1], [0, 0, 1, 1], [], []>} : vector<16x32xf32>, vector<32x64xf32>, vector<16x64xf32> -> vector<16x64xf32>
    %78 = vector.broadcast %9 : vector<1x64xf32> to vector<16x64xf32>
    %79 = arith.addf %77, %78 : vector<16x64xf32>
    %cst_36 = arith.constant 5.000000e-01 : f32
    %80 = vector.broadcast %cst_36 : f32 to vector<16x64xf32>
    %81 = arith.mulf %80, %79 : vector<16x64xf32>
    %cst_37 = arith.constant 4.471500e-02 : f32
    %82 = vector.broadcast %cst_37 : f32 to vector<16x64xf32>
    %83 = arith.mulf %82, %79 : vector<16x64xf32>
    %84 = arith.mulf %83, %79 : vector<16x64xf32>
    %85 = arith.mulf %84, %79 : vector<16x64xf32>
    %86 = arith.addf %79, %85 : vector<16x64xf32>
    %cst_38 = arith.constant 0.797884583 : f32
    %87 = vector.broadcast %cst_38 : f32 to vector<16x64xf32>
    %88 = arith.mulf %87, %86 : vector<16x64xf32>
    %89 = math.tanh %88 : vector<16x64xf32>
    %cst_39 = arith.constant 1.000000e+00 : f32
    %90 = vector.broadcast %cst_39 : f32 to vector<16x64xf32>
    %91 = arith.addf %90, %89 : vector<16x64xf32>
    %92 = arith.mulf %81, %91 : vector<16x64xf32>
    %cst_40 = arith.constant dense<0.000000e+00> : vector<16x32xf32>
    %93 = tpu.matmul %92, %4, %cst_40 {dimension_numbers = #tpu.dot_dimension_numbers<[1], [0], [0], [1], [0, 0, 1, 1], [], []>} : vector<16x64xf32>, vector<64x32xf32>, vector<16x32xf32> -> vector<16x32xf32>
    %94 = vector.broadcast %10 : vector<1x32xf32> to vector<16x32xf32>
    %95 = arith.addf %93, %94 : vector<16x32xf32>
    %96 = arith.addf %54, %95 : vector<16x32xf32>
    %c0_41 = arith.constant 0 : index
    %c0_42 = arith.constant 0 : index
    %97 = vector.load %arg5[%c0_41, %c0_42] : memref<32x16xf32, #tpu.memory_space<vmem>>, vector<32x16xf32>
    %c0_43 = arith.constant 0 : index
    %c0_44 = arith.constant 0 : index
    %98 = vector.load %arg6[%c0_43, %c0_44] : memref<16x32xf32, #tpu.memory_space<vmem>>, vector<16x32xf32>
    %c0_45 = arith.constant 0 : index
    %c0_46 = arith.constant 0 : index
    %99 = vector.load %arg7[%c0_45, %c0_46] : memref<32x64xf32, #tpu.memory_space<vmem>>, vector<32x64xf32>
    %c0_47 = arith.constant 0 : index
    %c0_48 = arith.constant 0 : index
    %100 = vector.load %arg8[%c0_47, %c0_48] : memref<64x32xf32, #tpu.memory_space<vmem>>, vector<64x32xf32>
    %c6 = arith.constant 6 : index
    %c0_49 = arith.constant 0 : index
    %101 = vector.load %arg11[%c6, %c0_49] : memref<16x64xf32, #tpu.memory_space<vmem>>, vector<1x32xf32>
    %c7 = arith.constant 7 : index
    %c0_50 = arith.constant 0 : index
    %102 = vector.load %arg11[%c7, %c0_50] : memref<16x64xf32, #tpu.memory_space<vmem>>, vector<1x32xf32>
    %c8 = arith.constant 8 : index
    %c0_51 = arith.constant 0 : index
    %103 = vector.load %arg11[%c8, %c0_51] : memref<16x64xf32, #tpu.memory_space<vmem>>, vector<1x32xf32>
    %c9 = arith.constant 9 : index
    %c0_52 = arith.constant 0 : index
    %104 = vector.load %arg11[%c9, %c0_52] : memref<16x64xf32, #tpu.memory_space<vmem>>, vector<1x32xf32>
    %c10 = arith.constant 10 : index
    %c0_53 = arith.constant 0 : index
    %105 = vector.load %arg11[%c10, %c0_53] : memref<16x64xf32, #tpu.memory_space<vmem>>, vector<1x64xf32>
    %c11 = arith.constant 11 : index
    %c0_54 = arith.constant 0 : index
    %106 = vector.load %arg11[%c11, %c0_54] : memref<16x64xf32, #tpu.memory_space<vmem>>, vector<1x32xf32>
    %c0_55 = arith.constant 0 : index
    %c2_56 = arith.constant 2 : index
    %107 = vector.load %arg12[%c0_55, %c2_56] : memref<32x4xf32, #tpu.memory_space<vmem>>, vector<32x1xf32>
    %c0_57 = arith.constant 0 : index
    %c3_58 = arith.constant 3 : index
    %108 = vector.load %arg12[%c0_57, %c3_58] : memref<32x4xf32, #tpu.memory_space<vmem>>, vector<16x1xf32>
    %cst_59 = arith.constant dense<0.000000e+00> : vector<16xf32>
    %109 = vector.multi_reduction <add>, %96, %cst_59 [1] : vector<16x32xf32> to vector<16xf32>
    %110 = vector.shape_cast %109 : vector<16xf32> to vector<16x1xf32>
    %cst_60 = arith.constant 3.200000e+01 : f32
    %111 = vector.broadcast %cst_60 : f32 to vector<16x1xf32>
    %112 = arith.divf %110, %111 : vector<16x1xf32>
    %113 = vector.broadcast %112 : vector<16x1xf32> to vector<16x32xf32>
    %114 = arith.subf %96, %113 : vector<16x32xf32>
    %115 = arith.mulf %114, %114 : vector<16x32xf32>
    %cst_61 = arith.constant dense<0.000000e+00> : vector<16xf32>
    %116 = vector.multi_reduction <add>, %115, %cst_61 [1] : vector<16x32xf32> to vector<16xf32>
    %117 = vector.shape_cast %116 : vector<16xf32> to vector<16x1xf32>
    %cst_62 = arith.constant 3.200000e+01 : f32
    %118 = vector.broadcast %cst_62 : f32 to vector<16x1xf32>
    %119 = arith.divf %117, %118 : vector<16x1xf32>
    %120 = vector.broadcast %112 : vector<16x1xf32> to vector<16x32xf32>
    %121 = arith.subf %96, %120 : vector<16x32xf32>
    %cst_63 = arith.constant 9.99999974E-6 : f32
    %122 = vector.broadcast %cst_63 : f32 to vector<16x1xf32>
    %123 = arith.addf %119, %122 : vector<16x1xf32>
    %124 = math.rsqrt %123 : vector<16x1xf32>
    %125 = vector.broadcast %124 : vector<16x1xf32> to vector<16x32xf32>
    %126 = arith.mulf %121, %125 : vector<16x32xf32>
    %127 = vector.broadcast %101 : vector<1x32xf32> to vector<16x32xf32>
    %128 = arith.mulf %126, %127 : vector<16x32xf32>
    %129 = vector.broadcast %102 : vector<1x32xf32> to vector<16x32xf32>
    %130 = arith.addf %128, %129 : vector<16x32xf32>
    %cst_64 = arith.constant dense<0.000000e+00> : vector<32x32xf32>
    %131 = tpu.matmul %97, %130, %cst_64 {dimension_numbers = #tpu.dot_dimension_numbers<[1], [0], [0], [1], [0, 0, 1, 1], [], []>} : vector<32x16xf32>, vector<16x32xf32>, vector<32x32xf32> -> vector<32x32xf32>
    %132 = vector.broadcast %107 : vector<32x1xf32> to vector<32x32xf32>
    %133 = arith.addf %131, %132 : vector<32x32xf32>
    %cst_65 = arith.constant 5.000000e-01 : f32
    %134 = vector.broadcast %cst_65 : f32 to vector<32x32xf32>
    %135 = arith.mulf %134, %133 : vector<32x32xf32>
    %cst_66 = arith.constant 4.471500e-02 : f32
    %136 = vector.broadcast %cst_66 : f32 to vector<32x32xf32>
    %137 = arith.mulf %136, %133 : vector<32x32xf32>
    %138 = arith.mulf %137, %133 : vector<32x32xf32>
    %139 = arith.mulf %138, %133 : vector<32x32xf32>
    %140 = arith.addf %133, %139 : vector<32x32xf32>
    %cst_67 = arith.constant 0.797884583 : f32
    %141 = vector.broadcast %cst_67 : f32 to vector<32x32xf32>
    %142 = arith.mulf %141, %140 : vector<32x32xf32>
    %143 = math.tanh %142 : vector<32x32xf32>
    %cst_68 = arith.constant 1.000000e+00 : f32
    %144 = vector.broadcast %cst_68 : f32 to vector<32x32xf32>
    %145 = arith.addf %144, %143 : vector<32x32xf32>
    %146 = arith.mulf %135, %145 : vector<32x32xf32>
    %cst_69 = arith.constant dense<0.000000e+00> : vector<16x32xf32>
    %147 = tpu.matmul %98, %146, %cst_69 {dimension_numbers = #tpu.dot_dimension_numbers<[1], [0], [0], [1], [0, 0, 1, 1], [], []>} : vector<16x32xf32>, vector<32x32xf32>, vector<16x32xf32> -> vector<16x32xf32>
    %148 = vector.broadcast %108 : vector<16x1xf32> to vector<16x32xf32>
    %149 = arith.addf %147, %148 : vector<16x32xf32>
    %150 = arith.addf %96, %149 : vector<16x32xf32>
    %cst_70 = arith.constant dense<0.000000e+00> : vector<16xf32>
    %151 = vector.multi_reduction <add>, %150, %cst_70 [1] : vector<16x32xf32> to vector<16xf32>
    %152 = vector.shape_cast %151 : vector<16xf32> to vector<16x1xf32>
    %cst_71 = arith.constant 3.200000e+01 : f32
    %153 = vector.broadcast %cst_71 : f32 to vector<16x1xf32>
    %154 = arith.divf %152, %153 : vector<16x1xf32>
    %155 = vector.broadcast %154 : vector<16x1xf32> to vector<16x32xf32>
    %156 = arith.subf %150, %155 : vector<16x32xf32>
    %157 = arith.mulf %156, %156 : vector<16x32xf32>
    %cst_72 = arith.constant dense<0.000000e+00> : vector<16xf32>
    %158 = vector.multi_reduction <add>, %157, %cst_72 [1] : vector<16x32xf32> to vector<16xf32>
    %159 = vector.shape_cast %158 : vector<16xf32> to vector<16x1xf32>
    %cst_73 = arith.constant 3.200000e+01 : f32
    %160 = vector.broadcast %cst_73 : f32 to vector<16x1xf32>
    %161 = arith.divf %159, %160 : vector<16x1xf32>
    %162 = vector.broadcast %154 : vector<16x1xf32> to vector<16x32xf32>
    %163 = arith.subf %150, %162 : vector<16x32xf32>
    %cst_74 = arith.constant 9.99999974E-6 : f32
    %164 = vector.broadcast %cst_74 : f32 to vector<16x1xf32>
    %165 = arith.addf %161, %164 : vector<16x1xf32>
    %166 = math.rsqrt %165 : vector<16x1xf32>
    %167 = vector.broadcast %166 : vector<16x1xf32> to vector<16x32xf32>
    %168 = arith.mulf %163, %167 : vector<16x32xf32>
    %169 = vector.broadcast %103 : vector<1x32xf32> to vector<16x32xf32>
    %170 = arith.mulf %168, %169 : vector<16x32xf32>
    %171 = vector.broadcast %104 : vector<1x32xf32> to vector<16x32xf32>
    %172 = arith.addf %170, %171 : vector<16x32xf32>
    %cst_75 = arith.constant dense<0.000000e+00> : vector<16x64xf32>
    %173 = tpu.matmul %172, %99, %cst_75 {dimension_numbers = #tpu.dot_dimension_numbers<[1], [0], [0], [1], [0, 0, 1, 1], [], []>} : vector<16x32xf32>, vector<32x64xf32>, vector<16x64xf32> -> vector<16x64xf32>
    %174 = vector.broadcast %105 : vector<1x64xf32> to vector<16x64xf32>
    %175 = arith.addf %173, %174 : vector<16x64xf32>
    %cst_76 = arith.constant 5.000000e-01 : f32
    %176 = vector.broadcast %cst_76 : f32 to vector<16x64xf32>
    %177 = arith.mulf %176, %175 : vector<16x64xf32>
    %cst_77 = arith.constant 4.471500e-02 : f32
    %178 = vector.broadcast %cst_77 : f32 to vector<16x64xf32>
    %179 = arith.mulf %178, %175 : vector<16x64xf32>
    %180 = arith.mulf %179, %175 : vector<16x64xf32>
    %181 = arith.mulf %180, %175 : vector<16x64xf32>
    %182 = arith.addf %175, %181 : vector<16x64xf32>
    %cst_78 = arith.constant 0.797884583 : f32
    %183 = vector.broadcast %cst_78 : f32 to vector<16x64xf32>
    %184 = arith.mulf %183, %182 : vector<16x64xf32>
    %185 = math.tanh %184 : vector<16x64xf32>
    %cst_79 = arith.constant 1.000000e+00 : f32
    %186 = vector.broadcast %cst_79 : f32 to vector<16x64xf32>
    %187 = arith.addf %186, %185 : vector<16x64xf32>
    %188 = arith.mulf %177, %187 : vector<16x64xf32>
    %cst_80 = arith.constant dense<0.000000e+00> : vector<16x32xf32>
    %189 = tpu.matmul %188, %100, %cst_80 {dimension_numbers = #tpu.dot_dimension_numbers<[1], [0], [0], [1], [0, 0, 1, 1], [], []>} : vector<16x64xf32>, vector<64x32xf32>, vector<16x32xf32> -> vector<16x32xf32>
    %190 = vector.broadcast %106 : vector<1x32xf32> to vector<16x32xf32>
    %191 = arith.addf %189, %190 : vector<16x32xf32>
    %192 = arith.addf %150, %191 : vector<16x32xf32>
    %c0_81 = arith.constant 0 : index
    %c0_82 = arith.constant 0 : index
    %193 = vector.load %arg9[%c0_81, %c0_82] : memref<32x32xf32, #tpu.memory_space<vmem>>, vector<32x32xf32>
    %cst_83 = arith.constant dense<0.000000e+00> : vector<16x32xf32>
    %194 = tpu.matmul %192, %193, %cst_83 {dimension_numbers = #tpu.dot_dimension_numbers<[1], [0], [0], [1], [0, 0, 1, 1], [], []>} : vector<16x32xf32>, vector<32x32xf32>, vector<16x32xf32> -> vector<16x32xf32>
    %c12 = arith.constant 12 : index
    %c0_84 = arith.constant 0 : index
    %195 = vector.load %arg11[%c12, %c0_84] : memref<16x64xf32, #tpu.memory_space<vmem>>, vector<1x32xf32>
    %196 = vector.broadcast %195 : vector<1x32xf32> to vector<16x32xf32>
    %197 = arith.addf %194, %196 : vector<16x32xf32>
    %cst_85 = arith.constant 5.000000e-01 : f32
    %198 = vector.broadcast %cst_85 : f32 to vector<16x32xf32>
    %199 = arith.mulf %198, %197 : vector<16x32xf32>
    %cst_86 = arith.constant 4.471500e-02 : f32
    %200 = vector.broadcast %cst_86 : f32 to vector<16x32xf32>
    %201 = arith.mulf %200, %197 : vector<16x32xf32>
    %202 = arith.mulf %201, %197 : vector<16x32xf32>
    %203 = arith.mulf %202, %197 : vector<16x32xf32>
    %204 = arith.addf %197, %203 : vector<16x32xf32>
    %cst_87 = arith.constant 0.797884583 : f32
    %205 = vector.broadcast %cst_87 : f32 to vector<16x32xf32>
    %206 = arith.mulf %205, %204 : vector<16x32xf32>
    %207 = math.tanh %206 : vector<16x32xf32>
    %cst_88 = arith.constant 1.000000e+00 : f32
    %208 = vector.broadcast %cst_88 : f32 to vector<16x32xf32>
    %209 = arith.addf %208, %207 : vector<16x32xf32>
    %210 = arith.mulf %199, %209 : vector<16x32xf32>
    %c0_89 = arith.constant 0 : index
    %c0_90 = arith.constant 0 : index
    %211 = vector.load %arg10[%c0_89, %c0_90] : memref<32x48xf32, #tpu.memory_space<vmem>>, vector<32x48xf32>
    %cst_91 = arith.constant dense<0.000000e+00> : vector<16x48xf32>
    %212 = tpu.matmul %210, %211, %cst_91 {dimension_numbers = #tpu.dot_dimension_numbers<[1], [0], [0], [1], [0, 0, 1, 1], [], []>} : vector<16x32xf32>, vector<32x48xf32>, vector<16x48xf32> -> vector<16x48xf32>
    %c13 = arith.constant 13 : index
    %c0_92 = arith.constant 0 : index
    %213 = vector.load %arg11[%c13, %c0_92] : memref<16x64xf32, #tpu.memory_space<vmem>>, vector<1x48xf32>
    %214 = vector.broadcast %213 : vector<1x48xf32> to vector<16x48xf32>
    %215 = arith.addf %212, %214 : vector<16x48xf32>
    %c0_93 = arith.constant 0 : index
    %c0_94 = arith.constant 0 : index
    %216 = vector.load %arg13[%c0_93, %c0_94] : memref<16x48xf32, #tpu.memory_space<vmem>>, vector<16x48xf32>
    tpu.vector_store %arg13[%c0_93, %c0_94], %215 {strides = array<i32>} : memref<16x48xf32, #tpu.memory_space<vmem>>, vector<16x48xf32>,
    %cst_95 = arith.constant dense<0xFF800000> : vector<16xf32>
    %217 = vector.multi_reduction <maximumf>, %215, %cst_95 [1] : vector<16x48xf32> to vector<16xf32>
    %218 = vector.shape_cast %217 : vector<16xf32> to vector<16x1xf32>
    %219 = vector.broadcast %218 : vector<16x1xf32> to vector<16x48xf32>
    %220 = arith.subf %215, %219 : vector<16x48xf32>
    %221 = math.exp %220 : vector<16x48xf32>
    %cst_96 = arith.constant dense<0.000000e+00> : vector<16xf32>
    %222 = vector.multi_reduction <add>, %221, %cst_96 [1] : vector<16x48xf32> to vector<16xf32>
    %223 = vector.shape_cast %222 : vector<16xf32> to vector<16x1xf32>
    %224 = tpu.reciprocal %223 {approx = true} : vector<16x1xf32> -> vector<16x1xf32>
    %225 = vector.broadcast %224 : vector<16x1xf32> to vector<16x48xf32>
    %226 = arith.mulf %221, %225 : vector<16x48xf32>
    %c0_97 = arith.constant 0 : index
    %c0_98 = arith.constant 0 : index
    %227 = vector.load %arg14[%c0_97, %c0_98] : memref<16x48xf32, #tpu.memory_space<vmem>>, vector<16x48xf32>
    tpu.vector_store %arg14[%c0_97, %c0_98], %226 {strides = array<i32>} : memref<16x48xf32, #tpu.memory_space<vmem>>, vector<16x48xf32>,
    return
  }
}

</mosaic_0001>

<llo_original>
// kernel: cls_head_forward.2
$region0: #{cls_head_forward.2}
  #allocation0 [shape = 'u32[]', space=smem, size = 0x4, offset = 0x4, fixed_abs, tag = 'smem constant byte address 0x4 - core index']
  #allocation1 [shape = 'u32[144,128]{1,0:T(1,128)}', space=vmem, size = 0x12000, scoped, tag = 'internal scratch']
  %s0 = inlined_call_operand.vmem [shape: f32[2,512], index: 0, kind: input, shape index: {}]
  %s1 = inlined_call_operand.vmem [shape: bf16[512,256], index: 1, kind: input, shape index: {}]
  %s2 = inlined_call_operand.hbm [shape: bf16[256,256], index: 2, kind: input, shape index: {}]
  %s3 = inlined_call_operand.hbm [shape: bf16[256,256], index: 3, kind: input, shape index: {}]
  %s4 = inlined_call_operand.hbm [shape: bf16[256,256], index: 4, kind: input, shape index: {}]
  %s5 = inlined_call_operand.vmem [shape: f32[8,256], index: 5, kind: input, shape index: {}]
  %s6 = inlined_call_operand.vmem [shape: f32[2,256], index: 6, kind: output, shape index: {}]
  %s7 = sld [smem:[#allocation0]]
  $region46: #{cls_head_forward.2} parent=0
    _
  %s9 = ssub.s32 1, %s7
  %s10 = scalar_select 0, %s9, %s7
  $region1: #{cls_head_forward.2} parent=0
    #allocation2 [shape = 'u8[131072]{0}', space=vmem, size = 0x20000, scoped, tag = 'input window, operand 2, single buffered']
    #allocation3 [shape = 's32[1]{0}', space=sflag, size = 0x4, scoped, tag = 'scoped memory for cls_head_forward.2']
    #allocation4 [shape = 'u8[131072]{0}', space=vmem, size = 0x20000, scoped, tag = 'input window, operand 3, single buffered']
    #allocation5 [shape = 's32[1]{0}', space=sflag, size = 0x4, scoped, tag = 'scoped memory for cls_head_forward.2']
    #allocation6 [shape = 'u8[131072]{0}', space=vmem, size = 0x20000, scoped, tag = 'input window, operand 4, single buffered']
    %11 = vsyncpa [#allocation3], 0
    %12 = vsyncpa [#allocation5], 0
    // Predicated region
    $region2: #{cls_head_forward.2} parent=1 // pred_check
      _
    $region3: #{cls_head_forward.2} parent=1 // pred_check_branch
      %14 = sbr.rel (0) target = $region5
    $region4: #{cls_head_forward.2} parent=1 // pred_region
      _
    $region5: #{cls_head_forward.2} parent=1 // pred_fallthru
      _
    // Predicated region
    $region6: #{cls_head_forward.2} parent=1 // pred_check
      _
    $region7: #{cls_head_forward.2} parent=1 // pred_check_branch
      %16 = sbr.rel (0) target = $region9
    $region8: #{cls_head_forward.2} parent=1 // pred_region
      _
    $region9: #{cls_head_forward.2} parent=1 // pred_fallthru
      _
    // Predicated region
    $region10: #{cls_head_forward.2} parent=1 // pred_check
      _
    $region11: #{cls_head_forward.2} parent=1 // pred_check_branch
      %18 = sbr.rel (0) target = $region13
    $region12: #{cls_head_forward.2} parent=1 // pred_region
      %s20 = ssub.s32 4096, 4096
      %21 = vsyncadd [#allocation3], %s20
      %s22 = sshll.u32 [#allocation2], 4
      %s23 = int_to_ptr.vmem [resolvable:$true] %s22
      %28 = dma.hbm_to_vmem [thread:$0]  %s2, 4096, %s23, [#allocation3], 128, 128, 8
    $region13: #{cls_head_forward.2} parent=1 // pred_fallthru
      _
    // Predicated region
    $region14: #{cls_head_forward.2} parent=1 // pred_check
      _
    $region15: #{cls_head_forward.2} parent=1 // pred_check_branch
      %30 = sbr.rel (0) target = $region17
    $region16: #{cls_head_forward.2} parent=1 // pred_region
      %s32 = ssub.s32 4096, 4096
      %33 = vsyncadd [#allocation5], %s32
      %s34 = sshll.u32 [#allocation4], 4
      %s35 = int_to_ptr.vmem [resolvable:$true] %s34
      %40 = dma.hbm_to_vmem [thread:$0]  %s3, 4096, %s35, [#allocation5], 128, 128, 8
    $region17: #{cls_head_forward.2} parent=1 // pred_fallthru
      _
    // Predicated region
    $region18: #{cls_head_forward.2} parent=1 // pred_check
      _
    $region19: #{cls_head_forward.2} parent=1 // pred_check_branch
      %42 = sbr.rel (0) target = $region21
    $region20: #{cls_head_forward.2} parent=1 // pred_region
      %s44 = ssub.s32 4096, 4096
      %45 = vsyncadd [#allocation5], %s44
      %s46 = sshll.u32 [#allocation6], 4
      %s47 = int_to_ptr.vmem [resolvable:$true] %s46
      %52 = dma.hbm_to_vmem [thread:$0]  %s4, 4096, %s47, [#allocation5], 128, 128, 8
    $region21: #{cls_head_forward.2} parent=1 // pred_fallthru
      _
    // Predicated region
    $region22: #{cls_head_forward.2} parent=1 // pred_check
      _
    $region23: #{cls_head_forward.2} parent=1 // pred_check_branch
      %54 = sbr.rel (0) target = $region25
    $region24: #{cls_head_forward.2} parent=1 // pred_region
      _
    $region25: #{cls_head_forward.2} parent=1 // pred_fallthru
      _
    // Predicated region
    $region26: #{cls_head_forward.2} parent=1 // pred_check
      _
    $region27: #{cls_head_forward.2} parent=1 // pred_check_branch
      %56 = sbr.rel (0) target = $region29
    $region28: #{cls_head_forward.2} parent=1 // pred_region
      %57 = dma.done [#allocation3], 4096
    $region29: #{cls_head_forward.2} parent=1 // pred_fallthru
      _
    // Predicated region
    $region30: #{cls_head_forward.2} parent=1 // pred_check
      _
    $region31: #{cls_head_forward.2} parent=1 // pred_check_branch
      %59 = sbr.rel (0) target = $region33
    $region32: #{cls_head_forward.2} parent=1 // pred_region
      %60 = dma.done [#allocation5], 4096
    $region33: #{cls_head_forward.2} parent=1 // pred_fallthru
      _
    // Predicated region
    $region34: #{cls_head_forward.2} parent=1 // pred_check
      _
    $region35: #{cls_head_forward.2} parent=1 // pred_check_branch
      %62 = sbr.rel (0) target = $region37
    $region36: #{cls_head_forward.2} parent=1 // pred_region
      %63 = dma.done [#allocation5], 4096
    $region37: #{cls_head_forward.2} parent=1 // pred_fallthru
      _
    %v64 = vld [vmem:[%s0] sm:$0xff]
    %v66 = vcombine.high %v64, %v64
    %v68 = vunpack.c.l.s4 1983009808
    %v69 = vunpack.c.0.s8 %v68
    %v70 = vlaneseq
    %v71 = vshrl.u32 %v70, 7
    %v72 = vsub.s32 %v69, %v71
    %v73 = vrot.slane %v64, %v72
    %v75 = vunpack.c.l.s4 1983009808
    %v76 = vunpack.c.0.s8 %v75
    %v77 = vlaneseq
    %v78 = vshrl.u32 %v77, 7
    %v79 = vsub.s32 %v76, %v78
    %v80 = vrot.slane %v66, %v79
    %v81 = vcombine.high %v73, %v73
    %v82 = vcombine.high %v80, %v80
    %v87 = vpack.c.bf16 %v73, %v73
    %v88 = vpack.c.bf16 %v81, %v81
    %v89 = vpack.c.bf16 %v80, %v80
    %v90 = vpack.c.bf16 %v82, %v82
    %v91 = vld [vmem:[%s1] sm:$0xff]
    %v92 = vld [vmem:[%s1 + $0x8] sm:$0xff]
    %v93 = vld [vmem:[%s1 + $0x10] sm:$0xff]
    %v94 = vld [vmem:[%s1 + $0x18] sm:$0xff]
    %v95 = vld [vmem:[%s1 + $0x20] sm:$0xff]
    %v96 = vld [vmem:[%s1 + $0x28] sm:$0xff]
    %v97 = vld [vmem:[%s1 + $0x30] sm:$0xff]
    %v98 = vld [vmem:[%s1 + $0x38] sm:$0xff]
    %v99 = vld [vmem:[%s1 + $0x40] sm:$0xff]
    %v100 = vld [vmem:[%s1 + $0x48] sm:$0xff]
    %v101 = vld [vmem:[%s1 + $0x50] sm:$0xff]
    %v102 = vld [vmem:[%s1 + $0x58] sm:$0xff]
    %v103 = vld [vmem:[%s1 + $0x60] sm:$0xff]
    %v104 = vld [vmem:[%s1 + $0x68] sm:$0xff]
    %v105 = vld [vmem:[%s1 + $0x70] sm:$0xff]
    %v106 = vld [vmem:[%s1 + $0x78] sm:$0xff]
    %v107 = vld [vmem:[%s1 + $0x80] sm:$0xff]
    %v108 = vld [vmem:[%s1 + $0x88] sm:$0xff]
    %v109 = vld [vmem:[%s1 + $0x90] sm:$0xff]
    %v110 = vld [vmem:[%s1 + $0x98] sm:$0xff]
    %v111 = vld [vmem:[%s1 + $0xa0] sm:$0xff]
    %v112 = vld [vmem:[%s1 + $0xa8] sm:$0xff]
    %v113 = vld [vmem:[%s1 + $0xb0] sm:$0xff]
    %v114 = vld [vmem:[%s1 + $0xb8] sm:$0xff]
    %v115 = vld [vmem:[%s1 + $0xc0] sm:$0xff]
    %v116 = vld [vmem:[%s1 + $0xc8] sm:$0xff]
    %v117 = vld [vmem:[%s1 + $0xd0] sm:$0xff]
    %v118 = vld [vmem:[%s1 + $0xd8] sm:$0xff]
    %v119 = vld [vmem:[%s1 + $0xe0] sm:$0xff]
    %v120 = vld [vmem:[%s1 + $0xe8] sm:$0xff]
    %v121 = vld [vmem:[%s1 + $0xf0] sm:$0xff]
    %v122 = vld [vmem:[%s1 + $0xf8] sm:$0xff]
    %v123 = vld [vmem:[%s1 + $0x100] sm:$0xff]
    %v124 = vld [vmem:[%s1 + $0x108] sm:$0xff]
    %v125 = vld [vmem:[%s1 + $0x110] sm:$0xff]
    %v126 = vld [vmem:[%s1 + $0x118] sm:$0xff]
    %v127 = vld [vmem:[%s1 + $0x120] sm:$0xff]
    %v128 = vld [vmem:[%s1 + $0x128] sm:$0xff]
    %v129 = vld [vmem:[%s1 + $0x130] sm:$0xff]
    %v130 = vld [vmem:[%s1 + $0x138] sm:$0xff]
    %v131 = vld [vmem:[%s1 + $0x140] sm:$0xff]
    %v132 = vld [vmem:[%s1 + $0x148] sm:$0xff]
    %v133 = vld [vmem:[%s1 + $0x150] sm:$0xff]
    %v134 = vld [vmem:[%s1 + $0x158] sm:$0xff]
    %v135 = vld [vmem:[%s1 + $0x160] sm:$0xff]
    %v136 = vld [vmem:[%s1 + $0x168] sm:$0xff]
    %v137 = vld [vmem:[%s1 + $0x170] sm:$0xff]
    %v138 = vld [vmem:[%s1 + $0x178] sm:$0xff]
    %v139 = vld [vmem:[%s1 + $0x180] sm:$0xff]
    %v140 = vld [vmem:[%s1 + $0x188] sm:$0xff]
    %v141 = vld [vmem:[%s1 + $0x190] sm:$0xff]
    %v142 = vld [vmem:[%s1 + $0x198] sm:$0xff]
    %v143 = vld [vmem:[%s1 + $0x1a0] sm:$0xff]
    %v144 = vld [vmem:[%s1 + $0x1a8] sm:$0xff]
    %v145 = vld [vmem:[%s1 + $0x1b0] sm:$0xff]
    %v146 = vld [vmem:[%s1 + $0x1b8] sm:$0xff]
    %v147 = vld [vmem:[%s1 + $0x1c0] sm:$0xff]
    %v148 = vld [vmem:[%s1 + $0x1c8] sm:$0xff]
    %v149 = vld [vmem:[%s1 + $0x1d0] sm:$0xff]
    %v150 = vld [vmem:[%s1 + $0x1d8] sm:$0xff]
    %v151 = vld [vmem:[%s1 + $0x1e0] sm:$0xff]
    %v152 = vld [vmem:[%s1 + $0x1e8] sm:$0xff]
    %v153 = vld [vmem:[%s1 + $0x1f0] sm:$0xff]
    %v154 = vld [vmem:[%s1 + $0x1f8] sm:$0xff]
    %v219 = vunpack.c.l.b16 %v91
    %v220 = vunpack.c.h.b16 %v91
    %v221 = vunpack.c.l.b16 %v92
    %v222 = vunpack.c.h.b16 %v92
    %v223 = vunpack.c.l.b16 %v93
    %v224 = vunpack.c.h.b16 %v93
    %v225 = vunpack.c.l.b16 %v94
    %v226 = vunpack.c.h.b16 %v94
    %v227 = vunpack.c.l.b16 %v95
    %v228 = vunpack.c.h.b16 %v95
    %v229 = vunpack.c.l.b16 %v96
    %v230 = vunpack.c.h.b16 %v96
    %v231 = vunpack.c.l.b16 %v97
    %v232 = vunpack.c.h.b16 %v97
    %v233 = vunpack.c.l.b16 %v98
    %v234 = vunpack.c.h.b16 %v98
    %v235 = vunpack.c.l.b16 %v99
    %v236 = vunpack.c.h.b16 %v99
    %v237 = vunpack.c.l.b16 %v100
    %v238 = vunpack.c.h.b16 %v100
    %v239 = vunpack.c.l.b16 %v101
    %v240 = vunpack.c.h.b16 %v101
    %v241 = vunpack.c.l.b16 %v102
    %v242 = vunpack.c.h.b16 %v102
    %v243 = vunpack.c.l.b16 %v103
    %v244 = vunpack.c.h.b16 %v103
    %v245 = vunpack.c.l.b16 %v104
    %v246 = vunpack.c.h.b16 %v104
    %v247 = vunpack.c.l.b16 %v105
    %v248 = vunpack.c.h.b16 %v105
    %v249 = vunpack.c.l.b16 %v106
    %v250 = vunpack.c.h.b16 %v106
    %v251 = vunpack.c.l.b16 %v107
    %v252 = vunpack.c.h.b16 %v107
    %v253 = vunpack.c.l.b16 %v108
    %v254 = vunpack.c.h.b16 %v108
    %v255 = vunpack.c.l.b16 %v109
    %v256 = vunpack.c.h.b16 %v109
    %v257 = vunpack.c.l.b16 %v110
    %v258 = vunpack.c.h.b16 %v110
    %v259 = vunpack.c.l.b16 %v111
    %v260 = vunpack.c.h.b16 %v111
    %v261 = vunpack.c.l.b16 %v112
    %v262 = vunpack.c.h.b16 %v112
    %v263 = vunpack.c.l.b16 %v113
    %v264 = vunpack.c.h.b16 %v113
    %v265 = vunpack.c.l.b16 %v114
    %v266 = vunpack.c.h.b16 %v114
    %v267 = vunpack.c.l.b16 %v115
    %v268 = vunpack.c.h.b16 %v115
    %v269 = vunpack.c.l.b16 %v116
    %v270 = vunpack.c.h.b16 %v116
    %v271 = vunpack.c.l.b16 %v117
    %v272 = vunpack.c.h.b16 %v117
    %v273 = vunpack.c.l.b16 %v118
    %v274 = vunpack.c.h.b16 %v118
    %v275 = vunpack.c.l.b16 %v119
    %v276 = vunpack.c.h.b16 %v119
    %v277 = vunpack.c.l.b16 %v120
    %v278 = vunpack.c.h.b16 %v120
    %v279 = vunpack.c.l.b16 %v121
    %v280 = vunpack.c.h.b16 %v121
    %v281 = vunpack.c.l.b16 %v122
    %v282 = vunpack.c.h.b16 %v122
    %v283 = vunpack.c.l.b16 %v123
    %v284 = vunpack.c.h.b16 %v123
    %v285 = vunpack.c.l.b16 %v124
    %v286 = vunpack.c.h.b16 %v124
    %v287 = vunpack.c.l.b16 %v125
    %v288 = vunpack.c.h.b16 %v125
    %v289 = vunpack.c.l.b16 %v126
    %v290 = vunpack.c.h.b16 %v126
    %v291 = vunpack.c.l.b16 %v127
    %v292 = vunpack.c.h.b16 %v127
    %v293 = vunpack.c.l.b16 %v128
    %v294 = vunpack.c.h.b16 %v128
    %v295 = vunpack.c.l.b16 %v129
    %v296 = vunpack.c.h.b16 %v129
    %v297 = vunpack.c.l.b16 %v130
    %v298 = vunpack.c.h.b16 %v130
    %v299 = vunpack.c.l.b16 %v131
    %v300 = vunpack.c.h.b16 %v131
    %v301 = vunpack.c.l.b16 %v132
    %v302 = vunpack.c.h.b16 %v132
    %v303 = vunpack.c.l.b16 %v133
    %v304 = vunpack.c.h.b16 %v133
    %v305 = vunpack.c.l.b16 %v134
    %v306 = vunpack.c.h.b16 %v134
    %v307 = vunpack.c.l.b16 %v135
    %v308 = vunpack.c.h.b16 %v135
    %v309 = vunpack.c.l.b16 %v136
    %v310 = vunpack.c.h.b16 %v136
    %v311 = vunpack.c.l.b16 %v137
    %v312 = vunpack.c.h.b16 %v137
    %v313 = vunpack.c.l.b16 %v138
    %v314 = vunpack.c.h.b16 %v138
    %v315 = vunpack.c.l.b16 %v139
    %v316 = vunpack.c.h.b16 %v139
    %v317 = vunpack.c.l.b16 %v140
    %v318 = vunpack.c.h.b16 %v140
    %v319 = vunpack.c.l.b16 %v141
    %v320 = vunpack.c.h.b16 %v141
    %v321 = vunpack.c.l.b16 %v142
    %v322 = vunpack.c.h.b16 %v142
    %v323 = vunpack.c.l.b16 %v143
    %v324 = vunpack.c.h.b16 %v143
    %v325 = vunpack.c.l.b16 %v144
    %v326 = vunpack.c.h.b16 %v144
    %v327 = vunpack.c.l.b16 %v145
    %v328 = vunpack.c.h.b16 %v145
    %v329 = vunpack.c.l.b16 %v146
    %v330 = vunpack.c.h.b16 %v146
    %v331 = vunpack.c.l.b16 %v147
    %v332 = vunpack.c.h.b16 %v147
    %v333 = vunpack.c.l.b16 %v148
    %v334 = vunpack.c.h.b16 %v148
    %v335 = vunpack.c.l.b16 %v149
    %v336 = vunpack.c.h.b16 %v149
    %v337 = vunpack.c.l.b16 %v150
    %v338 = vunpack.c.h.b16 %v150
    %v339 = vunpack.c.l.b16 %v151
    %v340 = vunpack.c.h.b16 %v151
    %v341 = vunpack.c.l.b16 %v152
    %v342 = vunpack.c.h.b16 %v152
    %v343 = vunpack.c.l.b16 %v153
    %v344 = vunpack.c.h.b16 %v153
    %v345 = vunpack.c.l.b16 %v154
    %v346 = vunpack.c.h.b16 %v154
    %v347 = vpack.c.b16 %v221, %v219
    %v348 = vpack.c.b16 %v222, %v220
    %v349 = vpack.c.b16 %v225, %v223
    %v350 = vpack.c.b16 %v226, %v224
    %v351 = vpack.c.b16 %v229, %v227
    %v352 = vpack.c.b16 %v230, %v228
    %v353 = vpack.c.b16 %v233, %v231
    %v354 = vpack.c.b16 %v234, %v232
    %v355 = vpack.c.b16 %v237, %v235
    %v356 = vpack.c.b16 %v238, %v236
    %v357 = vpack.c.b16 %v241, %v239
    %v358 = vpack.c.b16 %v242, %v240
    %v359 = vpack.c.b16 %v245, %v243
    %v360 = vpack.c.b16 %v246, %v244
    %v361 = vpack.c.b16 %v249, %v247
    %v362 = vpack.c.b16 %v250, %v248
    %v363 = vpack.c.b16 %v253, %v251
    %v364 = vpack.c.b16 %v254, %v252
    %v365 = vpack.c.b16 %v257, %v255
    %v366 = vpack.c.b16 %v258, %v256
    %v367 = vpack.c.b16 %v261, %v259
    %v368 = vpack.c.b16 %v262, %v260
    %v369 = vpack.c.b16 %v265, %v263
    %v370 = vpack.c.b16 %v266, %v264
    %v371 = vpack.c.b16 %v269, %v267
    %v372 = vpack.c.b16 %v270, %v268
    %v373 = vpack.c.b16 %v273, %v271
    %v374 = vpack.c.b16 %v274, %v272
    %v375 = vpack.c.b16 %v277, %v275
    %v376 = vpack.c.b16 %v278, %v276
    %v377 = vpack.c.b16 %v281, %v279
    %v378 = vpack.c.b16 %v282, %v280
    %v379 = vpack.c.b16 %v285, %v283
    %v380 = vpack.c.b16 %v286, %v284
    %v381 = vpack.c.b16 %v289, %v287
    %v382 = vpack.c.b16 %v290, %v288
    %v383 = vpack.c.b16 %v293, %v291
    %v384 = vpack.c.b16 %v294, %v292
    %v385 = vpack.c.b16 %v297, %v295
    %v386 = vpack.c.b16 %v298, %v296
    %v387 = vpack.c.b16 %v301, %v299
    %v388 = vpack.c.b16 %v302, %v300
    %v389 = vpack.c.b16 %v305, %v303
    %v390 = vpack.c.b16 %v306, %v304
    %v391 = vpack.c.b16 %v309, %v307
    %v392 = vpack.c.b16 %v310, %v308
    %v393 = vpack.c.b16 %v313, %v311
    %v394 = vpack.c.b16 %v314, %v312
    %v395 = vpack.c.b16 %v317, %v315
    %v396 = vpack.c.b16 %v318, %v316
    %v397 = vpack.c.b16 %v321, %v319
    %v398 = vpack.c.b16 %v322, %v320
    %v399 = vpack.c.b16 %v325, %v323
    %v400 = vpack.c.b16 %v326, %v324
    %v401 = vpack.c.b16 %v329, %v327
    %v402 = vpack.c.b16 %v330, %v328
    %v403 = vpack.c.b16 %v333, %v331
    %v404 = vpack.c.b16 %v334, %v332
    %v405 = vpack.c.b16 %v337, %v335
    %v406 = vpack.c.b16 %v338, %v336
    %v407 = vpack.c.b16 %v341, %v339
    %v408 = vpack.c.b16 %v342, %v340
    %v409 = vpack.c.b16 %v345, %v343
    %v410 = vpack.c.b16 %v346, %v344
    %475 = vmatprep.subr.bf16.mxu0 %v348
    %476 = vmatpush1.bf16.msra.mxu0 %v347
    %477 = vmatprep.subr.bf16.mxu0 %v350
    %478 = vmatpush1.bf16.msra.mxu0 %v349
    %479 = vmatprep.subr.bf16.mxu0 %v352
    %480 = vmatpush1.bf16.msra.mxu0 %v351
    %481 = vmatprep.subr.bf16.mxu0 %v354
    %482 = vmatpush1.bf16.msra.mxu0 %v353
    %483 = vmatprep.subr.bf16.mxu0 %v356
    %484 = vmatpush1.bf16.msra.mxu0 %v355
    %485 = vmatprep.subr.bf16.mxu0 %v358
    %486 = vmatpush1.bf16.msra.mxu0 %v357
    %487 = vmatprep.subr.bf16.mxu0 %v360
    %488 = vmatpush1.bf16.msra.mxu0 %v359
    %489 = vmatprep.subr.bf16.mxu0 %v362
    %490 = vmatpush1.bf16.msra.mxu0 %v361
    %491 = vmatprep.subr.bf16.mxu0 %v364
    %492 = vmatpush1.bf16.msra.mxu0 %v363
    %493 = vmatprep.subr.bf16.mxu0 %v366
    %494 = vmatpush1.bf16.msra.mxu0 %v365
    %495 = vmatprep.subr.bf16.mxu0 %v368
    %496 = vmatpush1.bf16.msra.mxu0 %v367
    %497 = vmatprep.subr.bf16.mxu0 %v370
    %498 = vmatpush1.bf16.msra.mxu0 %v369
    %499 = vmatprep.subr.bf16.mxu0 %v372
    %500 = vmatpush1.bf16.msra.mxu0 %v371
    %501 = vmatprep.subr.bf16.mxu0 %v374
    %502 = vmatpush1.bf16.msra.mxu0 %v373
    %503 = vmatprep.subr.bf16.mxu0 %v376
    %504 = vmatpush1.bf16.msra.mxu0 %v375
    %505 = vmatprep.subr.bf16.mxu0 %v378
    %506 = vmatpush1.bf16.msra.mxu0 %v377
    %507 = vmatprep.mubr.bf16.mxu0 %v88
    %508 = vmatmul.mubr.bf16.gmra.mrb[0].mxu0 %v87
    %v509 = vpop.f32.mrb[0].mxu0
    %v510 = vadd.f32 0.0, %v509
    %v511 = vpop.f32.mrb[0].mxu0
    %v512 = vadd.f32 0.0, %v511
    %v513 = vpop.f32.mrb[0].mxu0
    %v514 = vpop.f32.mrb[0].mxu0
    %515 = vdwg.mxu0
    %516 = vmatprep.subr.bf16.mxu0 %v380
    %517 = vmatpush1.bf16.msra.mxu0 %v379
    %518 = vmatprep.subr.bf16.mxu0 %v382
    %519 = vmatpush1.bf16.msra.mxu0 %v381
    %520 = vmatprep.subr.bf16.mxu0 %v384
    %521 = vmatpush1.bf16.msra.mxu0 %v383
    %522 = vmatprep.subr.bf16.mxu0 %v386
    %523 = vmatpush1.bf16.msra.mxu0 %v385
    %524 = vmatprep.subr.bf16.mxu0 %v388
    %525 = vmatpush1.bf16.msra.mxu0 %v387
    %526 = vmatprep.subr.bf16.mxu0 %v390
    %527 = vmatpush1.bf16.msra.mxu0 %v389
    %528 = vmatprep.subr.bf16.mxu0 %v392
    %529 = vmatpush1.bf16.msra.mxu0 %v391
    %530 = vmatprep.subr.bf16.mxu0 %v394
    %531 = vmatpush1.bf16.msra.mxu0 %v393
    %532 = vmatprep.subr.bf16.mxu0 %v396
    %533 = vmatpush1.bf16.msra.mxu0 %v395
    %534 = vmatprep.subr.bf16.mxu0 %v398
    %535 = vmatpush1.bf16.msra.mxu0 %v397
    %536 = vmatprep.subr.bf16.mxu0 %v400
    %537 = vmatpush1.bf16.msra.mxu0 %v399
    %538 = vmatprep.subr.bf16.mxu0 %v402
    %539 = vmatpush1.bf16.msra.mxu0 %v401
    %540 = vmatprep.subr.bf16.mxu0 %v404
    %541 = vmatpush1.bf16.msra.mxu0 %v403
    %542 = vmatprep.subr.bf16.mxu0 %v406
    %543 = vmatpush1.bf16.msra.mxu0 %v405
    %544 = vmatprep.subr.bf16.mxu0 %v408
    %545 = vmatpush1.bf16.msra.mxu0 %v407
    %546 = vmatprep.subr.bf16.mxu0 %v410
    %547 = vmatpush1.bf16.msra.mxu0 %v409
    %548 = vmatprep.mubr.bf16.mxu0 %v90
    %549 = vmatmul.mubr.bf16.gmra.mrb[0].mxu0 %v89
    %v550 = vpop.f32.mrb[0].mxu0
    %v551 = vadd.f32 %v510, %v550
    %v552 = vpop.f32.mrb[0].mxu0
    %v553 = vadd.f32 %v512, %v552
    %v554 = vpop.f32.mrb[0].mxu0
    %v555 = vpop.f32.mrb[0].mxu0
    %556 = vdwg.mxu0
    %v557 = vld [vmem:[%s5] ss:$8 sm:$0x3]
    %v559 = vlaneseq
    %v560 = vshrl.u32 %v559, 7
    %v561 = vsub.s32 0, %v560
    %v562 = vrot.slane %v557, %v561
    %v563 = vlaneseq
    %v564 = vshrl.u32 %v563, 7
    %v565 = vsub.s32 1, %v564
    %v566 = vrot.slane %v557, %v565
    %v569 = vmul.f32 %v551, %v562
    %v570 = vmul.f32 %v553, %v566
    %s571 = scalar_lea.vmem %s5, 1
    %v572 = vld [vmem:[%s571] ss:$8 sm:$0x3]
    %v574 = vlaneseq
    %v575 = vshrl.u32 %v574, 7
    %v576 = vsub.s32 0, %v575
    %v577 = vrot.slane %v572, %v576
    %v578 = vlaneseq
    %v579 = vshrl.u32 %v578, 7
    %v580 = vsub.s32 1, %v579
    %v581 = vrot.slane %v572, %v580
    %v584 = vadd.f32 %v569, %v577
    %v585 = vadd.f32 %v570, %v581
    %v586 = vmax.f32 %v584, 0.0
    %v587 = vmax.f32 %v585, 0.0
    %v588 = vpack.c.bf16 %v586, %v586
    %v589 = vpack.c.bf16 %v587, %v587
    %v590 = vld [vmem:[#allocation2] sm:$0xff]
    %v591 = vld [vmem:[#allocation2 + $0x8] sm:$0xff]
    %v592 = vld [vmem:[#allocation2 + $0x10] sm:$0xff]
    %v593 = vld [vmem:[#allocation2 + $0x18] sm:$0xff]
    %v594 = vld [vmem:[#allocation2 + $0x20] sm:$0xff]
    %v595 = vld [vmem:[#allocation2 + $0x28] sm:$0xff]
    %v596 = vld [vmem:[#allocation2 + $0x30] sm:$0xff]
    %v597 = vld [vmem:[#allocation2 + $0x38] sm:$0xff]
    %v598 = vld [vmem:[#allocation2 + $0x40] sm:$0xff]
    %v599 = vld [vmem:[#allocation2 + $0x48] sm:$0xff]
    %v600 = vld [vmem:[#allocation2 + $0x50] sm:$0xff]
    %v601 = vld [vmem:[#allocation2 + $0x58] sm:$0xff]
    %v602 = vld [vmem:[#allocation2 + $0x60] sm:$0xff]
    %v603 = vld [vmem:[#allocation2 + $0x68] sm:$0xff]
    %v604 = vld [vmem:[#allocation2 + $0x70] sm:$0xff]
    %v605 = vld [vmem:[#allocation2 + $0x78] sm:$0xff]
    %v606 = vld [vmem:[#allocation2 + $0x80] sm:$0xff]
    %v607 = vld [vmem:[#allocation2 + $0x88] sm:$0xff]
    %v608 = vld [vmem:[#allocation2 + $0x90] sm:$0xff]
    %v609 = vld [vmem:[#allocation2 + $0x98] sm:$0xff]
    %v610 = vld [vmem:[#allocation2 + $0xa0] sm:$0xff]
    %v611 = vld [vmem:[#allocation2 + $0xa8] sm:$0xff]
    %v612 = vld [vmem:[#allocation2 + $0xb0] sm:$0xff]
    %v613 = vld [vmem:[#allocation2 + $0xb8] sm:$0xff]
    %v614 = vld [vmem:[#allocation2 + $0xc0] sm:$0xff]
    %v615 = vld [vmem:[#allocation2 + $0xc8] sm:$0xff]
    %v616 = vld [vmem:[#allocation2 + $0xd0] sm:$0xff]
    %v617 = vld [vmem:[#allocation2 + $0xd8] sm:$0xff]
    %v618 = vld [vmem:[#allocation2 + $0xe0] sm:$0xff]
    %v619 = vld [vmem:[#allocation2 + $0xe8] sm:$0xff]
    %v620 = vld [vmem:[#allocation2 + $0xf0] sm:$0xff]
    %v621 = vld [vmem:[#allocation2 + $0xf8] sm:$0xff]
    %v654 = vunpack.c.l.b16 %v590
    %v655 = vunpack.c.h.b16 %v590
    %v656 = vunpack.c.l.b16 %v591
    %v657 = vunpack.c.h.b16 %v591
    %v658 = vunpack.c.l.b16 %v592
    %v659 = vunpack.c.h.b16 %v592
    %v660 = vunpack.c.l.b16 %v593
    %v661 = vunpack.c.h.b16 %v593
    %v662 = vunpack.c.l.b16 %v594
    %v663 = vunpack.c.h.b16 %v594
    %v664 = vunpack.c.l.b16 %v595
    %v665 = vunpack.c.h.b16 %v595
    %v666 = vunpack.c.l.b16 %v596
    %v667 = vunpack.c.h.b16 %v596
    %v668 = vunpack.c.l.b16 %v597
    %v669 = vunpack.c.h.b16 %v597
    %v670 = vunpack.c.l.b16 %v598
    %v671 = vunpack.c.h.b16 %v598
    %v672 = vunpack.c.l.b16 %v599
    %v673 = vunpack.c.h.b16 %v599
    %v674 = vunpack.c.l.b16 %v600
    %v675 = vunpack.c.h.b16 %v600
    %v676 = vunpack.c.l.b16 %v601
    %v677 = vunpack.c.h.b16 %v601
    %v678 = vunpack.c.l.b16 %v602
    %v679 = vunpack.c.h.b16 %v602
    %v680 = vunpack.c.l.b16 %v603
    %v681 = vunpack.c.h.b16 %v603
    %v682 = vunpack.c.l.b16 %v604
    %v683 = vunpack.c.h.b16 %v604
    %v684 = vunpack.c.l.b16 %v605
    %v685 = vunpack.c.h.b16 %v605
    %v686 = vunpack.c.l.b16 %v606
    %v687 = vunpack.c.h.b16 %v606
    %v688 = vunpack.c.l.b16 %v607
    %v689 = vunpack.c.h.b16 %v607
    %v690 = vunpack.c.l.b16 %v608
    %v691 = vunpack.c.h.b16 %v608
    %v692 = vunpack.c.l.b16 %v609
    %v693 = vunpack.c.h.b16 %v609
    %v694 = vunpack.c.l.b16 %v610
    %v695 = vunpack.c.h.b16 %v610
    %v696 = vunpack.c.l.b16 %v611
    %v697 = vunpack.c.h.b16 %v611
    %v698 = vunpack.c.l.b16 %v612
    %v699 = vunpack.c.h.b16 %v612
    %v700 = vunpack.c.l.b16 %v613
    %v701 = vunpack.c.h.b16 %v613
    %v702 = vunpack.c.l.b16 %v614
    %v703 = vunpack.c.h.b16 %v614
    %v704 = vunpack.c.l.b16 %v615
    %v705 = vunpack.c.h.b16 %v615
    %v706 = vunpack.c.l.b16 %v616
    %v707 = vunpack.c.h.b16 %v616
    %v708 = vunpack.c.l.b16 %v617
    %v709 = vunpack.c.h.b16 %v617
    %v710 = vunpack.c.l.b16 %v618
    %v711 = vunpack.c.h.b16 %v618
    %v712 = vunpack.c.l.b16 %v619
    %v713 = vunpack.c.h.b16 %v619
    %v714 = vunpack.c.l.b16 %v620
    %v715 = vunpack.c.h.b16 %v620
    %v716 = vunpack.c.l.b16 %v621
    %v717 = vunpack.c.h.b16 %v621
    %v718 = vpack.c.b16 %v656, %v654
    %v719 = vpack.c.b16 %v657, %v655
    %v720 = vpack.c.b16 %v660, %v658
    %v721 = vpack.c.b16 %v661, %v659
    %v722 = vpack.c.b16 %v664, %v662
    %v723 = vpack.c.b16 %v665, %v663
    %v724 = vpack.c.b16 %v668, %v666
    %v725 = vpack.c.b16 %v669, %v667
    %v726 = vpack.c.b16 %v672, %v670
    %v727 = vpack.c.b16 %v673, %v671
    %v728 = vpack.c.b16 %v676, %v674
    %v729 = vpack.c.b16 %v677, %v675
    %v730 = vpack.c.b16 %v680, %v678
    %v731 = vpack.c.b16 %v681, %v679
    %v732 = vpack.c.b16 %v684, %v682
    %v733 = vpack.c.b16 %v685, %v683
    %v734 = vpack.c.b16 %v688, %v686
    %v735 = vpack.c.b16 %v689, %v687
    %v736 = vpack.c.b16 %v692, %v690
    %v737 = vpack.c.b16 %v693, %v691
    %v738 = vpack.c.b16 %v696, %v694
    %v739 = vpack.c.b16 %v697, %v695
    %v740 = vpack.c.b16 %v700, %v698
    %v741 = vpack.c.b16 %v701, %v699
    %v742 = vpack.c.b16 %v704, %v702
    %v743 = vpack.c.b16 %v705, %v703
    %v744 = vpack.c.b16 %v708, %v706
    %v745 = vpack.c.b16 %v709, %v707
    %v746 = vpack.c.b16 %v712, %v710
    %v747 = vpack.c.b16 %v713, %v711
    %v748 = vpack.c.b16 %v716, %v714
    %v749 = vpack.c.b16 %v717, %v715
    %782 = vmatprep.subr.bf16.mxu0 %v719
    %783 = vmatpush1.bf16.msra.mxu0 %v718
    %784 = vmatprep.subr.bf16.mxu0 %v721
    %785 = vmatpush1.bf16.msra.mxu0 %v720
    %786 = vmatprep.subr.bf16.mxu0 %v723
    %787 = vmatpush1.bf16.msra.mxu0 %v722
    %788 = vmatprep.subr.bf16.mxu0 %v725
    %789 = vmatpush1.bf16.msra.mxu0 %v724
    %790 = vmatprep.subr.bf16.mxu0 %v727
    %791 = vmatpush1.bf16.msra.mxu0 %v726
    %792 = vmatprep.subr.bf16.mxu0 %v729
    %793 = vmatpush1.bf16.msra.mxu0 %v728
    %794 = vmatprep.subr.bf16.mxu0 %v731
    %795 = vmatpush1.bf16.msra.mxu0 %v730
    %796 = vmatprep.subr.bf16.mxu0 %v733
    %797 = vmatpush1.bf16.msra.mxu0 %v732
    %798 = vmatprep.subr.bf16.mxu0 %v735
    %799 = vmatpush1.bf16.msra.mxu0 %v734
    %800 = vmatprep.subr.bf16.mxu0 %v737
    %801 = vmatpush1.bf16.msra.mxu0 %v736
    %802 = vmatprep.subr.bf16.mxu0 %v739
    %803 = vmatpush1.bf16.msra.mxu0 %v738
    %804 = vmatprep.subr.bf16.mxu0 %v741
    %805 = vmatpush1.bf16.msra.mxu0 %v740
    %806 = vmatprep.subr.bf16.mxu0 %v743
    %807 = vmatpush1.bf16.msra.mxu0 %v742
    %808 = vmatprep.subr.bf16.mxu0 %v745
    %809 = vmatpush1.bf16.msra.mxu0 %v744
    %810 = vmatprep.subr.bf16.mxu0 %v747
    %811 = vmatpush1.bf16.msra.mxu0 %v746
    %812 = vmatprep.subr.bf16.mxu0 %v749
    %813 = vmatpush1.bf16.msra.mxu0 %v748
    %814 = vmatprep.mubr.bf16.mxu0 %v589
    %815 = vmatmul.mubr.bf16.gmra.mrb[0].mxu0 %v588
    %v816 = vpop.f32.mrb[0].mxu0
    %v817 = vadd.f32 0.0, %v816
    %v818 = vpop.f32.mrb[0].mxu0
    %v819 = vadd.f32 0.0, %v818
    %v820 = vpop.f32.mrb[0].mxu0
    %v821 = vpop.f32.mrb[0].mxu0
    %822 = vdwg.mxu0
    %s823 = scalar_lea.vmem %s5, 2
    %v824 = vld [vmem:[%s823] ss:$8 sm:$0x3]
    %v826 = vlaneseq
    %v827 = vshrl.u32 %v826, 7
    %v828 = vsub.s32 0, %v827
    %v829 = vrot.slane %v824, %v828
    %v830 = vlaneseq
    %v831 = vshrl.u32 %v830, 7
    %v832 = vsub.s32 1, %v831
    %v833 = vrot.slane %v824, %v832
    %v836 = vmul.f32 %v817, %v829
    %v837 = vmul.f32 %v819, %v833
    %s838 = scalar_lea.vmem %s5, 3
    %v839 = vld [vmem:[%s838] ss:$8 sm:$0x3]
    %v841 = vlaneseq
    %v842 = vshrl.u32 %v841, 7
    %v843 = vsub.s32 0, %v842
    %v844 = vrot.slane %v839, %v843
    %v845 = vlaneseq
    %v846 = vshrl.u32 %v845, 7
    %v847 = vsub.s32 1, %v846
    %v848 = vrot.slane %v839, %v847
    %v851 = vadd.f32 %v836, %v844
    %v852 = vadd.f32 %v837, %v848
    %v853 = vmax.f32 %v851, 0.0
    %v854 = vmax.f32 %v852, 0.0
    %v855 = vpack.c.bf16 %v853, %v853
    %v856 = vpack.c.bf16 %v854, %v854
    %v857 = vld [vmem:[#allocation4] sm:$0xff]
    %v858 = vld [vmem:[#allocation4 + $0x8] sm:$0xff]
    %v859 = vld [vmem:[#allocation4 + $0x10] sm:$0xff]
    %v860 = vld [vmem:[#allocation4 + $0x18] sm:$0xff]
    %v861 = vld [vmem:[#allocation4 + $0x20] sm:$0xff]
    %v862 = vld [vmem:[#allocation4 + $0x28] sm:$0xff]
    %v863 = vld [vmem:[#allocation4 + $0x30] sm:$0xff]
    %v864 = vld [vmem:[#allocation4 + $0x38] sm:$0xff]
    %v865 = vld [vmem:[#allocation4 + $0x40] sm:$0xff]
    %v866 = vld [vmem:[#allocation4 + $0x48] sm:$0xff]
    %v867 = vld [vmem:[#allocation4 + $0x50] sm:$0xff]
    %v868 = vld [vmem:[#allocation4 + $0x58] sm:$0xff]
    %v869 = vld [vmem:[#allocation4 + $0x60] sm:$0xff]
    %v870 = vld [vmem:[#allocation4 + $0x68] sm:$0xff]
    %v871 = vld [vmem:[#allocation4 + $0x70] sm:$0xff]
    %v872 = vld [vmem:[#allocation4 + $0x78] sm:$0xff]
    %v873 = vld [vmem:[#allocation4 + $0x80] sm:$0xff]
    %v874 = vld [vmem:[#allocation4 + $0x88] sm:$0xff]
    %v875 = vld [vmem:[#allocation4 + $0x90] sm:$0xff]
    %v876 = vld [vmem:[#allocation4 + $0x98] sm:$0xff]
    %v877 = vld [vmem:[#allocation4 + $0xa0] sm:$0xff]
    %v878 = vld [vmem:[#allocation4 + $0xa8] sm:$0xff]
    %v879 = vld [vmem:[#allocation4 + $0xb0] sm:$0xff]
    %v880 = vld [vmem:[#allocation4 + $0xb8] sm:$0xff]
    %v881 = vld [vmem:[#allocation4 + $0xc0] sm:$0xff]
    %v882 = vld [vmem:[#allocation4 + $0xc8] sm:$0xff]
    %v883 = vld [vmem:[#allocation4 + $0xd0] sm:$0xff]
    %v884 = vld [vmem:[#allocation4 + $0xd8] sm:$0xff]
    %v885 = vld [vmem:[#allocation4 + $0xe0] sm:$0xff]
    %v886 = vld [vmem:[#allocation4 + $0xe8] sm:$0xff]
    %v887 = vld [vmem:[#allocation4 + $0xf0] sm:$0xff]
    %v888 = vld [vmem:[#allocation4 + $0xf8] sm:$0xff]
    %v921 = vunpack.c.l.b16 %v857
    %v922 = vunpack.c.h.b16 %v857
    %v923 = vunpack.c.l.b16 %v858
    %v924 = vunpack.c.h.b16 %v858
    %v925 = vunpack.c.l.b16 %v859
    %v926 = vunpack.c.h.b16 %v859
    %v927 = vunpack.c.l.b16 %v860
    %v928 = vunpack.c.h.b16 %v860
    %v929 = vunpack.c.l.b16 %v861
    %v930 = vunpack.c.h.b16 %v861
    %v931 = vunpack.c.l.b16 %v862
    %v932 = vunpack.c.h.b16 %v862
    %v933 = vunpack.c.l.b16 %v863
    %v934 = vunpack.c.h.b16 %v863
    %v935 = vunpack.c.l.b16 %v864
    %v936 = vunpack.c.h.b16 %v864
    %v937 = vunpack.c.l.b16 %v865
    %v938 = vunpack.c.h.b16 %v865
    %v939 = vunpack.c.l.b16 %v866
    %v940 = vunpack.c.h.b16 %v866
    %v941 = vunpack.c.l.b16 %v867
    %v942 = vunpack.c.h.b16 %v867
    %v943 = vunpack.c.l.b16 %v868
    %v944 = vunpack.c.h.b16 %v868
    %v945 = vunpack.c.l.b16 %v869
    %v946 = vunpack.c.h.b16 %v869
    %v947 = vunpack.c.l.b16 %v870
    %v948 = vunpack.c.h.b16 %v870
    %v949 = vunpack.c.l.b16 %v871
    %v950 = vunpack.c.h.b16 %v871
    %v951 = vunpack.c.l.b16 %v872
    %v952 = vunpack.c.h.b16 %v872
    %v953 = vunpack.c.l.b16 %v873
    %v954 = vunpack.c.h.b16 %v873
    %v955 = vunpack.c.l.b16 %v874
    %v956 = vunpack.c.h.b16 %v874
    %v957 = vunpack.c.l.b16 %v875
    %v958 = vunpack.c.h.b16 %v875
    %v959 = vunpack.c.l.b16 %v876
    %v960 = vunpack.c.h.b16 %v876
    %v961 = vunpack.c.l.b16 %v877
    %v962 = vunpack.c.h.b16 %v877
    %v963 = vunpack.c.l.b16 %v878
    %v964 = vunpack.c.h.b16 %v878
    %v965 = vunpack.c.l.b16 %v879
    %v966 = vunpack.c.h.b16 %v879
    %v967 = vunpack.c.l.b16 %v880
    %v968 = vunpack.c.h.b16 %v880
    %v969 = vunpack.c.l.b16 %v881
    %v970 = vunpack.c.h.b16 %v881
    %v971 = vunpack.c.l.b16 %v882
    %v972 = vunpack.c.h.b16 %v882
    %v973 = vunpack.c.l.b16 %v883
    %v974 = vunpack.c.h.b16 %v883
    %v975 = vunpack.c.l.b16 %v884
    %v976 = vunpack.c.h.b16 %v884
    %v977 = vunpack.c.l.b16 %v885
    %v978 = vunpack.c.h.b16 %v885
    %v979 = vunpack.c.l.b16 %v886
    %v980 = vunpack.c.h.b16 %v886
    %v981 = vunpack.c.l.b16 %v887
    %v982 = vunpack.c.h.b16 %v887
    %v983 = vunpack.c.l.b16 %v888
    %v984 = vunpack.c.h.b16 %v888
    %v985 = vpack.c.b16 %v923, %v921
    %v986 = vpack.c.b16 %v924, %v922
    %v987 = vpack.c.b16 %v927, %v925
    %v988 = vpack.c.b16 %v928, %v926
    %v989 = vpack.c.b16 %v931, %v929
    %v990 = vpack.c.b16 %v932, %v930
    %v991 = vpack.c.b16 %v935, %v933
    %v992 = vpack.c.b16 %v936, %v934
    %v993 = vpack.c.b16 %v939, %v937
    %v994 = vpack.c.b16 %v940, %v938
    %v995 = vpack.c.b16 %v943, %v941
    %v996 = vpack.c.b16 %v944, %v942
    %v997 = vpack.c.b16 %v947, %v945
    %v998 = vpack.c.b16 %v948, %v946
    %v999 = vpack.c.b16 %v951, %v949
    %v1000 = vpack.c.b16 %v952, %v950
    %v1001 = vpack.c.b16 %v955, %v953
    %v1002 = vpack.c.b16 %v956, %v954
    %v1003 = vpack.c.b16 %v959, %v957
    %v1004 = vpack.c.b16 %v960, %v958
    %v1005 = vpack.c.b16 %v963, %v961
    %v1006 = vpack.c.b16 %v964, %v962
    %v1007 = vpack.c.b16 %v967, %v965
    %v1008 = vpack.c.b16 %v968, %v966
    %v1009 = vpack.c.b16 %v971, %v969
    %v1010 = vpack.c.b16 %v972, %v970
    %v1011 = vpack.c.b16 %v975, %v973
    %v1012 = vpack.c.b16 %v976, %v974
    %v1013 = vpack.c.b16 %v979, %v977
    %v1014 = vpack.c.b16 %v980, %v978
    %v1015 = vpack.c.b16 %v983, %v981
    %v1016 = vpack.c.b16 %v984, %v982
    %1049 = vmatprep.subr.bf16.mxu0 %v986
    %1050 = vmatpush1.bf16.msra.mxu0 %v985
    %1051 = vmatprep.subr.bf16.mxu0 %v988
    %1052 = vmatpush1.bf16.msra.mxu0 %v987
    %1053 = vmatprep.subr.bf16.mxu0 %v990
    %1054 = vmatpush1.bf16.msra.mxu0 %v989
    %1055 = vmatprep.subr.bf16.mxu0 %v992
    %1056 = vmatpush1.bf16.msra.mxu0 %v991
    %1057 = vmatprep.subr.bf16.mxu0 %v994
    %1058 = vmatpush1.bf16.msra.mxu0 %v993
    %1059 = vmatprep.subr.bf16.mxu0 %v996
    %1060 = vmatpush1.bf16.msra.mxu0 %v995
    %1061 = vmatprep.subr.bf16.mxu0 %v998
    %1062 = vmatpush1.bf16.msra.mxu0 %v997
    %1063 = vmatprep.subr.bf16.mxu0 %v1000
    %1064 = vmatpush1.bf16.msra.mxu0 %v999
    %1065 = vmatprep.subr.bf16.mxu0 %v1002
    %1066 = vmatpush1.bf16.msra.mxu0 %v1001
    %1067 = vmatprep.subr.bf16.mxu0 %v1004
    %1068 = vmatpush1.bf16.msra.mxu0 %v1003
    %1069 = vmatprep.subr.bf16.mxu0 %v1006
    %1070 = vmatpush1.bf16.msra.mxu0 %v1005
    %1071 = vmatprep.subr.bf16.mxu0 %v1008
    %1072 = vmatpush1.bf16.msra.mxu0 %v1007
    %1073 = vmatprep.subr.bf16.mxu0 %v1010
    %1074 = vmatpush1.bf16.msra.mxu0 %v1009
    %1075 = vmatprep.subr.bf16.mxu0 %v1012
    %1076 = vmatpush1.bf16.msra.mxu0 %v1011
    %1077 = vmatprep.subr.bf16.mxu0 %v1014
    %1078 = vmatpush1.bf16.msra.mxu0 %v1013
    %1079 = vmatprep.subr.bf16.mxu0 %v1016
    %1080 = vmatpush1.bf16.msra.mxu0 %v1015
    %1081 = vmatprep.mubr.bf16.mxu0 %v856
    %1082 = vmatmul.mubr.bf16.gmra.mrb[0].mxu0 %v855
    %v1083 = vpop.f32.mrb[0].mxu0
    %v1084 = vadd.f32 0.0, %v1083
    %v1085 = vpop.f32.mrb[0].mxu0
    %v1086 = vadd.f32 0.0, %v1085
    %v1087 = vpop.f32.mrb[0].mxu0
    %v1088 = vpop.f32.mrb[0].mxu0
    %1089 = vdwg.mxu0
    %s1090 = scalar_lea.vmem %s5, 4
    %v1091 = vld [vmem:[%s1090] ss:$8 sm:$0x3]
    %v1093 = vlaneseq
    %v1094 = vshrl.u32 %v1093, 7
    %v1095 = vsub.s32 0, %v1094
    %v1096 = vrot.slane %v1091, %v1095
    %v1097 = vlaneseq
    %v1098 = vshrl.u32 %v1097, 7
    %v1099 = vsub.s32 1, %v1098
    %v1100 = vrot.slane %v1091, %v1099
    %v1103 = vmul.f32 %v1084, %v1096
    %v1104 = vmul.f32 %v1086, %v1100
    %s1105 = scalar_lea.vmem %s5, 5
    %v1106 = vld [vmem:[%s1105] ss:$8 sm:$0x3]
    %v1108 = vlaneseq
    %v1109 = vshrl.u32 %v1108, 7
    %v1110 = vsub.s32 0, %v1109
    %v1111 = vrot.slane %v1106, %v1110
    %v1112 = vlaneseq
    %v1113 = vshrl.u32 %v1112, 7
    %v1114 = vsub.s32 1, %v1113
    %v1115 = vrot.slane %v1106, %v1114
    %v1118 = vadd.f32 %v1103, %v1111
    %v1119 = vadd.f32 %v1104, %v1115
    %v1120 = vadd.f32 %v1118, %v586
    %v1121 = vadd.f32 %v1119, %v587
    %v1122 = vmax.f32 %v1120, 0.0
    %v1123 = vmax.f32 %v1121, 0.0
    %v1124 = vpack.c.bf16 %v1122, %v1122
    %v1125 = vpack.c.bf16 %v1123, %v1123
    %v1126 = vld [vmem:[#allocation6] sm:$0xff]
    %v1127 = vld [vmem:[#allocation6 + $0x8] sm:$0xff]
    %v1128 = vld [vmem:[#allocation6 + $0x10] sm:$0xff]
    %v1129 = vld [vmem:[#allocation6 + $0x18] sm:$0xff]
    %v1130 = vld [vmem:[#allocation6 + $0x20] sm:$0xff]
    %v1131 = vld [vmem:[#allocation6 + $0x28] sm:$0xff]
    %v1132 = vld [vmem:[#allocation6 + $0x30] sm:$0xff]
    %v1133 = vld [vmem:[#allocation6 + $0x38] sm:$0xff]
    %v1134 = vld [vmem:[#allocation6 + $0x40] sm:$0xff]
    %v1135 = vld [vmem:[#allocation6 + $0x48] sm:$0xff]
    %v1136 = vld [vmem:[#allocation6 + $0x50] sm:$0xff]
    %v1137 = vld [vmem:[#allocation6 + $0x58] sm:$0xff]
    %v1138 = vld [vmem:[#allocation6 + $0x60] sm:$0xff]
    %v1139 = vld [vmem:[#allocation6 + $0x68] sm:$0xff]
    %v1140 = vld [vmem:[#allocation6 + $0x70] sm:$0xff]
    %v1141 = vld [vmem:[#allocation6 + $0x78] sm:$0xff]
    %v1142 = vld [vmem:[#allocation6 + $0x80] sm:$0xff]
    %v1143 = vld [vmem:[#allocation6 + $0x88] sm:$0xff]
    %v1144 = vld [vmem:[#allocation6 + $0x90] sm:$0xff]
    %v1145 = vld [vmem:[#allocation6 + $0x98] sm:$0xff]
    %v1146 = vld [vmem:[#allocation6 + $0xa0] sm:$0xff]
    %v1147 = vld [vmem:[#allocation6 + $0xa8] sm:$0xff]
    %v1148 = vld [vmem:[#allocation6 + $0xb0] sm:$0xff]
    %v1149 = vld [vmem:[#allocation6 + $0xb8] sm:$0xff]
    %v1150 = vld [vmem:[#allocation6 + $0xc0] sm:$0xff]
    %v1151 = vld [vmem:[#allocation6 + $0xc8] sm:$0xff]
    %v1152 = vld [vmem:[#allocation6 + $0xd0] sm:$0xff]
    %v1153 = vld [vmem:[#allocation6 + $0xd8] sm:$0xff]
    %v1154 = vld [vmem:[#allocation6 + $0xe0] sm:$0xff]
    %v1155 = vld [vmem:[#allocation6 + $0xe8] sm:$0xff]
    %v1156 = vld [vmem:[#allocation6 + $0xf0] sm:$0xff]
    %v1157 = vld [vmem:[#allocation6 + $0xf8] sm:$0xff]
    %s1158 = scalar_lea.vmem %s5, 6
    %v1159 = vld [vmem:[%s1158] ss:$8 sm:$0x3]
    %v1161 = vlaneseq
    %v1162 = vshrl.u32 %v1161, 7
    %v1163 = vsub.s32 0, %v1162
    %v1164 = vrot.slane %v1159, %v1163
    %v1165 = vlaneseq
    %v1166 = vshrl.u32 %v1165, 7
    %v1167 = vsub.s32 1, %v1166
    %v1168 = vrot.slane %v1159, %v1167
    %v1203 = vunpack.c.l.b16 %v1126
    %v1204 = vunpack.c.h.b16 %v1126
    %v1205 = vunpack.c.l.b16 %v1127
    %v1206 = vunpack.c.h.b16 %v1127
    %v1207 = vunpack.c.l.b16 %v1128
    %v1208 = vunpack.c.h.b16 %v1128
    %v1209 = vunpack.c.l.b16 %v1129
    %v1210 = vunpack.c.h.b16 %v1129
    %v1211 = vunpack.c.l.b16 %v1130
    %v1212 = vunpack.c.h.b16 %v1130
    %v1213 = vunpack.c.l.b16 %v1131
    %v1214 = vunpack.c.h.b16 %v1131
    %v1215 = vunpack.c.l.b16 %v1132
    %v1216 = vunpack.c.h.b16 %v1132
    %v1217 = vunpack.c.l.b16 %v1133
    %v1218 = vunpack.c.h.b16 %v1133
    %v1219 = vunpack.c.l.b16 %v1134
    %v1220 = vunpack.c.h.b16 %v1134
    %v1221 = vunpack.c.l.b16 %v1135
    %v1222 = vunpack.c.h.b16 %v1135
    %v1223 = vunpack.c.l.b16 %v1136
    %v1224 = vunpack.c.h.b16 %v1136
    %v1225 = vunpack.c.l.b16 %v1137
    %v1226 = vunpack.c.h.b16 %v1137
    %v1227 = vunpack.c.l.b16 %v1138
    %v1228 = vunpack.c.h.b16 %v1138
    %v1229 = vunpack.c.l.b16 %v1139
    %v1230 = vunpack.c.h.b16 %v1139
    %v1231 = vunpack.c.l.b16 %v1140
    %v1232 = vunpack.c.h.b16 %v1140
    %v1233 = vunpack.c.l.b16 %v1141
    %v1234 = vunpack.c.h.b16 %v1141
    %v1235 = vunpack.c.l.b16 %v1142
    %v1236 = vunpack.c.h.b16 %v1142
    %v1237 = vunpack.c.l.b16 %v1143
    %v1238 = vunpack.c.h.b16 %v1143
    %v1239 = vunpack.c.l.b16 %v1144
    %v1240 = vunpack.c.h.b16 %v1144
    %v1241 = vunpack.c.l.b16 %v1145
    %v1242 = vunpack.c.h.b16 %v1145
    %v1243 = vunpack.c.l.b16 %v1146
    %v1244 = vunpack.c.h.b16 %v1146
    %v1245 = vunpack.c.l.b16 %v1147
    %v1246 = vunpack.c.h.b16 %v1147
    %v1247 = vunpack.c.l.b16 %v1148
    %v1248 = vunpack.c.h.b16 %v1148
    %v1249 = vunpack.c.l.b16 %v1149
    %v1250 = vunpack.c.h.b16 %v1149
    %v1251 = vunpack.c.l.b16 %v1150
    %v1252 = vunpack.c.h.b16 %v1150
    %v1253 = vunpack.c.l.b16 %v1151
    %v1254 = vunpack.c.h.b16 %v1151
    %v1255 = vunpack.c.l.b16 %v1152
    %v1256 = vunpack.c.h.b16 %v1152
    %v1257 = vunpack.c.l.b16 %v1153
    %v1258 = vunpack.c.h.b16 %v1153
    %v1259 = vunpack.c.l.b16 %v1154
    %v1260 = vunpack.c.h.b16 %v1154
    %v1261 = vunpack.c.l.b16 %v1155
    %v1262 = vunpack.c.h.b16 %v1155
    %v1263 = vunpack.c.l.b16 %v1156
    %v1264 = vunpack.c.h.b16 %v1156
    %v1265 = vunpack.c.l.b16 %v1157
    %v1266 = vunpack.c.h.b16 %v1157
    %v1267 = vpack.c.b16 %v1205, %v1203
    %v1268 = vpack.c.b16 %v1206, %v1204
    %v1269 = vpack.c.b16 %v1209, %v1207
    %v1270 = vpack.c.b16 %v1210, %v1208
    %v1271 = vpack.c.b16 %v1213, %v1211
    %v1272 = vpack.c.b16 %v1214, %v1212
    %v1273 = vpack.c.b16 %v1217, %v1215
    %v1274 = vpack.c.b16 %v1218, %v1216
    %v1275 = vpack.c.b16 %v1221, %v1219
    %v1276 = vpack.c.b16 %v1222, %v1220
    %v1277 = vpack.c.b16 %v1225, %v1223
    %v1278 = vpack.c.b16 %v1226, %v1224
    %v1279 = vpack.c.b16 %v1229, %v1227
    %v1280 = vpack.c.b16 %v1230, %v1228
    %v1281 = vpack.c.b16 %v1233, %v1231
    %v1282 = vpack.c.b16 %v1234, %v1232
    %v1283 = vpack.c.b16 %v1237, %v1235
    %v1284 = vpack.c.b16 %v1238, %v1236
    %v1285 = vpack.c.b16 %v1241, %v1239
    %v1286 = vpack.c.b16 %v1242, %v1240
    %v1287 = vpack.c.b16 %v1245, %v1243
    %v1288 = vpack.c.b16 %v1246, %v1244
    %v1289 = vpack.c.b16 %v1249, %v1247
    %v1290 = vpack.c.b16 %v1250, %v1248
    %v1291 = vpack.c.b16 %v1253, %v1251
    %v1292 = vpack.c.b16 %v1254, %v1252
    %v1293 = vpack.c.b16 %v1257, %v1255
    %v1294 = vpack.c.b16 %v1258, %v1256
    %v1295 = vpack.c.b16 %v1261, %v1259
    %v1296 = vpack.c.b16 %v1262, %v1260
    %v1297 = vpack.c.b16 %v1265, %v1263
    %v1298 = vpack.c.b16 %v1266, %v1264
    %1331 = vmatprep.subr.bf16.mxu0 %v1268
    %1332 = vmatpush1.bf16.msra.mxu0 %v1267
    %1333 = vmatprep.subr.bf16.mxu0 %v1270
    %1334 = vmatpush1.bf16.msra.mxu0 %v1269
    %1335 = vmatprep.subr.bf16.mxu0 %v1272
    %1336 = vmatpush1.bf16.msra.mxu0 %v1271
    %1337 = vmatprep.subr.bf16.mxu0 %v1274
    %1338 = vmatpush1.bf16.msra.mxu0 %v1273
    %1339 = vmatprep.subr.bf16.mxu0 %v1276
    %1340 = vmatpush1.bf16.msra.mxu0 %v1275
    %1341 = vmatprep.subr.bf16.mxu0 %v1278
    %1342 = vmatpush1.bf16.msra.mxu0 %v1277
    %1343 = vmatprep.subr.bf16.mxu0 %v1280
    %1344 = vmatpush1.bf16.msra.mxu0 %v1279
    %1345 = vmatprep.subr.bf16.mxu0 %v1282
    %1346 = vmatpush1.bf16.msra.mxu0 %v1281
    %1347 = vmatprep.subr.bf16.mxu0 %v1284
    %1348 = vmatpush1.bf16.msra.mxu0 %v1283
    %1349 = vmatprep.subr.bf16.mxu0 %v1286
    %1350 = vmatpush1.bf16.msra.mxu0 %v1285
    %1351 = vmatprep.subr.bf16.mxu0 %v1288
    %1352 = vmatpush1.bf16.msra.mxu0 %v1287
    %1353 = vmatprep.subr.bf16.mxu0 %v1290
    %1354 = vmatpush1.bf16.msra.mxu0 %v1289
    %1355 = vmatprep.subr.bf16.mxu0 %v1292
    %1356 = vmatpush1.bf16.msra.mxu0 %v1291
    %1357 = vmatprep.subr.bf16.mxu0 %v1294
    %1358 = vmatpush1.bf16.msra.mxu0 %v1293
    %1359 = vmatprep.subr.bf16.mxu0 %v1296
    %1360 = vmatpush1.bf16.msra.mxu0 %v1295
    %1361 = vmatprep.subr.bf16.mxu0 %v1298
    %1362 = vmatpush1.bf16.msra.mxu0 %v1297
    %1363 = vmatprep.mubr.bf16.mxu0 %v1125
    %1364 = vmatmul.mubr.bf16.gmra.mrb[0].mxu0 %v1124
    %v1365 = vpop.f32.mrb[0].mxu0
    %v1366 = vadd.f32 %v1164, %v1365
    %v1367 = vpop.f32.mrb[0].mxu0
    %v1368 = vadd.f32 %v1168, %v1367
    %v1369 = vpop.f32.mrb[0].mxu0
    %v1370 = vpop.f32.mrb[0].mxu0
    %1371 = vdwg.mxu0
    %v1372 = vmul.f32 %v1366, 0.5
    %v1373 = vmul.f32 %v1368, 0.5
    %v1374 = vmul.f32 %v1366, 0.044715
    %v1375 = vmul.f32 %v1368, 0.044715
    %v1376 = vmul.f32 %v1374, %v1366
    %v1377 = vmul.f32 %v1375, %v1368
    %v1378 = vmul.f32 %v1376, %v1366
    %v1379 = vmul.f32 %v1377, %v1368
    %v1380 = vadd.f32 %v1366, %v1378
    %v1381 = vadd.f32 %v1368, %v1379
    %v1382 = vmul.f32 %v1380, 0.7978846
    %v1383 = vmul.f32 %v1381, 0.7978846
    %v1384 = vtanh.pop %v1382
    %v1385 = vtanh.pop %v1383
    %v1386 = vadd.f32 %v1384, 1.0
    %v1387 = vadd.f32 %v1385, 1.0
    %v1388 = vmul.f32 %v1372, %v1386
    %v1389 = vmul.f32 %v1373, %v1387
    %v1392 = vcombine.low %v1388, %v1389
    %v1394 = vunpack.c.l.s4 1983009808
    %v1395 = vunpack.c.0.s8 %v1394
    %v1396 = vlaneseq
    %v1397 = vshrl.u32 %v1396, 7
    %v1398 = vsub.s32 %v1395, %v1397
    %v1399 = vrot.slane %v1392, %v1398
    %1401 = vst [vmem:[%s6] sm:$0xf] %v1399
    // Predicated region
    $region38: #{cls_head_forward.2} parent=1 // pred_check
      _
    $region39: #{cls_head_forward.2} parent=1 // pred_check_branch
      %1403 = sbr.rel (0) target = $region41
    $region40: #{cls_head_forward.2} parent=1 // pred_region
      _
    $region41: #{cls_head_forward.2} parent=1 // pred_fallthru
      _
    // Predicated region
    $region42: #{cls_head_forward.2} parent=1 // pred_check
      _
    $region43: #{cls_head_forward.2} parent=1 // pred_check_branch
      %1405 = sbr.rel (0) target = $region45
    $region44: #{cls_head_forward.2} parent=1 // pred_region
      _
    $region45: #{cls_head_forward.2} parent=1 // pred_fallthru
      _
    %1406 = vsyncpa [#allocation3], 1
    %1407 = vsyncpa [#allocation5], 1

// kernel: cls_head_forward.3
$region0: #{cls_head_forward.3}
  #allocation0 [shape = 'u32[]', space=smem, size = 0x4, offset = 0x4, fixed_abs, tag = 'smem constant byte address 0x4 - core index']
  #allocation1 [shape = 'u32[144,128]{1,0:T(1,128)}', space=vmem, size = 0x12000, scoped, tag = 'internal scratch']
  %s0 = inlined_call_operand.vmem [shape: f32[16,32], index: 0, kind: input, shape index: {}]
  %s1 = inlined_call_operand.vmem [shape: f32[32,16], index: 1, kind: input, shape index: {}]
  %s2 = inlined_call_operand.vmem [shape: f32[16,32], index: 2, kind: input, shape index: {}]
  %s3 = inlined_call_operand.vmem [shape: f32[32,64], index: 3, kind: input, shape index: {}]
  %s4 = inlined_call_operand.vmem [shape: f32[64,32], index: 4, kind: input, shape index: {}]
  %s5 = inlined_call_operand.vmem [shape: f32[32,16], index: 5, kind: input, shape index: {}]
  %s6 = inlined_call_operand.vmem [shape: f32[16,32], index: 6, kind: input, shape index: {}]
  %s7 = inlined_call_operand.vmem [shape: f32[32,64], index: 7, kind: input, shape index: {}]
  %s8 = inlined_call_operand.vmem [shape: f32[64,32], index: 8, kind: input, shape index: {}]
  %s9 = inlined_call_operand.vmem [shape: f32[32,32], index: 9, kind: input, shape index: {}]
  %s10 = inlined_call_operand.vmem [shape: f32[32,48], index: 10, kind: input, shape index: {}]
  %s11 = inlined_call_operand.vmem [shape: f32[16,64], index: 11, kind: input, shape index: {}]
  %s12 = inlined_call_operand.vmem [shape: f32[32,4], index: 12, kind: input, shape index: {}]
  %s13 = inlined_call_operand.hbm [shape: f32[16,48], index: 13, kind: output, shape index: {0}]
  %s14 = inlined_call_operand.hbm [shape: f32[16,48], index: 14, kind: output, shape index: {1}]
  %15 = xla_tuple %s13, %s14
  %s16 = sld [smem:[#allocation0]]
  $region70: #{cls_head_forward.3} parent=0
    _
  %s18 = ssub.s32 1, %s16
  %s19 = scalar_select 0, %s18, %s16
  $region1: #{cls_head_forward.3} parent=0
    #allocation2 [shape = 'u8[8192]{0}', space=vmem, size = 0x2000, scoped, tag = 'output window, operand 0, single buffered']
    #allocation3 [shape = 's32[1]{0}', space=sflag, size = 0x4, scoped, tag = 'scoped memory for cls_head_forward.3']
    #allocation4 [shape = 'u8[8192]{0}', space=vmem, size = 0x2000, scoped, tag = 'output window, operand 1, single buffered']
    #allocation5 [shape = 's32[1]{0}', space=sflag, size = 0x4, scoped, tag = 'scoped memory for cls_head_forward.3']
    %20 = vsyncpa [#allocation3], 0
    %21 = vsyncpa [#allocation5], 0
    // Predicated region
    $region2: #{cls_head_forward.3} parent=1 // pred_check
      _
    $region3: #{cls_head_forward.3} parent=1 // pred_check_branch
      %23 = sbr.rel (0) target = $region5
    $region4: #{cls_head_forward.3} parent=1 // pred_region
      _
    $region5: #{cls_head_forward.3} parent=1 // pred_fallthru
      _
    // Predicated region
    $region6: #{cls_head_forward.3} parent=1 // pred_check
      _
    $region7: #{cls_head_forward.3} parent=1 // pred_check_branch
      %25 = sbr.rel (0) target = $region9
    $region8: #{cls_head_forward.3} parent=1 // pred_region
      _
    $region9: #{cls_head_forward.3} parent=1 // pred_fallthru
      _
    // Predicated region
    $region10: #{cls_head_forward.3} parent=1 // pred_check
      _
    $region11: #{cls_head_forward.3} parent=1 // pred_check_branch
      %27 = sbr.rel (0) target = $region13
    $region12: #{cls_head_forward.3} parent=1 // pred_region
      _
    $region13: #{cls_head_forward.3} parent=1 // pred_fallthru
      _
    // Predicated region
    $region14: #{cls_head_forward.3} parent=1 // pred_check
      _
    $region15: #{cls_head_forward.3} parent=1 // pred_check_branch
      %29 = sbr.rel (0) target = $region17
    $region16: #{cls_head_forward.3} parent=1 // pred_region
      _
    $region17: #{cls_head_forward.3} parent=1 // pred_fallthru
      _
    // Predicated region
    $region18: #{cls_head_forward.3} parent=1 // pred_check
      _
    $region19: #{cls_head_forward.3} parent=1 // pred_check_branch
      %31 = sbr.rel (0) target = $region21
    $region20: #{cls_head_forward.3} parent=1 // pred_region
      _
    $region21: #{cls_head_forward.3} parent=1 // pred_fallthru
      _
    // Predicated region
    $region22: #{cls_head_forward.3} parent=1 // pred_check
      _
    $region23: #{cls_head_forward.3} parent=1 // pred_check_branch
      %33 = sbr.rel (0) target = $region25
    $region24: #{cls_head_forward.3} parent=1 // pred_region
      _
    $region25: #{cls_head_forward.3} parent=1 // pred_fallthru
      _
    // Predicated region
    $region26: #{cls_head_forward.3} parent=1 // pred_check
      _
    $region27: #{cls_head_forward.3} parent=1 // pred_check_branch
      %35 = sbr.rel (0) target = $region29
    $region28: #{cls_head_forward.3} parent=1 // pred_region
      _
    $region29: #{cls_head_forward.3} parent=1 // pred_fallthru
      _
    // Predicated region
    $region30: #{cls_head_forward.3} parent=1 // pred_check
      _
    $region31: #{cls_head_forward.3} parent=1 // pred_check_branch
      %37 = sbr.rel (0) target = $region33
    $region32: #{cls_head_forward.3} parent=1 // pred_region
      _
    $region33: #{cls_head_forward.3} parent=1 // pred_fallthru
      _
    // Predicated region
    $region34: #{cls_head_forward.3} parent=1 // pred_check
      _
    $region35: #{cls_head_forward.3} parent=1 // pred_check_branch
      %39 = sbr.rel (0) target = $region37
    $region36: #{cls_head_forward.3} parent=1 // pred_region
      _
    $region37: #{cls_head_forward.3} parent=1 // pred_fallthru
      _
    // Predicated region
    $region38: #{cls_head_forward.3} parent=1 // pred_check
      _
    $region39: #{cls_head_forward.3} parent=1 // pred_check_branch
      %41 = sbr.rel (0) target = $region41
    $region40: #{cls_head_forward.3} parent=1 // pred_region
      _
    $region41: #{cls_head_forward.3} parent=1 // pred_fallthru
      _
    // Predicated region
    $region42: #{cls_head_forward.3} parent=1 // pred_check
      _
    $region43: #{cls_head_forward.3} parent=1 // pred_check_branch
      %43 = sbr.rel (0) target = $region45
    $region44: #{cls_head_forward.3} parent=1 // pred_region
      _
    $region45: #{cls_head_forward.3} parent=1 // pred_fallthru
      _
    // Predicated region
    $region46: #{cls_head_forward.3} parent=1 // pred_check
      _
    $region47: #{cls_head_forward.3} parent=1 // pred_check_branch
      %45 = sbr.rel (0) target = $region49
    $region48: #{cls_head_forward.3} parent=1 // pred_region
      _
    $region49: #{cls_head_forward.3} parent=1 // pred_fallthru
      _
    // Predicated region
    $region50: #{cls_head_forward.3} parent=1 // pred_check
      _
    $region51: #{cls_head_forward.3} parent=1 // pred_check_branch
      %47 = sbr.rel (0) target = $region53
    $region52: #{cls_head_forward.3} parent=1 // pred_region
      _
    $region53: #{cls_head_forward.3} parent=1 // pred_fallthru
      _
    %v48 = vld [vmem:[%s0] sm:$0xff]
    %v49 = vld [vmem:[%s0 + $0x8] sm:$0xff]
    %v50 = vld [vmem:[%s1] sm:$0xff]
    %v51 = vld [vmem:[%s1 + $0x8] sm:$0xff]
    %v52 = vld [vmem:[%s1 + $0x10] sm:$0xff]
    %v53 = vld [vmem:[%s1 + $0x18] sm:$0xff]
    %v54 = vld [vmem:[%s2] sm:$0xff]
    %v55 = vld [vmem:[%s2 + $0x8] sm:$0xff]
    %v56 = vld [vmem:[%s3] sm:$0xff]
    %v57 = vld [vmem:[%s3 + $0x8] sm:$0xff]
    %v58 = vld [vmem:[%s3 + $0x10] sm:$0xff]
    %v59 = vld [vmem:[%s3 + $0x18] sm:$0xff]
    %v60 = vld [vmem:[%s4] sm:$0xff]
    %v61 = vld [vmem:[%s4 + $0x8] sm:$0xff]
    %v62 = vld [vmem:[%s4 + $0x10] sm:$0xff]
    %v63 = vld [vmem:[%s4 + $0x18] sm:$0xff]
    %v64 = vld [vmem:[%s4 + $0x20] sm:$0xff]
    %v65 = vld [vmem:[%s4 + $0x28] sm:$0xff]
    %v66 = vld [vmem:[%s4 + $0x30] sm:$0xff]
    %v67 = vld [vmem:[%s4 + $0x38] sm:$0xff]
    %v68 = vld [vmem:[%s11] sm:$0x1]
    %v69 = vld [vmem:[%s11 + $0x1] sm:$0x1]
    %v70 = vld [vmem:[%s11 + $0x2] sm:$0x1]
    %v71 = vld [vmem:[%s11 + $0x3] sm:$0x1]
    %v72 = vld [vmem:[%s11 + $0x4] sm:$0x1]
    %v73 = vld [vmem:[%s11 + $0x5] sm:$0x1]
    %v74 = vld [vmem:[%s12] sm:$0xff]
    %v75 = vld [vmem:[%s12 + $0x8] sm:$0xff]
    %v76 = vld [vmem:[%s12 + $0x10] sm:$0xff]
    %v77 = vld [vmem:[%s12 + $0x18] sm:$0xff]
    %vm78 = vcmask 261120
    %v79 = vsel %vm78, %v48, 0.0
    %80 = vadd.xlane.f32.xlu0 %v79
    %v81 = vpop.xlane.xlu0 %80
    %v82 = vsel %vm78, %v49, 0.0
    %83 = vadd.xlane.f32.xlu0 %v82
    %v84 = vpop.xlane.xlu0 %83
    %v85 = vrcp.pop 32.0
    %v86 = vmul.f32 %v81, %v85
    %v87 = vmul.f32 %v84, %v85
    %v88 = vsub.f32 %v48, %v86
    %v89 = vsub.f32 %v49, %v87
    %v90 = vmul.f32 %v88, %v88
    %v91 = vmul.f32 %v89, %v89
    %v92 = vsel %vm78, %v90, 0.0
    %93 = vadd.xlane.f32.xlu0 %v92
    %v94 = vpop.xlane.xlu0 %93
    %v95 = vsel %vm78, %v91, 0.0
    %96 = vadd.xlane.f32.xlu0 %v95
    %v97 = vpop.xlane.xlu0 %96
    %v98 = vmul.f32 %v94, %v85
    %v99 = vmul.f32 %v97, %v85
    %v100 = vadd.f32 %v98, 1e-05
    %v101 = vadd.f32 %v99, 1e-05
    %v102 = vrsqrt.pop %v100
    %v103 = vrsqrt.pop %v101
    %v104 = vmul.f32 %v88, %v102
    %v105 = vmul.f32 %v89, %v103
    %v106 = vlaneseq
    %v107 = vshrl.u32 %v106, 7
    %v108 = vsub.s32 0, %v107
    %v109 = vrot.slane %v68, %v108
    %v110 = vmul.f32 %v104, %v109
    %v111 = vmul.f32 %v105, %v109
    %v112 = vlaneseq
    %v113 = vshrl.u32 %v112, 7
    %v114 = vsub.s32 0, %v113
    %v115 = vrot.slane %v69, %v114
    %v116 = vadd.f32 %v110, %v115
    %v117 = vadd.f32 %v111, %v115
    %119 = vset.pattern.permute.xlu0 0
    %120 = vperm.xlu0 %119, %v74
    %v121 = vpop.permute.xlu0 %120
    %124 = vset.pattern.permute.xlu0 0
    %125 = vperm.xlu0 %124, %v75
    %v126 = vpop.permute.xlu0 %125
    %129 = vset.pattern.permute.xlu0 0
    %130 = vperm.xlu0 %129, %v76
    %v131 = vpop.permute.xlu0 %130
    %134 = vset.pattern.permute.xlu0 0
    %135 = vperm.xlu0 %134, %v77
    %v136 = vpop.permute.xlu0 %135
    %vm138 = vcmask 130048
    %v140 = vsel %vm138, %v50, 0
    %v143 = vsel %vm138, %v51, 0
    %v146 = vsel %vm138, %v52, 0
    %v149 = vsel %vm138, %v53, 0
    %151 = vmatprep.subr.mxu0 0.0
    %152 = vmatpush1.msra.mxu0 %v116
    %153 = vmatprep.subr.mxu0 0.0
    %154 = vmatpush1.msra.mxu0 %v117
    %155 = vmatprep.subr.mxu0 0.0
    %156 = vmatpush1.msra.mxu0 0.0
    %157 = vmatprep.subr.mxu0 0.0
    %158 = vmatpush1.msra.mxu0 0.0
    %159 = vmatprep.subr.mxu0 0.0
    %160 = vmatpush1.msra.mxu0 0.0
    %161 = vmatprep.subr.mxu0 0.0
    %162 = vmatpush1.msra.mxu0 0.0
    %163 = vmatprep.subr.mxu0 0.0
    %164 = vmatpush1.msra.mxu0 0.0
    %165 = vmatprep.subr.mxu0 0.0
    %166 = vmatpush1.msra.mxu0 0.0
    %167 = vmatprep.subr.mxu0 0.0
    %168 = vmatpush1.msra.mxu0 0.0
    %169 = vmatprep.subr.mxu0 0.0
    %170 = vmatpush1.msra.mxu0 0.0
    %171 = vmatprep.subr.mxu0 0.0
    %172 = vmatpush1.msra.mxu0 0.0
    %173 = vmatprep.subr.mxu0 0.0
    %174 = vmatpush1.msra.mxu0 0.0
    %175 = vmatprep.subr.mxu0 0.0
    %176 = vmatpush1.msra.mxu0 0.0
    %177 = vmatprep.subr.mxu0 0.0
    %178 = vmatpush1.msra.mxu0 0.0
    %179 = vmatprep.subr.mxu0 0.0
    %180 = vmatpush1.msra.mxu0 0.0
    %181 = vmatprep.subr.mxu0 0.0
    %182 = vmatpush1.msra.mxu0 0.0
    %183 = vmatprep.subr.mxu0 0.0
    %184 = vmatpush1.msra.mxu0 0.0
    %185 = vmatprep.subr.mxu0 0.0
    %186 = vmatpush1.msra.mxu0 0.0
    %187 = vmatprep.subr.mxu0 0.0
    %188 = vmatpush1.msra.mxu0 0.0
    %189 = vmatprep.subr.mxu0 0.0
    %190 = vmatpush1.msra.mxu0 0.0
    %191 = vmatprep.subr.mxu0 0.0
    %192 = vmatpush1.msra.mxu0 0.0
    %193 = vmatprep.subr.mxu0 0.0
    %194 = vmatpush1.msra.mxu0 0.0
    %195 = vmatprep.subr.mxu0 0.0
    %196 = vmatpush1.msra.mxu0 0.0
    %197 = vmatprep.subr.mxu0 0.0
    %198 = vmatpush1.msra.mxu0 0.0
    %199 = vmatprep.subr.mxu0 0.0
    %200 = vmatpush1.msra.mxu0 0.0
    %201 = vmatprep.subr.mxu0 0.0
    %202 = vmatpush1.msra.mxu0 0.0
    %203 = vmatprep.subr.mxu0 0.0
    %204 = vmatpush1.msra.mxu0 0.0
    %205 = vmatprep.subr.mxu0 0.0
    %206 = vmatpush1.msra.mxu0 0.0
    %207 = vmatprep.subr.mxu0 0.0
    %208 = vmatpush1.msra.mxu0 0.0
    %209 = vmatprep.subr.mxu0 0.0
    %210 = vmatpush1.msra.mxu0 0.0
    %211 = vmatprep.subr.mxu0 0.0
    %212 = vmatpush1.msra.mxu0 0.0
    %213 = vmatprep.subr.mxu0 0.0
    %214 = vmatpush1.msra.mxu0 0.0
    %215 = vmatprep.mubr.f32.mxu0 0.0
    %216 = vmatmul.mubr.f32.gmra.mrb[0].mxu0 %v140
    %v217 = vpop.f32.mrb[0].mxu0
    %v218 = vadd.f32 %v121, %v217
    %v219 = vpop.f32.mrb[0].mxu0
    %220 = vmatprep.mubr.f32.mxu0 0.0
    %221 = vmatmul.mubr.f32.gmra.mrb[0].mxu0 %v143
    %v222 = vpop.f32.mrb[0].mxu0
    %v223 = vadd.f32 %v126, %v222
    %v224 = vpop.f32.mrb[0].mxu0
    %225 = vmatprep.mubr.f32.mxu0 0.0
    %226 = vmatmul.mubr.f32.gmra.mrb[0].mxu0 %v146
    %v227 = vpop.f32.mrb[0].mxu0
    %v228 = vadd.f32 %v131, %v227
    %v229 = vpop.f32.mrb[0].mxu0
    %230 = vmatprep.mubr.f32.mxu0 0.0
    %231 = vmatmul.mubr.f32.gmra.mrb[0].mxu0 %v149
    %v232 = vpop.f32.mrb[0].mxu0
    %v233 = vadd.f32 %v136, %v232
    %v234 = vpop.f32.mrb[0].mxu0
    %235 = vdwg.mxu0
    %v236 = vmul.f32 %v218, 0.5
    %v237 = vmul.f32 %v223, 0.5
    %v238 = vmul.f32 %v228, 0.5
    %v239 = vmul.f32 %v233, 0.5
    %v240 = vmul.f32 %v218, 0.044715
    %v241 = vmul.f32 %v223, 0.044715
    %v242 = vmul.f32 %v228, 0.044715
    %v243 = vmul.f32 %v233, 0.044715
    %v244 = vmul.f32 %v240, %v218
    %v245 = vmul.f32 %v241, %v223
    %v246 = vmul.f32 %v242, %v228
    %v247 = vmul.f32 %v243, %v233
    %v248 = vmul.f32 %v244, %v218
    %v249 = vmul.f32 %v245, %v223
    %v250 = vmul.f32 %v246, %v228
    %v251 = vmul.f32 %v247, %v233
    %v252 = vadd.f32 %v218, %v248
    %v253 = vadd.f32 %v223, %v249
    %v254 = vadd.f32 %v228, %v250
    %v255 = vadd.f32 %v233, %v251
    %v256 = vmul.f32 %v252, 0.7978846
    %v257 = vmul.f32 %v253, 0.7978846
    %v258 = vmul.f32 %v254, 0.7978846
    %v259 = vmul.f32 %v255, 0.7978846
    %v260 = vtanh.pop %v256
    %v261 = vtanh.pop %v257
    %v262 = vtanh.pop %v258
    %v263 = vtanh.pop %v259
    %v264 = vadd.f32 %v260, 1.0
    %v265 = vadd.f32 %v261, 1.0
    %v266 = vadd.f32 %v262, 1.0
    %v267 = vadd.f32 %v263, 1.0
    %v268 = vmul.f32 %v236, %v264
    %v269 = vmul.f32 %v237, %v265
    %v270 = vmul.f32 %v238, %v266
    %v271 = vmul.f32 %v239, %v267
    %272 = vset.pattern.permute.xlu0 1
    %273 = vperm.xlu0 %272, %v74
    %v274 = vpop.permute.xlu0 %273
    %276 = vset.pattern.permute.xlu0 1
    %277 = vperm.xlu0 %276, %v75
    %v278 = vpop.permute.xlu0 %277
    %v281 = vsel %vm78, %v54, 0
    %v284 = vsel %vm78, %v55, 0
    %286 = vmatprep.subr.mxu0 0.0
    %287 = vmatpush1.msra.mxu0 %v268
    %288 = vmatprep.subr.mxu0 0.0
    %289 = vmatpush1.msra.mxu0 %v269
    %290 = vmatprep.subr.mxu0 0.0
    %291 = vmatpush1.msra.mxu0 %v270
    %292 = vmatprep.subr.mxu0 0.0
    %293 = vmatpush1.msra.mxu0 %v271
    %294 = vmatprep.subr.mxu0 0.0
    %295 = vmatpush1.msra.mxu0 0.0
    %296 = vmatprep.subr.mxu0 0.0
    %297 = vmatpush1.msra.mxu0 0.0
    %298 = vmatprep.subr.mxu0 0.0
    %299 = vmatpush1.msra.mxu0 0.0
    %300 = vmatprep.subr.mxu0 0.0
    %301 = vmatpush1.msra.mxu0 0.0
    %302 = vmatprep.subr.mxu0 0.0
    %303 = vmatpush1.msra.mxu0 0.0
    %304 = vmatprep.subr.mxu0 0.0
    %305 = vmatpush1.msra.mxu0 0.0
    %306 = vmatprep.subr.mxu0 0.0
    %307 = vmatpush1.msra.mxu0 0.0
    %308 = vmatprep.subr.mxu0 0.0
    %309 = vmatpush1.msra.mxu0 0.0
    %310 = vmatprep.subr.mxu0 0.0
    %311 = vmatpush1.msra.mxu0 0.0
    %312 = vmatprep.subr.mxu0 0.0
    %313 = vmatpush1.msra.mxu0 0.0
    %314 = vmatprep.subr.mxu0 0.0
    %315 = vmatpush1.msra.mxu0 0.0
    %316 = vmatprep.subr.mxu0 0.0
    %317 = vmatpush1.msra.mxu0 0.0
    %318 = vmatprep.subr.mxu0 0.0
    %319 = vmatpush1.msra.mxu0 0.0
    %320 = vmatprep.subr.mxu0 0.0
    %321 = vmatpush1.msra.mxu0 0.0
    %322 = vmatprep.subr.mxu0 0.0
    %323 = vmatpush1.msra.mxu0 0.0
    %324 = vmatprep.subr.mxu0 0.0
    %325 = vmatpush1.msra.mxu0 0.0
    %326 = vmatprep.subr.mxu0 0.0
    %327 = vmatpush1.msra.mxu0 0.0
    %328 = vmatprep.subr.mxu0 0.0
    %329 = vmatpush1.msra.mxu0 0.0
    %330 = vmatprep.subr.mxu0 0.0
    %331 = vmatpush1.msra.mxu0 0.0
    %332 = vmatprep.subr.mxu0 0.0
    %333 = vmatpush1.msra.mxu0 0.0
    %334 = vmatprep.subr.mxu0 0.0
    %335 = vmatpush1.msra.mxu0 0.0
    %336 = vmatprep.subr.mxu0 0.0
    %337 = vmatpush1.msra.mxu0 0.0
    %338 = vmatprep.subr.mxu0 0.0
    %339 = vmatpush1.msra.mxu0 0.0
    %340 = vmatprep.subr.mxu0 0.0
    %341 = vmatpush1.msra.mxu0 0.0
    %342 = vmatprep.subr.mxu0 0.0
    %343 = vmatpush1.msra.mxu0 0.0
    %344 = vmatprep.subr.mxu0 0.0
    %345 = vmatpush1.msra.mxu0 0.0
    %346 = vmatprep.subr.mxu0 0.0
    %347 = vmatpush1.msra.mxu0 0.0
    %348 = vmatprep.subr.mxu0 0.0
    %349 = vmatpush1.msra.mxu0 0.0
    %350 = vmatprep.mubr.f32.mxu0 0.0
    %351 = vmatmul.mubr.f32.gmra.mrb[0].mxu0 %v281
    %v352 = vpop.f32.mrb[0].mxu0
    %v353 = vadd.f32 %v274, %v352
    %v354 = vpop.f32.mrb[0].mxu0
    %355 = vmatprep.mubr.f32.mxu0 0.0
    %356 = vmatmul.mubr.f32.gmra.mrb[0].mxu0 %v284
    %v357 = vpop.f32.mrb[0].mxu0
    %v358 = vadd.f32 %v278, %v357
    %v359 = vpop.f32.mrb[0].mxu0
    %360 = vdwg.mxu0
    %v361 = vadd.f32 %v48, %v353
    %v362 = vadd.f32 %v49, %v358
    %v363 = vsel %vm78, %v361, 0.0
    %364 = vadd.xlane.f32.xlu0 %v363
    %v365 = vpop.xlane.xlu0 %364
    %v366 = vsel %vm78, %v362, 0.0
    %367 = vadd.xlane.f32.xlu0 %v366
    %v368 = vpop.xlane.xlu0 %367
    %v369 = vmul.f32 %v365, %v85
    %v370 = vmul.f32 %v368, %v85
    %v371 = vsub.f32 %v361, %v369
    %v372 = vsub.f32 %v362, %v370
    %v373 = vmul.f32 %v371, %v371
    %v374 = vmul.f32 %v372, %v372
    %v375 = vsel %vm78, %v373, 0.0
    %376 = vadd.xlane.f32.xlu0 %v375
    %v377 = vpop.xlane.xlu0 %376
    %v378 = vsel %vm78, %v374, 0.0
    %379 = vadd.xlane.f32.xlu0 %v378
    %v380 = vpop.xlane.xlu0 %379
    %v381 = vmul.f32 %v377, %v85
    %v382 = vmul.f32 %v380, %v85
    %v383 = vadd.f32 %v381, 1e-05
    %v384 = vadd.f32 %v382, 1e-05
    %v385 = vrsqrt.pop %v383
    %v386 = vrsqrt.pop %v384
    %v387 = vmul.f32 %v371, %v385
    %v388 = vmul.f32 %v372, %v386
    %v389 = vlaneseq
    %v390 = vshrl.u32 %v389, 7
    %v391 = vsub.s32 0, %v390
    %v392 = vrot.slane %v70, %v391
    %v393 = vmul.f32 %v387, %v392
    %v394 = vmul.f32 %v388, %v392
    %v395 = vlaneseq
    %v396 = vshrl.u32 %v395, 7
    %v397 = vsub.s32 0, %v396
    %v398 = vrot.slane %v71, %v397
    %v399 = vadd.f32 %v393, %v398
    %v400 = vadd.f32 %v394, %v398
    %v401 = vlaneseq
    %v402 = vshrl.u32 %v401, 7
    %v403 = vsub.s32 0, %v402
    %v404 = vrot.slane %v72, %v403
    %v406 = vsel %vm78, %v399, 0
    %v409 = vsel %vm78, %v400, 0
    %411 = vmatprep.subr.mxu0 0.0
    %412 = vmatpush1.msra.mxu0 %v56
    %413 = vmatprep.subr.mxu0 0.0
    %414 = vmatpush1.msra.mxu0 %v57
    %415 = vmatprep.subr.mxu0 0.0
    %416 = vmatpush1.msra.mxu0 %v58
    %417 = vmatprep.subr.mxu0 0.0
    %418 = vmatpush1.msra.mxu0 %v59
    %419 = vmatprep.subr.mxu0 0.0
    %420 = vmatpush1.msra.mxu0 0.0
    %421 = vmatprep.subr.mxu0 0.0
    %422 = vmatpush1.msra.mxu0 0.0
    %423 = vmatprep.subr.mxu0 0.0
    %424 = vmatpush1.msra.mxu0 0.0
    %425 = vmatprep.subr.mxu0 0.0
    %426 = vmatpush1.msra.mxu0 0.0
    %427 = vmatprep.subr.mxu0 0.0
    %428 = vmatpush1.msra.mxu0 0.0
    %429 = vmatprep.subr.mxu0 0.0
    %430 = vmatpush1.msra.mxu0 0.0
    %431 = vmatprep.subr.mxu0 0.0
    %432 = vmatpush1.msra.mxu0 0.0
    %433 = vmatprep.subr.mxu0 0.0
    %434 = vmatpush1.msra.mxu0 0.0
    %435 = vmatprep.subr.mxu0 0.0
    %436 = vmatpush1.msra.mxu0 0.0
    %437 = vmatprep.subr.mxu0 0.0
    %438 = vmatpush1.msra.mxu0 0.0
    %439 = vmatprep.subr.mxu0 0.0
    %440 = vmatpush1.msra.mxu0 0.0
    %441 = vmatprep.subr.mxu0 0.0
    %442 = vmatpush1.msra.mxu0 0.0
    %443 = vmatprep.subr.mxu0 0.0
    %444 = vmatpush1.msra.mxu0 0.0
    %445 = vmatprep.subr.mxu0 0.0
    %446 = vmatpush1.msra.mxu0 0.0
    %447 = vmatprep.subr.mxu0 0.0
    %448 = vmatpush1.msra.mxu0 0.0
    %449 = vmatprep.subr.mxu0 0.0
    %450 = vmatpush1.msra.mxu0 0.0
    %451 = vmatprep.subr.mxu0 0.0
    %452 = vmatpush1.msra.mxu0 0.0
    %453 = vmatprep.subr.mxu0 0.0
    %454 = vmatpush1.msra.mxu0 0.0
    %455 = vmatprep.subr.mxu0 0.0
    %456 = vmatpush1.msra.mxu0 0.0
    %457 = vmatprep.subr.mxu0 0.0
    %458 = vmatpush1.msra.mxu0 0.0
    %459 = vmatprep.subr.mxu0 0.0
    %460 = vmatpush1.msra.mxu0 0.0
    %461 = vmatprep.subr.mxu0 0.0
    %462 = vmatpush1.msra.mxu0 0.0
    %463 = vmatprep.subr.mxu0 0.0
    %464 = vmatpush1.msra.mxu0 0.0
    %465 = vmatprep.subr.mxu0 0.0
    %466 = vmatpush1.msra.mxu0 0.0
    %467 = vmatprep.subr.mxu0 0.0
    %468 = vmatpush1.msra.mxu0 0.0
    %469 = vmatprep.subr.mxu0 0.0
    %470 = vmatpush1.msra.mxu0 0.0
    %471 = vmatprep.subr.mxu0 0.0
    %472 = vmatpush1.msra.mxu0 0.0
    %473 = vmatprep.subr.mxu0 0.0
    %474 = vmatpush1.msra.mxu0 0.0
    %475 = vmatprep.mubr.f32.mxu0 0.0
    %476 = vmatmul.mubr.f32.gmra.mrb[0].mxu0 %v406
    %v477 = vpop.f32.mrb[0].mxu0
    %v478 = vadd.f32 %v404, %v477
    %v479 = vpop.f32.mrb[0].mxu0
    %480 = vmatprep.mubr.f32.mxu0 0.0
    %481 = vmatmul.mubr.f32.gmra.mrb[0].mxu0 %v409
    %v482 = vpop.f32.mrb[0].mxu0
    %v483 = vadd.f32 %v404, %v482
    %v484 = vpop.f32.mrb[0].mxu0
    %485 = vdwg.mxu0
    %v486 = vmul.f32 %v478, 0.5
    %v487 = vmul.f32 %v483, 0.5
    %v488 = vmul.f32 %v478, 0.044715
    %v489 = vmul.f32 %v483, 0.044715
    %v490 = vmul.f32 %v488, %v478
    %v491 = vmul.f32 %v489, %v483
    %v492 = vmul.f32 %v490, %v478
    %v493 = vmul.f32 %v491, %v483
    %v494 = vadd.f32 %v478, %v492
    %v495 = vadd.f32 %v483, %v493
    %v496 = vmul.f32 %v494, 0.7978846
    %v497 = vmul.f32 %v495, 0.7978846
    %v498 = vtanh.pop %v496
    %v499 = vtanh.pop %v497
    %v500 = vadd.f32 %v498, 1.0
    %v501 = vadd.f32 %v499, 1.0
    %v502 = vmul.f32 %v486, %v500
    %v503 = vmul.f32 %v487, %v501
    %v504 = vlaneseq
    %v505 = vshrl.u32 %v504, 7
    %v506 = vsub.s32 0, %v505
    %v507 = vrot.slane %v73, %v506
    %vm508 = vcmask 523264
    %v510 = vsel %vm508, %v502, 0
    %v513 = vsel %vm508, %v503, 0
    %515 = vmatprep.subr.mxu0 0.0
    %516 = vmatpush1.msra.mxu0 %v60
    %517 = vmatprep.subr.mxu0 0.0
    %518 = vmatpush1.msra.mxu0 %v61
    %519 = vmatprep.subr.mxu0 0.0
    %520 = vmatpush1.msra.mxu0 %v62
    %521 = vmatprep.subr.mxu0 0.0
    %522 = vmatpush1.msra.mxu0 %v63
    %523 = vmatprep.subr.mxu0 0.0
    %524 = vmatpush1.msra.mxu0 %v64
    %525 = vmatprep.subr.mxu0 0.0
    %526 = vmatpush1.msra.mxu0 %v65
    %527 = vmatprep.subr.mxu0 0.0
    %528 = vmatpush1.msra.mxu0 %v66
    %529 = vmatprep.subr.mxu0 0.0
    %530 = vmatpush1.msra.mxu0 %v67
    %531 = vmatprep.subr.mxu0 0.0
    %532 = vmatpush1.msra.mxu0 0.0
    %533 = vmatprep.subr.mxu0 0.0
    %534 = vmatpush1.msra.mxu0 0.0
    %535 = vmatprep.subr.mxu0 0.0
    %536 = vmatpush1.msra.mxu0 0.0
    %537 = vmatprep.subr.mxu0 0.0
    %538 = vmatpush1.msra.mxu0 0.0
    %539 = vmatprep.subr.mxu0 0.0
    %540 = vmatpush1.msra.mxu0 0.0
    %541 = vmatprep.subr.mxu0 0.0
    %542 = vmatpush1.msra.mxu0 0.0
    %543 = vmatprep.subr.mxu0 0.0
    %544 = vmatpush1.msra.mxu0 0.0
    %545 = vmatprep.subr.mxu0 0.0
    %546 = vmatpush1.msra.mxu0 0.0
    %547 = vmatprep.subr.mxu0 0.0
    %548 = vmatpush1.msra.mxu0 0.0
    %549 = vmatprep.subr.mxu0 0.0
    %550 = vmatpush1.msra.mxu0 0.0
    %551 = vmatprep.subr.mxu0 0.0
    %552 = vmatpush1.msra.mxu0 0.0
    %553 = vmatprep.subr.mxu0 0.0
    %554 = vmatpush1.msra.mxu0 0.0
    %555 = vmatprep.subr.mxu0 0.0
    %556 = vmatpush1.msra.mxu0 0.0
    %557 = vmatprep.subr.mxu0 0.0
    %558 = vmatpush1.msra.mxu0 0.0
    %559 = vmatprep.subr.mxu0 0.0
    %560 = vmatpush1.msra.mxu0 0.0
    %561 = vmatprep.subr.mxu0 0.0
    %562 = vmatpush1.msra.mxu0 0.0
    %563 = vmatprep.subr.mxu0 0.0
    %564 = vmatpush1.msra.mxu0 0.0
    %565 = vmatprep.subr.mxu0 0.0
    %566 = vmatpush1.msra.mxu0 0.0
    %567 = vmatprep.subr.mxu0 0.0
    %568 = vmatpush1.msra.mxu0 0.0
    %569 = vmatprep.subr.mxu0 0.0
    %570 = vmatpush1.msra.mxu0 0.0
    %571 = vmatprep.subr.mxu0 0.0
    %572 = vmatpush1.msra.mxu0 0.0
    %573 = vmatprep.subr.mxu0 0.0
    %574 = vmatpush1.msra.mxu0 0.0
    %575 = vmatprep.subr.mxu0 0.0
    %576 = vmatpush1.msra.mxu0 0.0
    %577 = vmatprep.subr.mxu0 0.0
    %578 = vmatpush1.msra.mxu0 0.0
    %579 = vmatprep.mubr.f32.mxu0 0.0
    %580 = vmatmul.mubr.f32.gmra.mrb[0].mxu0 %v510
    %v581 = vpop.f32.mrb[0].mxu0
    %v582 = vadd.f32 %v507, %v581
    %v583 = vpop.f32.mrb[0].mxu0
    %584 = vmatprep.mubr.f32.mxu0 0.0
    %585 = vmatmul.mubr.f32.gmra.mrb[0].mxu0 %v513
    %v586 = vpop.f32.mrb[0].mxu0
    %v587 = vadd.f32 %v507, %v586
    %v588 = vpop.f32.mrb[0].mxu0
    %589 = vdwg.mxu0
    %v590 = vadd.f32 %v361, %v582
    %v591 = vadd.f32 %v362, %v587
    %v592 = vld [vmem:[%s5] sm:$0xff]
    %v593 = vld [vmem:[%s5 + $0x8] sm:$0xff]
    %v594 = vld [vmem:[%s5 + $0x10] sm:$0xff]
    %v595 = vld [vmem:[%s5 + $0x18] sm:$0xff]
    %v596 = vld [vmem:[%s6] sm:$0xff]
    %v597 = vld [vmem:[%s6 + $0x8] sm:$0xff]
    %v598 = vld [vmem:[%s7] sm:$0xff]
    %v599 = vld [vmem:[%s7 + $0x8] sm:$0xff]
    %v600 = vld [vmem:[%s7 + $0x10] sm:$0xff]
    %v601 = vld [vmem:[%s7 + $0x18] sm:$0xff]
    %v602 = vld [vmem:[%s8] sm:$0xff]
    %v603 = vld [vmem:[%s8 + $0x8] sm:$0xff]
    %v604 = vld [vmem:[%s8 + $0x10] sm:$0xff]
    %v605 = vld [vmem:[%s8 + $0x18] sm:$0xff]
    %v606 = vld [vmem:[%s8 + $0x20] sm:$0xff]
    %v607 = vld [vmem:[%s8 + $0x28] sm:$0xff]
    %v608 = vld [vmem:[%s8 + $0x30] sm:$0xff]
    %v609 = vld [vmem:[%s8 + $0x38] sm:$0xff]
    %v610 = vld [vmem:[%s11 + $0x6] sm:$0x1]
    %v611 = vld [vmem:[%s11 + $0x7] sm:$0x1]
    %v612 = vld [vmem:[%s11 + $0x8] sm:$0x1]
    %v613 = vld [vmem:[%s11 + $0x9] sm:$0x1]
    %v614 = vld [vmem:[%s11 + $0xa] sm:$0x1]
    %v615 = vld [vmem:[%s11 + $0xb] sm:$0x1]
    %v616 = vsel %vm78, %v590, 0.0
    %617 = vadd.xlane.f32.xlu0 %v616
    %v618 = vpop.xlane.xlu0 %617
    %v619 = vsel %vm78, %v591, 0.0
    %620 = vadd.xlane.f32.xlu0 %v619
    %v621 = vpop.xlane.xlu0 %620
    %v622 = vmul.f32 %v618, %v85
    %v623 = vmul.f32 %v621, %v85
    %v624 = vsub.f32 %v590, %v622
    %v625 = vsub.f32 %v591, %v623
    %v626 = vmul.f32 %v624, %v624
    %v627 = vmul.f32 %v625, %v625
    %v628 = vsel %vm78, %v626, 0.0
    %629 = vadd.xlane.f32.xlu0 %v628
    %v630 = vpop.xlane.xlu0 %629
    %v631 = vsel %vm78, %v627, 0.0
    %632 = vadd.xlane.f32.xlu0 %v631
    %v633 = vpop.xlane.xlu0 %632
    %v634 = vmul.f32 %v630, %v85
    %v635 = vmul.f32 %v633, %v85
    %v636 = vadd.f32 %v634, 1e-05
    %v637 = vadd.f32 %v635, 1e-05
    %v638 = vrsqrt.pop %v636
    %v639 = vrsqrt.pop %v637
    %v640 = vmul.f32 %v624, %v638
    %v641 = vmul.f32 %v625, %v639
    %v642 = vlaneseq
    %v643 = vshrl.u32 %v642, 7
    %v644 = vsub.s32 0, %v643
    %v645 = vrot.slane %v610, %v644
    %v646 = vmul.f32 %v640, %v645
    %v647 = vmul.f32 %v641, %v645
    %v648 = vlaneseq
    %v649 = vshrl.u32 %v648, 7
    %v650 = vsub.s32 0, %v649
    %v651 = vrot.slane %v611, %v650
    %v652 = vadd.f32 %v646, %v651
    %v653 = vadd.f32 %v647, %v651
    %654 = vset.pattern.permute.xlu0 2
    %655 = vperm.xlu0 %654, %v74
    %v656 = vpop.permute.xlu0 %655
    %658 = vset.pattern.permute.xlu0 2
    %659 = vperm.xlu0 %658, %v75
    %v660 = vpop.permute.xlu0 %659
    %662 = vset.pattern.permute.xlu0 2
    %663 = vperm.xlu0 %662, %v76
    %v664 = vpop.permute.xlu0 %663
    %666 = vset.pattern.permute.xlu0 2
    %667 = vperm.xlu0 %666, %v77
    %v668 = vpop.permute.xlu0 %667
    %v671 = vsel %vm138, %v592, 0
    %v674 = vsel %vm138, %v593, 0
    %v677 = vsel %vm138, %v594, 0
    %v680 = vsel %vm138, %v595, 0
    %682 = vmatprep.subr.mxu0 0.0
    %683 = vmatpush1.msra.mxu0 %v652
    %684 = vmatprep.subr.mxu0 0.0
    %685 = vmatpush1.msra.mxu0 %v653
    %686 = vmatprep.subr.mxu0 0.0
    %687 = vmatpush1.msra.mxu0 0.0
    %688 = vmatprep.subr.mxu0 0.0
    %689 = vmatpush1.msra.mxu0 0.0
    %690 = vmatprep.subr.mxu0 0.0
    %691 = vmatpush1.msra.mxu0 0.0
    %692 = vmatprep.subr.mxu0 0.0
    %693 = vmatpush1.msra.mxu0 0.0
    %694 = vmatprep.subr.mxu0 0.0
    %695 = vmatpush1.msra.mxu0 0.0
    %696 = vmatprep.subr.mxu0 0.0
    %697 = vmatpush1.msra.mxu0 0.0
    %698 = vmatprep.subr.mxu0 0.0
    %699 = vmatpush1.msra.mxu0 0.0
    %700 = vmatprep.subr.mxu0 0.0
    %701 = vmatpush1.msra.mxu0 0.0
    %702 = vmatprep.subr.mxu0 0.0
    %703 = vmatpush1.msra.mxu0 0.0
    %704 = vmatprep.subr.mxu0 0.0
    %705 = vmatpush1.msra.mxu0 0.0
    %706 = vmatprep.subr.mxu0 0.0
    %707 = vmatpush1.msra.mxu0 0.0
    %708 = vmatprep.subr.mxu0 0.0
    %709 = vmatpush1.msra.mxu0 0.0
    %710 = vmatprep.subr.mxu0 0.0
    %711 = vmatpush1.msra.mxu0 0.0
    %712 = vmatprep.subr.mxu0 0.0
    %713 = vmatpush1.msra.mxu0 0.0
    %714 = vmatprep.subr.mxu0 0.0
    %715 = vmatpush1.msra.mxu0 0.0
    %716 = vmatprep.subr.mxu0 0.0
    %717 = vmatpush1.msra.mxu0 0.0
    %718 = vmatprep.subr.mxu0 0.0
    %719 = vmatpush1.msra.mxu0 0.0
    %720 = vmatprep.subr.mxu0 0.0
    %721 = vmatpush1.msra.mxu0 0.0
    %722 = vmatprep.subr.mxu0 0.0
    %723 = vmatpush1.msra.mxu0 0.0
    %724 = vmatprep.subr.mxu0 0.0
    %725 = vmatpush1.msra.mxu0 0.0
    %726 = vmatprep.subr.mxu0 0.0
    %727 = vmatpush1.msra.mxu0 0.0
    %728 = vmatprep.subr.mxu0 0.0
    %729 = vmatpush1.msra.mxu0 0.0
    %730 = vmatprep.subr.mxu0 0.0
    %731 = vmatpush1.msra.mxu0 0.0
    %732 = vmatprep.subr.mxu0 0.0
    %733 = vmatpush1.msra.mxu0 0.0
    %734 = vmatprep.subr.mxu0 0.0
    %735 = vmatpush1.msra.mxu0 0.0
    %736 = vmatprep.subr.mxu0 0.0
    %737 = vmatpush1.msra.mxu0 0.0
    %738 = vmatprep.subr.mxu0 0.0
    %739 = vmatpush1.msra.mxu0 0.0
    %740 = vmatprep.subr.mxu0 0.0
    %741 = vmatpush1.msra.mxu0 0.0
    %742 = vmatprep.subr.mxu0 0.0
    %743 = vmatpush1.msra.mxu0 0.0
    %744 = vmatprep.subr.mxu0 0.0
    %745 = vmatpush1.msra.mxu0 0.0
    %746 = vmatprep.mubr.f32.mxu0 0.0
    %747 = vmatmul.mubr.f32.gmra.mrb[0].mxu0 %v671
    %v748 = vpop.f32.mrb[0].mxu0
    %v749 = vadd.f32 %v656, %v748
    %v750 = vpop.f32.mrb[0].mxu0
    %751 = vmatprep.mubr.f32.mxu0 0.0
    %752 = vmatmul.mubr.f32.gmra.mrb[0].mxu0 %v674
    %v753 = vpop.f32.mrb[0].mxu0
    %v754 = vadd.f32 %v660, %v753
    %v755 = vpop.f32.mrb[0].mxu0
    %756 = vmatprep.mubr.f32.mxu0 0.0
    %757 = vmatmul.mubr.f32.gmra.mrb[0].mxu0 %v677
    %v758 = vpop.f32.mrb[0].mxu0
    %v759 = vadd.f32 %v664, %v758
    %v760 = vpop.f32.mrb[0].mxu0
    %761 = vmatprep.mubr.f32.mxu0 0.0
    %762 = vmatmul.mubr.f32.gmra.mrb[0].mxu0 %v680
    %v763 = vpop.f32.mrb[0].mxu0
    %v764 = vadd.f32 %v668, %v763
    %v765 = vpop.f32.mrb[0].mxu0
    %766 = vdwg.mxu0
    %v767 = vmul.f32 %v749, 0.5
    %v768 = vmul.f32 %v754, 0.5
    %v769 = vmul.f32 %v759, 0.5
    %v770 = vmul.f32 %v764, 0.5
    %v771 = vmul.f32 %v749, 0.044715
    %v772 = vmul.f32 %v754, 0.044715
    %v773 = vmul.f32 %v759, 0.044715
    %v774 = vmul.f32 %v764, 0.044715
    %v775 = vmul.f32 %v771, %v749
    %v776 = vmul.f32 %v772, %v754
    %v777 = vmul.f32 %v773, %v759
    %v778 = vmul.f32 %v774, %v764
    %v779 = vmul.f32 %v775, %v749
    %v780 = vmul.f32 %v776, %v754
    %v781 = vmul.f32 %v777, %v759
    %v782 = vmul.f32 %v778, %v764
    %v783 = vadd.f32 %v749, %v779
    %v784 = vadd.f32 %v754, %v780
    %v785 = vadd.f32 %v759, %v781
    %v786 = vadd.f32 %v764, %v782
    %v787 = vmul.f32 %v783, 0.7978846
    %v788 = vmul.f32 %v784, 0.7978846
    %v789 = vmul.f32 %v785, 0.7978846
    %v790 = vmul.f32 %v786, 0.7978846
    %v791 = vtanh.pop %v787
    %v792 = vtanh.pop %v788
    %v793 = vtanh.pop %v789
    %v794 = vtanh.pop %v790
    %v795 = vadd.f32 %v791, 1.0
    %v796 = vadd.f32 %v792, 1.0
    %v797 = vadd.f32 %v793, 1.0
    %v798 = vadd.f32 %v794, 1.0
    %v799 = vmul.f32 %v767, %v795
    %v800 = vmul.f32 %v768, %v796
    %v801 = vmul.f32 %v769, %v797
    %v802 = vmul.f32 %v770, %v798
    %803 = vset.pattern.permute.xlu0 3
    %804 = vperm.xlu0 %803, %v74
    %v805 = vpop.permute.xlu0 %804
    %807 = vset.pattern.permute.xlu0 3
    %808 = vperm.xlu0 %807, %v75
    %v809 = vpop.permute.xlu0 %808
    %v812 = vsel %vm78, %v596, 0
    %v815 = vsel %vm78, %v597, 0
    %817 = vmatprep.subr.mxu0 0.0
    %818 = vmatpush1.msra.mxu0 %v799
    %819 = vmatprep.subr.mxu0 0.0
    %820 = vmatpush1.msra.mxu0 %v800
    %821 = vmatprep.subr.mxu0 0.0
    %822 = vmatpush1.msra.mxu0 %v801
    %823 = vmatprep.subr.mxu0 0.0
    %824 = vmatpush1.msra.mxu0 %v802
    %825 = vmatprep.subr.mxu0 0.0
    %826 = vmatpush1.msra.mxu0 0.0
    %827 = vmatprep.subr.mxu0 0.0
    %828 = vmatpush1.msra.mxu0 0.0
    %829 = vmatprep.subr.mxu0 0.0
    %830 = vmatpush1.msra.mxu0 0.0
    %831 = vmatprep.subr.mxu0 0.0
    %832 = vmatpush1.msra.mxu0 0.0
    %833 = vmatprep.subr.mxu0 0.0
    %834 = vmatpush1.msra.mxu0 0.0
    %835 = vmatprep.subr.mxu0 0.0
    %836 = vmatpush1.msra.mxu0 0.0
    %837 = vmatprep.subr.mxu0 0.0
    %838 = vmatpush1.msra.mxu0 0.0
    %839 = vmatprep.subr.mxu0 0.0
    %840 = vmatpush1.msra.mxu0 0.0
    %841 = vmatprep.subr.mxu0 0.0
    %842 = vmatpush1.msra.mxu0 0.0
    %843 = vmatprep.subr.mxu0 0.0
    %844 = vmatpush1.msra.mxu0 0.0
    %845 = vmatprep.subr.mxu0 0.0
    %846 = vmatpush1.msra.mxu0 0.0
    %847 = vmatprep.subr.mxu0 0.0
    %848 = vmatpush1.msra.mxu0 0.0
    %849 = vmatprep.subr.mxu0 0.0
    %850 = vmatpush1.msra.mxu0 0.0
    %851 = vmatprep.subr.mxu0 0.0
    %852 = vmatpush1.msra.mxu0 0.0
    %853 = vmatprep.subr.mxu0 0.0
    %854 = vmatpush1.msra.mxu0 0.0
    %855 = vmatprep.subr.mxu0 0.0
    %856 = vmatpush1.msra.mxu0 0.0
    %857 = vmatprep.subr.mxu0 0.0
    %858 = vmatpush1.msra.mxu0 0.0
    %859 = vmatprep.subr.mxu0 0.0
    %860 = vmatpush1.msra.mxu0 0.0
    %861 = vmatprep.subr.mxu0 0.0
    %862 = vmatpush1.msra.mxu0 0.0
    %863 = vmatprep.subr.mxu0 0.0
    %864 = vmatpush1.msra.mxu0 0.0
    %865 = vmatprep.subr.mxu0 0.0
    %866 = vmatpush1.msra.mxu0 0.0
    %867 = vmatprep.subr.mxu0 0.0
    %868 = vmatpush1.msra.mxu0 0.0
    %869 = vmatprep.subr.mxu0 0.0
    %870 = vmatpush1.msra.mxu0 0.0
    %871 = vmatprep.subr.mxu0 0.0
    %872 = vmatpush1.msra.mxu0 0.0
    %873 = vmatprep.subr.mxu0 0.0
    %874 = vmatpush1.msra.mxu0 0.0
    %875 = vmatprep.subr.mxu0 0.0
    %876 = vmatpush1.msra.mxu0 0.0
    %877 = vmatprep.subr.mxu0 0.0
    %878 = vmatpush1.msra.mxu0 0.0
    %879 = vmatprep.subr.mxu0 0.0
    %880 = vmatpush1.msra.mxu0 0.0
    %881 = vmatprep.mubr.f32.mxu0 0.0
    %882 = vmatmul.mubr.f32.gmra.mrb[0].mxu0 %v812
    %v883 = vpop.f32.mrb[0].mxu0
    %v884 = vadd.f32 %v805, %v883
    %v885 = vpop.f32.mrb[0].mxu0
    %886 = vmatprep.mubr.f32.mxu0 0.0
    %887 = vmatmul.mubr.f32.gmra.mrb[0].mxu0 %v815
    %v888 = vpop.f32.mrb[0].mxu0
    %v889 = vadd.f32 %v809, %v888
    %v890 = vpop.f32.mrb[0].mxu0
    %891 = vdwg.mxu0
    %v892 = vadd.f32 %v590, %v884
    %v893 = vadd.f32 %v591, %v889
    %v894 = vsel %vm78, %v892, 0.0
    %895 = vadd.xlane.f32.xlu0 %v894
    %v896 = vpop.xlane.xlu0 %895
    %v897 = vsel %vm78, %v893, 0.0
    %898 = vadd.xlane.f32.xlu0 %v897
    %v899 = vpop.xlane.xlu0 %898
    %v900 = vmul.f32 %v896, %v85
    %v901 = vmul.f32 %v899, %v85
    %v902 = vsub.f32 %v892, %v900
    %v903 = vsub.f32 %v893, %v901
    %v904 = vmul.f32 %v902, %v902
    %v905 = vmul.f32 %v903, %v903
    %v906 = vsel %vm78, %v904, 0.0
    %907 = vadd.xlane.f32.xlu0 %v906
    %v908 = vpop.xlane.xlu0 %907
    %v909 = vsel %vm78, %v905, 0.0
    %910 = vadd.xlane.f32.xlu0 %v909
    %v911 = vpop.xlane.xlu0 %910
    %v912 = vmul.f32 %v908, %v85
    %v913 = vmul.f32 %v911, %v85
    %v914 = vadd.f32 %v912, 1e-05
    %v915 = vadd.f32 %v913, 1e-05
    %v916 = vrsqrt.pop %v914
    %v917 = vrsqrt.pop %v915
    %v918 = vmul.f32 %v902, %v916
    %v919 = vmul.f32 %v903, %v917
    %v920 = vlaneseq
    %v921 = vshrl.u32 %v920, 7
    %v922 = vsub.s32 0, %v921
    %v923 = vrot.slane %v612, %v922
    %v924 = vmul.f32 %v918, %v923
    %v925 = vmul.f32 %v919, %v923
    %v926 = vlaneseq
    %v927 = vshrl.u32 %v926, 7
    %v928 = vsub.s32 0, %v927
    %v929 = vrot.slane %v613, %v928
    %v930 = vadd.f32 %v924, %v929
    %v931 = vadd.f32 %v925, %v929
    %v932 = vlaneseq
    %v933 = vshrl.u32 %v932, 7
    %v934 = vsub.s32 0, %v933
    %v935 = vrot.slane %v614, %v934
    %v937 = vsel %vm78, %v930, 0
    %v940 = vsel %vm78, %v931, 0
    %942 = vmatprep.subr.mxu0 0.0
    %943 = vmatpush1.msra.mxu0 %v598
    %944 = vmatprep.subr.mxu0 0.0
    %945 = vmatpush1.msra.mxu0 %v599
    %946 = vmatprep.subr.mxu0 0.0
    %947 = vmatpush1.msra.mxu0 %v600
    %948 = vmatprep.subr.mxu0 0.0
    %949 = vmatpush1.msra.mxu0 %v601
    %950 = vmatprep.subr.mxu0 0.0
    %951 = vmatpush1.msra.mxu0 0.0
    %952 = vmatprep.subr.mxu0 0.0
    %953 = vmatpush1.msra.mxu0 0.0
    %954 = vmatprep.subr.mxu0 0.0
    %955 = vmatpush1.msra.mxu0 0.0
    %956 = vmatprep.subr.mxu0 0.0
    %957 = vmatpush1.msra.mxu0 0.0
    %958 = vmatprep.subr.mxu0 0.0
    %959 = vmatpush1.msra.mxu0 0.0
    %960 = vmatprep.subr.mxu0 0.0
    %961 = vmatpush1.msra.mxu0 0.0
    %962 = vmatprep.subr.mxu0 0.0
    %963 = vmatpush1.msra.mxu0 0.0
    %964 = vmatprep.subr.mxu0 0.0
    %965 = vmatpush1.msra.mxu0 0.0
    %966 = vmatprep.subr.mxu0 0.0
    %967 = vmatpush1.msra.mxu0 0.0
    %968 = vmatprep.subr.mxu0 0.0
    %969 = vmatpush1.msra.mxu0 0.0
    %970 = vmatprep.subr.mxu0 0.0
    %971 = vmatpush1.msra.mxu0 0.0
    %972 = vmatprep.subr.mxu0 0.0
    %973 = vmatpush1.msra.mxu0 0.0
    %974 = vmatprep.subr.mxu0 0.0
    %975 = vmatpush1.msra.mxu0 0.0
    %976 = vmatprep.subr.mxu0 0.0
    %977 = vmatpush1.msra.mxu0 0.0
    %978 = vmatprep.subr.mxu0 0.0
    %979 = vmatpush1.msra.mxu0 0.0
    %980 = vmatprep.subr.mxu0 0.0
    %981 = vmatpush1.msra.mxu0 0.0
    %982 = vmatprep.subr.mxu0 0.0
    %983 = vmatpush1.msra.mxu0 0.0
    %984 = vmatprep.subr.mxu0 0.0
    %985 = vmatpush1.msra.mxu0 0.0
    %986 = vmatprep.subr.mxu0 0.0
    %987 = vmatpush1.msra.mxu0 0.0
    %988 = vmatprep.subr.mxu0 0.0
    %989 = vmatpush1.msra.mxu0 0.0
    %990 = vmatprep.subr.mxu0 0.0
    %991 = vmatpush1.msra.mxu0 0.0
    %992 = vmatprep.subr.mxu0 0.0
    %993 = vmatpush1.msra.mxu0 0.0
    %994 = vmatprep.subr.mxu0 0.0
    %995 = vmatpush1.msra.mxu0 0.0
    %996 = vmatprep.subr.mxu0 0.0
    %997 = vmatpush1.msra.mxu0 0.0
    %998 = vmatprep.subr.mxu0 0.0
    %999 = vmatpush1.msra.mxu0 0.0
    %1000 = vmatprep.subr.mxu0 0.0
    %1001 = vmatpush1.msra.mxu0 0.0
    %1002 = vmatprep.subr.mxu0 0.0
    %1003 = vmatpush1.msra.mxu0 0.0
    %1004 = vmatprep.subr.mxu0 0.0
    %1005 = vmatpush1.msra.mxu0 0.0
    %1006 = vmatprep.mubr.f32.mxu0 0.0
    %1007 = vmatmul.mubr.f32.gmra.mrb[0].mxu0 %v937
    %v1008 = vpop.f32.mrb[0].mxu0
    %v1009 = vadd.f32 %v935, %v1008
    %v1010 = vpop.f32.mrb[0].mxu0
    %1011 = vmatprep.mubr.f32.mxu0 0.0
    %1012 = vmatmul.mubr.f32.gmra.mrb[0].mxu0 %v940
    %v1013 = vpop.f32.mrb[0].mxu0
    %v1014 = vadd.f32 %v935, %v1013
    %v1015 = vpop.f32.mrb[0].mxu0
    %1016 = vdwg.mxu0
    %v1017 = vmul.f32 %v1009, 0.5
    %v1018 = vmul.f32 %v1014, 0.5
    %v1019 = vmul.f32 %v1009, 0.044715
    %v1020 = vmul.f32 %v1014, 0.044715
    %v1021 = vmul.f32 %v1019, %v1009
    %v1022 = vmul.f32 %v1020, %v1014
    %v1023 = vmul.f32 %v1021, %v1009
    %v1024 = vmul.f32 %v1022, %v1014
    %v1025 = vadd.f32 %v1009, %v1023
    %v1026 = vadd.f32 %v1014, %v1024
    %v1027 = vmul.f32 %v1025, 0.7978846
    %v1028 = vmul.f32 %v1026, 0.7978846
    %v1029 = vtanh.pop %v1027
    %v1030 = vtanh.pop %v1028
    %v1031 = vadd.f32 %v1029, 1.0
    %v1032 = vadd.f32 %v1030, 1.0
    %v1033 = vmul.f32 %v1017, %v1031
    %v1034 = vmul.f32 %v1018, %v1032
    %v1035 = vlaneseq
    %v1036 = vshrl.u32 %v1035, 7
    %v1037 = vsub.s32 0, %v1036
    %v1038 = vrot.slane %v615, %v1037
    %v1040 = vsel %vm508, %v1033, 0
    %v1043 = vsel %vm508, %v1034, 0
    %1045 = vmatprep.subr.mxu0 0.0
    %1046 = vmatpush1.msra.mxu0 %v602
    %1047 = vmatprep.subr.mxu0 0.0
    %1048 = vmatpush1.msra.mxu0 %v603
    %1049 = vmatprep.subr.mxu0 0.0
    %1050 = vmatpush1.msra.mxu0 %v604
    %1051 = vmatprep.subr.mxu0 0.0
    %1052 = vmatpush1.msra.mxu0 %v605
    %1053 = vmatprep.subr.mxu0 0.0
    %1054 = vmatpush1.msra.mxu0 %v606
    %1055 = vmatprep.subr.mxu0 0.0
    %1056 = vmatpush1.msra.mxu0 %v607
    %1057 = vmatprep.subr.mxu0 0.0
    %1058 = vmatpush1.msra.mxu0 %v608
    %1059 = vmatprep.subr.mxu0 0.0
    %1060 = vmatpush1.msra.mxu0 %v609
    %1061 = vmatprep.subr.mxu0 0.0
    %1062 = vmatpush1.msra.mxu0 0.0
    %1063 = vmatprep.subr.mxu0 0.0
    %1064 = vmatpush1.msra.mxu0 0.0
    %1065 = vmatprep.subr.mxu0 0.0
    %1066 = vmatpush1.msra.mxu0 0.0
    %1067 = vmatprep.subr.mxu0 0.0
    %1068 = vmatpush1.msra.mxu0 0.0
    %1069 = vmatprep.subr.mxu0 0.0
    %1070 = vmatpush1.msra.mxu0 0.0
    %1071 = vmatprep.subr.mxu0 0.0
    %1072 = vmatpush1.msra.mxu0 0.0
    %1073 = vmatprep.subr.mxu0 0.0
    %1074 = vmatpush1.msra.mxu0 0.0
    %1075 = vmatprep.subr.mxu0 0.0
    %1076 = vmatpush1.msra.mxu0 0.0
    %1077 = vmatprep.subr.mxu0 0.0
    %1078 = vmatpush1.msra.mxu0 0.0
    %1079 = vmatprep.subr.mxu0 0.0
    %1080 = vmatpush1.msra.mxu0 0.0
    %1081 = vmatprep.subr.mxu0 0.0
    %1082 = vmatpush1.msra.mxu0 0.0
    %1083 = vmatprep.subr.mxu0 0.0
    %1084 = vmatpush1.msra.mxu0 0.0
    %1085 = vmatprep.subr.mxu0 0.0
    %1086 = vmatpush1.msra.mxu0 0.0
    %1087 = vmatprep.subr.mxu0 0.0
    %1088 = vmatpush1.msra.mxu0 0.0
    %1089 = vmatprep.subr.mxu0 0.0
    %1090 = vmatpush1.msra.mxu0 0.0
    %1091 = vmatprep.subr.mxu0 0.0
    %1092 = vmatpush1.msra.mxu0 0.0
    %1093 = vmatprep.subr.mxu0 0.0
    %1094 = vmatpush1.msra.mxu0 0.0
    %1095 = vmatprep.subr.mxu0 0.0
    %1096 = vmatpush1.msra.mxu0 0.0
    %1097 = vmatprep.subr.mxu0 0.0
    %1098 = vmatpush1.msra.mxu0 0.0
    %1099 = vmatprep.subr.mxu0 0.0
    %1100 = vmatpush1.msra.mxu0 0.0
    %1101 = vmatprep.subr.mxu0 0.0
    %1102 = vmatpush1.msra.mxu0 0.0
    %1103 = vmatprep.subr.mxu0 0.0
    %1104 = vmatpush1.msra.mxu0 0.0
    %1105 = vmatprep.subr.mxu0 0.0
    %1106 = vmatpush1.msra.mxu0 0.0
    %1107 = vmatprep.subr.mxu0 0.0
    %1108 = vmatpush1.msra.mxu0 0.0
    %1109 = vmatprep.mubr.f32.mxu0 0.0
    %1110 = vmatmul.mubr.f32.gmra.mrb[0].mxu0 %v1040
    %v1111 = vpop.f32.mrb[0].mxu0
    %v1112 = vadd.f32 %v1038, %v1111
    %v1113 = vpop.f32.mrb[0].mxu0
    %1114 = vmatprep.mubr.f32.mxu0 0.0
    %1115 = vmatmul.mubr.f32.gmra.mrb[0].mxu0 %v1043
    %v1116 = vpop.f32.mrb[0].mxu0
    %v1117 = vadd.f32 %v1038, %v1116
    %v1118 = vpop.f32.mrb[0].mxu0
    %1119 = vdwg.mxu0
    %v1120 = vadd.f32 %v892, %v1112
    %v1121 = vadd.f32 %v893, %v1117
    %v1122 = vld [vmem:[%s9] sm:$0xff]
    %v1123 = vld [vmem:[%s9 + $0x8] sm:$0xff]
    %v1124 = vld [vmem:[%s9 + $0x10] sm:$0xff]
    %v1125 = vld [vmem:[%s9 + $0x18] sm:$0xff]
    %v1126 = vld [vmem:[%s11 + $0xc] sm:$0x1]
    %v1127 = vlaneseq
    %v1128 = vshrl.u32 %v1127, 7
    %v1129 = vsub.s32 0, %v1128
    %v1130 = vrot.slane %v1126, %v1129
    %v1132 = vsel %vm78, %v1120, 0
    %v1135 = vsel %vm78, %v1121, 0
    %1137 = vmatprep.subr.mxu0 0.0
    %1138 = vmatpush1.msra.mxu0 %v1122
    %1139 = vmatprep.subr.mxu0 0.0
    %1140 = vmatpush1.msra.mxu0 %v1123
    %1141 = vmatprep.subr.mxu0 0.0
    %1142 = vmatpush1.msra.mxu0 %v1124
    %1143 = vmatprep.subr.mxu0 0.0
    %1144 = vmatpush1.msra.mxu0 %v1125
    %1145 = vmatprep.subr.mxu0 0.0
    %1146 = vmatpush1.msra.mxu0 0.0
    %1147 = vmatprep.subr.mxu0 0.0
    %1148 = vmatpush1.msra.mxu0 0.0
    %1149 = vmatprep.subr.mxu0 0.0
    %1150 = vmatpush1.msra.mxu0 0.0
    %1151 = vmatprep.subr.mxu0 0.0
    %1152 = vmatpush1.msra.mxu0 0.0
    %1153 = vmatprep.subr.mxu0 0.0
    %1154 = vmatpush1.msra.mxu0 0.0
    %1155 = vmatprep.subr.mxu0 0.0
    %1156 = vmatpush1.msra.mxu0 0.0
    %1157 = vmatprep.subr.mxu0 0.0
    %1158 = vmatpush1.msra.mxu0 0.0
    %1159 = vmatprep.subr.mxu0 0.0
    %1160 = vmatpush1.msra.mxu0 0.0
    %1161 = vmatprep.subr.mxu0 0.0
    %1162 = vmatpush1.msra.mxu0 0.0
    %1163 = vmatprep.subr.mxu0 0.0
    %1164 = vmatpush1.msra.mxu0 0.0
    %1165 = vmatprep.subr.mxu0 0.0
    %1166 = vmatpush1.msra.mxu0 0.0
    %1167 = vmatprep.subr.mxu0 0.0
    %1168 = vmatpush1.msra.mxu0 0.0
    %1169 = vmatprep.subr.mxu0 0.0
    %1170 = vmatpush1.msra.mxu0 0.0
    %1171 = vmatprep.subr.mxu0 0.0
    %1172 = vmatpush1.msra.mxu0 0.0
    %1173 = vmatprep.subr.mxu0 0.0
    %1174 = vmatpush1.msra.mxu0 0.0
    %1175 = vmatprep.subr.mxu0 0.0
    %1176 = vmatpush1.msra.mxu0 0.0
    %1177 = vmatprep.subr.mxu0 0.0
    %1178 = vmatpush1.msra.mxu0 0.0
    %1179 = vmatprep.subr.mxu0 0.0
    %1180 = vmatpush1.msra.mxu0 0.0
    %1181 = vmatprep.subr.mxu0 0.0
    %1182 = vmatpush1.msra.mxu0 0.0
    %1183 = vmatprep.subr.mxu0 0.0
    %1184 = vmatpush1.msra.mxu0 0.0
    %1185 = vmatprep.subr.mxu0 0.0
    %1186 = vmatpush1.msra.mxu0 0.0
    %1187 = vmatprep.subr.mxu0 0.0
    %1188 = vmatpush1.msra.mxu0 0.0
    %1189 = vmatprep.subr.mxu0 0.0
    %1190 = vmatpush1.msra.mxu0 0.0
    %1191 = vmatprep.subr.mxu0 0.0
    %1192 = vmatpush1.msra.mxu0 0.0
    %1193 = vmatprep.subr.mxu0 0.0
    %1194 = vmatpush1.msra.mxu0 0.0
    %1195 = vmatprep.subr.mxu0 0.0
    %1196 = vmatpush1.msra.mxu0 0.0
    %1197 = vmatprep.subr.mxu0 0.0
    %1198 = vmatpush1.msra.mxu0 0.0
    %1199 = vmatprep.subr.mxu0 0.0
    %1200 = vmatpush1.msra.mxu0 0.0
    %1201 = vmatprep.mubr.f32.mxu0 0.0
    %1202 = vmatmul.mubr.f32.gmra.mrb[0].mxu0 %v1132
    %v1203 = vpop.f32.mrb[0].mxu0
    %v1204 = vadd.f32 %v1130, %v1203
    %v1205 = vpop.f32.mrb[0].mxu0
    %1206 = vmatprep.mubr.f32.mxu0 0.0
    %1207 = vmatmul.mubr.f32.gmra.mrb[0].mxu0 %v1135
    %v1208 = vpop.f32.mrb[0].mxu0
    %v1209 = vadd.f32 %v1130, %v1208
    %v1210 = vpop.f32.mrb[0].mxu0
    %1211 = vdwg.mxu0
    %v1212 = vmul.f32 %v1204, 0.5
    %v1213 = vmul.f32 %v1209, 0.5
    %v1214 = vmul.f32 %v1204, 0.044715
    %v1215 = vmul.f32 %v1209, 0.044715
    %v1216 = vmul.f32 %v1214, %v1204
    %v1217 = vmul.f32 %v1215, %v1209
    %v1218 = vmul.f32 %v1216, %v1204
    %v1219 = vmul.f32 %v1217, %v1209
    %v1220 = vadd.f32 %v1204, %v1218
    %v1221 = vadd.f32 %v1209, %v1219
    %v1222 = vmul.f32 %v1220, 0.7978846
    %v1223 = vmul.f32 %v1221, 0.7978846
    %v1224 = vtanh.pop %v1222
    %v1225 = vtanh.pop %v1223
    %v1226 = vadd.f32 %v1224, 1.0
    %v1227 = vadd.f32 %v1225, 1.0
    %v1228 = vmul.f32 %v1212, %v1226
    %v1229 = vmul.f32 %v1213, %v1227
    %v1230 = vld [vmem:[%s10] sm:$0xff]
    %v1231 = vld [vmem:[%s10 + $0x8] sm:$0xff]
    %v1232 = vld [vmem:[%s10 + $0x10] sm:$0xff]
    %v1233 = vld [vmem:[%s10 + $0x18] sm:$0xff]
    %v1234 = vld [vmem:[%s11 + $0xd] sm:$0x1]
    %v1235 = vlaneseq
    %v1236 = vshrl.u32 %v1235, 7
    %v1237 = vsub.s32 0, %v1236
    %v1238 = vrot.slane %v1234, %v1237
    %v1240 = vsel %vm78, %v1228, 0
    %v1243 = vsel %vm78, %v1229, 0
    %1245 = vmatprep.subr.mxu0 0.0
    %1246 = vmatpush1.msra.mxu0 %v1230
    %1247 = vmatprep.subr.mxu0 0.0
    %1248 = vmatpush1.msra.mxu0 %v1231
    %1249 = vmatprep.subr.mxu0 0.0
    %1250 = vmatpush1.msra.mxu0 %v1232
    %1251 = vmatprep.subr.mxu0 0.0
    %1252 = vmatpush1.msra.mxu0 %v1233
    %1253 = vmatprep.subr.mxu0 0.0
    %1254 = vmatpush1.msra.mxu0 0.0
    %1255 = vmatprep.subr.mxu0 0.0
    %1256 = vmatpush1.msra.mxu0 0.0
    %1257 = vmatprep.subr.mxu0 0.0
    %1258 = vmatpush1.msra.mxu0 0.0
    %1259 = vmatprep.subr.mxu0 0.0
    %1260 = vmatpush1.msra.mxu0 0.0
    %1261 = vmatprep.subr.mxu0 0.0
    %1262 = vmatpush1.msra.mxu0 0.0
    %1263 = vmatprep.subr.mxu0 0.0
    %1264 = vmatpush1.msra.mxu0 0.0
    %1265 = vmatprep.subr.mxu0 0.0
    %1266 = vmatpush1.msra.mxu0 0.0
    %1267 = vmatprep.subr.mxu0 0.0
    %1268 = vmatpush1.msra.mxu0 0.0
    %1269 = vmatprep.subr.mxu0 0.0
    %1270 = vmatpush1.msra.mxu0 0.0
    %1271 = vmatprep.subr.mxu0 0.0
    %1272 = vmatpush1.msra.mxu0 0.0
    %1273 = vmatprep.subr.mxu0 0.0
    %1274 = vmatpush1.msra.mxu0 0.0
    %1275 = vmatprep.subr.mxu0 0.0
    %1276 = vmatpush1.msra.mxu0 0.0
    %1277 = vmatprep.subr.mxu0 0.0
    %1278 = vmatpush1.msra.mxu0 0.0
    %1279 = vmatprep.subr.mxu0 0.0
    %1280 = vmatpush1.msra.mxu0 0.0
    %1281 = vmatprep.subr.mxu0 0.0
    %1282 = vmatpush1.msra.mxu0 0.0
    %1283 = vmatprep.subr.mxu0 0.0
    %1284 = vmatpush1.msra.mxu0 0.0
    %1285 = vmatprep.subr.mxu0 0.0
    %1286 = vmatpush1.msra.mxu0 0.0
    %1287 = vmatprep.subr.mxu0 0.0
    %1288 = vmatpush1.msra.mxu0 0.0
    %1289 = vmatprep.subr.mxu0 0.0
    %1290 = vmatpush1.msra.mxu0 0.0
    %1291 = vmatprep.subr.mxu0 0.0
    %1292 = vmatpush1.msra.mxu0 0.0
    %1293 = vmatprep.subr.mxu0 0.0
    %1294 = vmatpush1.msra.mxu0 0.0
    %1295 = vmatprep.subr.mxu0 0.0
    %1296 = vmatpush1.msra.mxu0 0.0
    %1297 = vmatprep.subr.mxu0 0.0
    %1298 = vmatpush1.msra.mxu0 0.0
    %1299 = vmatprep.subr.mxu0 0.0
    %1300 = vmatpush1.msra.mxu0 0.0
    %1301 = vmatprep.subr.mxu0 0.0
    %1302 = vmatpush1.msra.mxu0 0.0
    %1303 = vmatprep.subr.mxu0 0.0
    %1304 = vmatpush1.msra.mxu0 0.0
    %1305 = vmatprep.subr.mxu0 0.0
    %1306 = vmatpush1.msra.mxu0 0.0
    %1307 = vmatprep.subr.mxu0 0.0
    %1308 = vmatpush1.msra.mxu0 0.0
    %1309 = vmatprep.mubr.f32.mxu0 0.0
    %1310 = vmatmul.mubr.f32.gmra.mrb[0].mxu0 %v1240
    %v1311 = vpop.f32.mrb[0].mxu0
    %v1312 = vadd.f32 %v1238, %v1311
    %v1313 = vpop.f32.mrb[0].mxu0
    %1314 = vmatprep.mubr.f32.mxu0 0.0
    %1315 = vmatmul.mubr.f32.gmra.mrb[0].mxu0 %v1243
    %v1316 = vpop.f32.mrb[0].mxu0
    %v1317 = vadd.f32 %v1238, %v1316
    %v1318 = vpop.f32.mrb[0].mxu0
    %1319 = vdwg.mxu0
    %vm1320 = vcmask 392192
    %1321 = vst.msk [vmem:[#allocation2] sm:$0xff] %vm1320, %v1312
    %1322 = vst.msk [vmem:[#allocation2 + $0x8] sm:$0xff] %vm1320, %v1317
    %v1323 = vsel %vm1320, %v1312, -inf
    %1324 = vmax.xlane.f32.xlu0 %v1323
    %v1325 = vpop.xlane.xlu0 %1324
    %v1326 = vsel %vm1320, %v1317, -inf
    %1327 = vmax.xlane.f32.xlu0 %v1326
    %v1328 = vpop.xlane.xlu0 %1327
    %v1329 = vsub.f32 %v1312, %v1325
    %v1330 = vsub.f32 %v1317, %v1328
    %v1331 = vmul.f32 %v1329, 1.442695
    %v1332 = vpow.pop %v1331
    %v1333 = vmul.f32 %v1330, 1.442695
    %v1334 = vpow.pop %v1333
    %v1335 = vsel %vm1320, %v1332, 0.0
    %1336 = vadd.xlane.f32.xlu0 %v1335
    %v1337 = vpop.xlane.xlu0 %1336
    %v1338 = vsel %vm1320, %v1334, 0.0
    %1339 = vadd.xlane.f32.xlu0 %v1338
    %v1340 = vpop.xlane.xlu0 %1339
    %v1341 = vrcp.pop %v1337
    %v1342 = vrcp.pop %v1340
    %v1343 = vmul.f32 %v1332, %v1341
    %v1344 = vmul.f32 %v1334, %v1342
    %1345 = vst.msk [vmem:[#allocation4] sm:$0xff] %vm1320, %v1343
    %1346 = vst.msk [vmem:[#allocation4 + $0x8] sm:$0xff] %vm1320, %v1344
    // Predicated region
    $region54: #{cls_head_forward.3} parent=1 // pred_check
      _
    $region55: #{cls_head_forward.3} parent=1 // pred_check_branch
      %1348 = sbr.rel (0) target = $region57
    $region56: #{cls_head_forward.3} parent=1 // pred_region
      %s1350 = ssub.s32 256, 256
      %1351 = vsyncadd [#allocation3], %s1350
      %s1352 = sshll.u32 [#allocation2], 4
      %s1353 = int_to_ptr.vmem [resolvable:$true] %s1352
      %1358 = dma.vmem_to_hbm [thread:$0]  %s1353, 256, %s13, [#allocation3], 128, 128, 8
    $region57: #{cls_head_forward.3} parent=1 // pred_fallthru
      _
    // Predicated region
    $region58: #{cls_head_forward.3} parent=1 // pred_check
      _
    $region59: #{cls_head_forward.3} parent=1 // pred_check_branch
      %1360 = sbr.rel (0) target = $region61
    $region60: #{cls_head_forward.3} parent=1 // pred_region
      %s1362 = ssub.s32 256, 256
      %1363 = vsyncadd [#allocation5], %s1362
      %s1364 = sshll.u32 [#allocation4], 4
      %s1365 = int_to_ptr.vmem [resolvable:$true] %s1364
      %1370 = dma.vmem_to_hbm [thread:$0]  %s1365, 256, %s14, [#allocation5], 128, 128, 8
    $region61: #{cls_head_forward.3} parent=1 // pred_fallthru
      _
    // Predicated region
    $region62: #{cls_head_forward.3} parent=1 // pred_check
      _
    $region63: #{cls_head_forward.3} parent=1 // pred_check_branch
      %1372 = sbr.rel (0) target = $region65
    $region64: #{cls_head_forward.3} parent=1 // pred_region
      %1373 = dma.done [#allocation3], 256
    $region65: #{cls_head_forward.3} parent=1 // pred_fallthru
      _
    // Predicated region
    $region66: #{cls_head_forward.3} parent=1 // pred_check
      _
    $region67: #{cls_head_forward.3} parent=1 // pred_check_branch
      %1375 = sbr.rel (0) target = $region69
    $region68: #{cls_head_forward.3} parent=1 // pred_region
      %1376 = dma.done [#allocation5], 256
    $region69: #{cls_head_forward.3} parent=1 // pred_fallthru
      _
    %1377 = vsyncpa [#allocation3], 1
    %1378 = vsyncpa [#allocation5], 1

</llo_original>
